<compile_context>
chip_gen: v6e
topology: v6e:2x2x1
jax: 0.10.0
libtpu: 0.0.40
codegen_flags: <defaults>
</compile_context>

<pallas_src>
import jax
import jax.numpy as jnp
from jax.experimental import pallas as pl
from jax.experimental.pallas import tpu as pltpu


def metapath_lstm_kernel(x_ref, w_ih_ref, w_hh_ref, b_ref,
                         w1_ref, b1_ref, w2_ref, b2_ref, o_ref):
    """One N-tile of the MetapathLSTMLayer forward.

    x_ref : (n_meta, tn, F) f32  VMEM (native layout, no transpose)
    w_ih  : (F, 4H) bf16   w_hh : (H, 4H) bf16   b : (1, 4H) f32
            (gate order i|f|g|o; g-gate columns pre-scaled by 2)
    w1    : (H, F) bf16    b1   : (1, F) f32     (mlp layer 0)
    w2    : (F, F) bf16    b2   : (1, F) f32     (mlp layer 2)
    o_ref : (tn, F)
    """
    n_meta, tn, f_dim = x_ref.shape
    hidden = w_hh_ref.shape[0]

    # Input-to-hidden projection for every metapath step in a single MXU pass:
    # fold the metapath axis into M (free reshape since tn % 8 == 0).
    x_all = x_ref[...].reshape(n_meta * tn, f_dim).astype(jnp.bfloat16)
    gx = jnp.dot(x_all, w_ih_ref[...], preferred_element_type=jnp.float32)
    gx = (gx + b_ref[...]).reshape(n_meta, tn, 4 * hidden)

    w_hh = w_hh_ref[...]                       # bf16, loaded once
    h = jnp.zeros((tn, hidden), jnp.float32)
    c = jnp.zeros((tn, hidden), jnp.float32)

    # n_meta is small and static -> unrolled recurrence (serial dependence).
    for m in range(n_meta):
        gates = gx[m] + jnp.dot(h.astype(jnp.bfloat16), w_hh,
                                preferred_element_type=jnp.float32)
        # ONE lane-dense sigmoid over the whole (tn, 4H) slab: exp on the EUP +
        # approx reciprocal on the EUP (avoids a full-precision VPU divide).
        # The g gate's pre-activation is pre-scaled by 2 in the wrapper, so
        # tanh(z) = 2*sigmoid(2z) - 1 recovers it with a single VPU fma.
        s = pl.reciprocal(1.0 + jnp.exp(-gates), approx=True)
        i_g = s[:, 0 * hidden:1 * hidden]
        f_g = s[:, 1 * hidden:2 * hidden]
        g_g = 2.0 * s[:, 2 * hidden:3 * hidden] - 1.0
        o_g = s[:, 3 * hidden:4 * hidden]
        c = f_g * c + i_g * g_g
        h = o_g * jnp.tanh(c)

    # dropout: eval mode => identity.  batchnorm=False => no BN branch.
    h1 = jax.nn.relu(jnp.dot(h.astype(jnp.bfloat16), w1_ref[...],
                             preferred_element_type=jnp.float32) + b1_ref[...])
    out = jnp.dot(h1.astype(jnp.bfloat16), w2_ref[...],
                  preferred_element_type=jnp.float32) + b2_ref[...]
    # TODO(synk): output last dim F < 128 lanes -> masked stores; accepted
    # since the output stream is only 1/(n_meta+1) of the dense input stream.
    o_ref[...] = jax.nn.relu(out).astype(o_ref.dtype)


def _round_up(a, b):
    return ((a + b - 1) // b) * b


def _scale_g_gate(w, hidden):
    """Multiply the g-gate block (columns 2H:3H) by 2 (tanh = 2*sigmoid(2x)-1)."""
    return jnp.concatenate(
        [w[..., :2 * hidden], 2.0 * w[..., 2 * hidden:3 * hidden],
         w[..., 3 * hidden:]], axis=-1)


def metapath_lstm_forward(x, params, *, tile_n=512):
    """x: (n_meta, N, F) float32.  Returns (relu(mlp(lstm_last_step)), None)."""
    n_meta, N, F_dim = x.shape
    H = params["w_hh"].shape[0]

    # Big tiles amortize grid-step overhead; keep >= 4 grid steps when N allows
    # (>= 2 tiles per v7x TensorCore so prefetch/compute overlap survives), and
    # always round to a multiple of 8 (BlockSpec rule + free in-kernel reshape).
    tile_n = min(tile_n, _round_up(pl.cdiv(N, 4), 8))
    tile_n = _round_up(max(tile_n, 8), 8)
    n_pad = _round_up(N, tile_n)
    if n_pad != N:
        x = jnp.pad(x, ((0, 0), (0, n_pad - N), (0, 0)))

    # Pre-transform weights once in the wrapper (free vs. per-grid-step work):
    #  * g-gate columns scaled by 2 (exact, enables the dense-sigmoid trick)
    #  * matmul operands pre-cast to bf16 (native MXU input rate); biases stay
    #    f32 since they are added into f32 accumulators.
    w_ih = _scale_g_gate(params["w_ih"], H).astype(jnp.bfloat16)
    w_hh = _scale_g_gate(params["w_hh"], H).astype(jnp.bfloat16)
    b = _scale_g_gate(params["b"], H)
    w1 = params["w1"].astype(jnp.bfloat16)
    w2 = params["w2"].astype(jnp.bfloat16)
    b1 = params["b1"]
    b2 = params["b2"]

    const = lambda shape: pl.BlockSpec(shape, lambda i: (0,) * len(shape))

    out = pl.pallas_call(
        metapath_lstm_kernel,
        out_shape=jax.ShapeDtypeStruct((n_pad, F_dim), x.dtype),
        grid_spec=pltpu.PrefetchScalarGridSpec(
            num_scalar_prefetch=0,
            grid=(n_pad // tile_n,),
            in_specs=[
                # native (n_meta, N, F) layout: no wrapper transpose
                pl.BlockSpec((n_meta, tile_n, F_dim), lambda i: (0, i, 0)),
                const((F_dim, 4 * H)),   # w_ih  (bf16, g cols x2)
                const((H, 4 * H)),       # w_hh  (bf16, g cols x2)
                const((1, 4 * H)),       # b = b_ih + b_hh (f32, g cols x2)
                const((H, F_dim)),       # w1 (bf16)
                const((1, F_dim)),       # b1 (f32)
                const((F_dim, F_dim)),   # w2 (bf16)
                const((1, F_dim)),       # b2 (f32)
            ],
            out_specs=pl.BlockSpec((tile_n, F_dim), lambda i: (i, 0)),
        ),
        compiler_params=pltpu.CompilerParams(
            dimension_semantics=("parallel",),
            # Explicit scoped-VMEM budget: big tiles (x double-buffer + the f32
            # gx intermediate) can exceed v5e's 16 MiB default; 48 MiB is well
            # under every chip's physical VMEM (v7x: 64 MiB).
            vmem_limit_bytes=48 * 1024 * 1024),
    )(x, w_ih, w_hh, b, w1, b1, w2, b2)

    weight = None
    return out[:N], weight


def reference_forward(x, params):
    """Pure-JAX f32 reference of the PyTorch forward (eval mode)."""
    xt = jnp.transpose(x, (1, 0, 2)).astype(jnp.float32)   # (N, n_meta, F)
    N, T, _ = xt.shape
    H = params["w_hh"].shape[0]
    h = jnp.zeros((N, H), jnp.float32)
    c = jnp.zeros((N, H), jnp.float32)
    for t in range(T):
        gates = xt[:, t, :] @ params["w_ih"] + h @ params["w_hh"] + params["b"][0]
        i_g = jax.nn.sigmoid(gates[:, 0:H])
        f_g = jax.nn.sigmoid(gates[:, H:2 * H])
        g_g = jnp.tanh(gates[:, 2 * H:3 * H])
        o_g = jax.nn.sigmoid(gates[:, 3 * H:4 * H])
        c = f_g * c + i_g * g_g
        h = o_g * jnp.tanh(c)
    h1 = jax.nn.relu(h @ params["w1"] + params["b1"][0])
    return jax.nn.relu(h1 @ params["w2"] + params["b2"][0])


def make_params(key, in_features, hidden_dim):
    """Deterministic init (PyTorch LSTM/Linear-style uniform ranges)."""
    ks = jax.random.split(key, 9)
    F_dim, H = in_features, hidden_dim

    def u(k, shape, fan_in):
        bound = 1.0 / float(fan_in) ** 0.5
        return jax.random.uniform(k, shape, jnp.float32, -bound, bound)

    return {
        # LSTM weights stored transposed as (in, 4H); gates fused i|f|g|o.
        "w_ih": u(ks[0], (F_dim, 4 * H), H),
        "w_hh": u(ks[1], (H, 4 * H), H),
        "b":    u(ks[2], (1, 4 * H), H) + u(ks[3], (1, 4 * H), H),  # b_ih + b_hh
        # mlp: Linear(H, F) -> ReLU -> Linear(F, F)
        "w1": u(ks[4], (H, F_dim), H),
        "b1": u(ks[5], (1, F_dim), H),
        "w2": u(ks[6], (F_dim, F_dim), F_dim),
        "b2": u(ks[7], (1, F_dim), F_dim),
    }


if __name__ == "__main__":
    in_features = 32
    hidden_dim = 64
    n_meta = 4
    N = 512

    key = jax.random.PRNGKey(0)
    k_x, k_p = jax.random.split(key)
    x = jax.random.normal(k_x, (n_meta, N, in_features), jnp.float32)
    params = make_params(k_p, in_features, hidden_dim)

    out, weight = metapath_lstm_forward(x, params)
    out = jax.block_until_ready(out)

    ref = reference_forward(x, params)
    assert out.shape == (N, in_features)
    assert weight is None
    # bf16 MXU operands + approx-reciprocal sigmoid vs f32 reference.
    assert jnp.allclose(out, ref, atol=5e-2, rtol=5e-2), "mismatch vs reference"
    print("KERNEL_OK")
</pallas_src>

<mosaic_0001>
module attributes {stable_mosaic.version = 11 : i64} {
  func.func @metapath_lstm_kernel(%arg0: i32, %arg1: memref<4x128x32xf32, #tpu.memory_space<vmem>>, %arg2: memref<32x256xbf16, #tpu.memory_space<vmem>>, %arg3: memref<64x256xbf16, #tpu.memory_space<vmem>>, %arg4: memref<1x256xf32, #tpu.memory_space<vmem>>, %arg5: memref<64x32xbf16, #tpu.memory_space<vmem>>, %arg6: memref<1x32xf32, #tpu.memory_space<vmem>>, %arg7: memref<32x32xbf16, #tpu.memory_space<vmem>>, %arg8: memref<1x32xf32, #tpu.memory_space<vmem>>, %arg9: memref<128x32xf32, #tpu.memory_space<vmem>>) attributes {dimension_semantics = [#tpu.dimension_semantics<parallel>], iteration_bounds = array<i64: 4>, scalar_prefetch = 0 : i64, scratch_operands = 0 : i64, tpu.core_type = #tpu.core_type<tc>, window_params = [{transform_indices = @transform_0, window_bounds = array<i64: 4, 128, 32>}, {pipeline_mode = #tpu.pipeline_mode<synchronous>, transform_indices = @transform_1, window_bounds = array<i64: 32, 256>}, {pipeline_mode = #tpu.pipeline_mode<synchronous>, transform_indices = @transform_2, window_bounds = array<i64: 64, 256>}, {pipeline_mode = #tpu.pipeline_mode<synchronous>, transform_indices = @transform_3, window_bounds = array<i64: 1, 256>}, {pipeline_mode = #tpu.pipeline_mode<synchronous>, transform_indices = @transform_4, window_bounds = array<i64: 64, 32>}, {pipeline_mode = #tpu.pipeline_mode<synchronous>, transform_indices = @transform_5, window_bounds = array<i64: 1, 32>}, {pipeline_mode = #tpu.pipeline_mode<synchronous>, transform_indices = @transform_6, window_bounds = array<i64: 32, 32>}, {pipeline_mode = #tpu.pipeline_mode<synchronous>, transform_indices = @transform_7, window_bounds = array<i64: 1, 32>}, {transform_indices = @transform_8, window_bounds = array<i64: 128, 32>}]} {
    %c0 = arith.constant 0 : index
    %c0_0 = arith.constant 0 : index
    %c0_1 = arith.constant 0 : index
    %0 = vector.load %arg1[%c0, %c0_0, %c0_1] : memref<4x128x32xf32, #tpu.memory_space<vmem>>, vector<4x128x32xf32>
    %1 = vector.shape_cast %0 : vector<4x128x32xf32> to vector<512x32xf32>
    %2 = arith.truncf %1 : vector<512x32xf32> to vector<512x32xbf16>
    %c0_2 = arith.constant 0 : index
    %c0_3 = arith.constant 0 : index
    %3 = vector.load %arg2[%c0_2, %c0_3] : memref<32x256xbf16, #tpu.memory_space<vmem>>, vector<32x256xbf16>
    %cst = arith.constant dense<0.000000e+00> : vector<512x256xf32>
    %4 = tpu.matmul %2, %3, %cst {dimension_numbers = #tpu.dot_dimension_numbers<[1], [0], [0], [1], [0, 0, 1, 1], [], []>} : vector<512x32xbf16>, vector<32x256xbf16>, vector<512x256xf32> -> vector<512x256xf32>
    %c0_4 = arith.constant 0 : index
    %c0_5 = arith.constant 0 : index
    %5 = vector.load %arg4[%c0_4, %c0_5] : memref<1x256xf32, #tpu.memory_space<vmem>>, vector<1x256xf32>
    %6 = vector.broadcast %5 : vector<1x256xf32> to vector<512x256xf32>
    %7 = arith.addf %4, %6 : vector<512x256xf32>
    %8 = vector.shape_cast %7 : vector<512x256xf32> to vector<4x128x256xf32>
    %c0_6 = arith.constant 0 : index
    %c0_7 = arith.constant 0 : index
    %9 = vector.load %arg3[%c0_6, %c0_7] : memref<64x256xbf16, #tpu.memory_space<vmem>>, vector<64x256xbf16>
    %cst_8 = arith.constant 0.000000e+00 : f32
    %10 = vector.broadcast %cst_8 : f32 to vector<128x64xf32>
    %cst_9 = arith.constant 0.000000e+00 : f32
    %11 = vector.broadcast %cst_9 : f32 to vector<128x64xf32>
    %12 = vector.extract_strided_slice %8 {offsets = [0, 0, 0], sizes = [1, 128, 256], strides = [1, 1, 1]} : vector<4x128x256xf32> to vector<1x128x256xf32>
    %13 = vector.shape_cast %12 : vector<1x128x256xf32> to vector<128x256xf32>
    %14 = arith.truncf %10 : vector<128x64xf32> to vector<128x64xbf16>
    %cst_10 = arith.constant dense<0.000000e+00> : vector<128x256xf32>
    %15 = tpu.matmul %14, %9, %cst_10 {dimension_numbers = #tpu.dot_dimension_numbers<[1], [0], [0], [1], [0, 0, 1, 1], [], []>} : vector<128x64xbf16>, vector<64x256xbf16>, vector<128x256xf32> -> vector<128x256xf32>
    %16 = arith.addf %13, %15 : vector<128x256xf32>
    %cst_11 = arith.constant 0.000000e+00 : f32
    %17 = vector.broadcast %cst_11 : f32 to vector<128x256xf32>
    %18 = arith.subf %17, %16 : vector<128x256xf32>
    %19 = math.exp %18 : vector<128x256xf32>
    %cst_12 = arith.constant 1.000000e+00 : f32
    %20 = vector.broadcast %cst_12 : f32 to vector<128x256xf32>
    %21 = arith.addf %20, %19 : vector<128x256xf32>
    %22 = tpu.reciprocal %21 {approx = true} : vector<128x256xf32> -> vector<128x256xf32>
    %23 = vector.extract_strided_slice %22 {offsets = [0, 0], sizes = [128, 64], strides = [1, 1]} : vector<128x256xf32> to vector<128x64xf32>
    %24 = vector.extract_strided_slice %22 {offsets = [0, 64], sizes = [128, 64], strides = [1, 1]} : vector<128x256xf32> to vector<128x64xf32>
    %25 = vector.extract_strided_slice %22 {offsets = [0, 128], sizes = [128, 64], strides = [1, 1]} : vector<128x256xf32> to vector<128x64xf32>
    %cst_13 = arith.constant 2.000000e+00 : f32
    %26 = vector.broadcast %cst_13 : f32 to vector<128x64xf32>
    %27 = arith.mulf %26, %25 : vector<128x64xf32>
    %cst_14 = arith.constant 1.000000e+00 : f32
    %28 = vector.broadcast %cst_14 : f32 to vector<128x64xf32>
    %29 = arith.subf %27, %28 : vector<128x64xf32>
    %30 = vector.extract_strided_slice %22 {offsets = [0, 192], sizes = [128, 64], strides = [1, 1]} : vector<128x256xf32> to vector<128x64xf32>
    %31 = arith.mulf %24, %11 : vector<128x64xf32>
    %32 = arith.mulf %23, %29 : vector<128x64xf32>
    %33 = arith.addf %31, %32 : vector<128x64xf32>
    %34 = math.tanh %33 : vector<128x64xf32>
    %35 = arith.mulf %30, %34 : vector<128x64xf32>
    %36 = vector.extract_strided_slice %8 {offsets = [1, 0, 0], sizes = [1, 128, 256], strides = [1, 1, 1]} : vector<4x128x256xf32> to vector<1x128x256xf32>
    %37 = vector.shape_cast %36 : vector<1x128x256xf32> to vector<128x256xf32>
    %38 = arith.truncf %35 : vector<128x64xf32> to vector<128x64xbf16>
    %cst_15 = arith.constant dense<0.000000e+00> : vector<128x256xf32>
    %39 = tpu.matmul %38, %9, %cst_15 {dimension_numbers = #tpu.dot_dimension_numbers<[1], [0], [0], [1], [0, 0, 1, 1], [], []>} : vector<128x64xbf16>, vector<64x256xbf16>, vector<128x256xf32> -> vector<128x256xf32>
    %40 = arith.addf %37, %39 : vector<128x256xf32>
    %cst_16 = arith.constant 0.000000e+00 : f32
    %41 = vector.broadcast %cst_16 : f32 to vector<128x256xf32>
    %42 = arith.subf %41, %40 : vector<128x256xf32>
    %43 = math.exp %42 : vector<128x256xf32>
    %cst_17 = arith.constant 1.000000e+00 : f32
    %44 = vector.broadcast %cst_17 : f32 to vector<128x256xf32>
    %45 = arith.addf %44, %43 : vector<128x256xf32>
    %46 = tpu.reciprocal %45 {approx = true} : vector<128x256xf32> -> vector<128x256xf32>
    %47 = vector.extract_strided_slice %46 {offsets = [0, 0], sizes = [128, 64], strides = [1, 1]} : vector<128x256xf32> to vector<128x64xf32>
    %48 = vector.extract_strided_slice %46 {offsets = [0, 64], sizes = [128, 64], strides = [1, 1]} : vector<128x256xf32> to vector<128x64xf32>
    %49 = vector.extract_strided_slice %46 {offsets = [0, 128], sizes = [128, 64], strides = [1, 1]} : vector<128x256xf32> to vector<128x64xf32>
    %cst_18 = arith.constant 2.000000e+00 : f32
    %50 = vector.broadcast %cst_18 : f32 to vector<128x64xf32>
    %51 = arith.mulf %50, %49 : vector<128x64xf32>
    %cst_19 = arith.constant 1.000000e+00 : f32
    %52 = vector.broadcast %cst_19 : f32 to vector<128x64xf32>
    %53 = arith.subf %51, %52 : vector<128x64xf32>
    %54 = vector.extract_strided_slice %46 {offsets = [0, 192], sizes = [128, 64], strides = [1, 1]} : vector<128x256xf32> to vector<128x64xf32>
    %55 = arith.mulf %48, %33 : vector<128x64xf32>
    %56 = arith.mulf %47, %53 : vector<128x64xf32>
    %57 = arith.addf %55, %56 : vector<128x64xf32>
    %58 = math.tanh %57 : vector<128x64xf32>
    %59 = arith.mulf %54, %58 : vector<128x64xf32>
    %60 = vector.extract_strided_slice %8 {offsets = [2, 0, 0], sizes = [1, 128, 256], strides = [1, 1, 1]} : vector<4x128x256xf32> to vector<1x128x256xf32>
    %61 = vector.shape_cast %60 : vector<1x128x256xf32> to vector<128x256xf32>
    %62 = arith.truncf %59 : vector<128x64xf32> to vector<128x64xbf16>
    %cst_20 = arith.constant dense<0.000000e+00> : vector<128x256xf32>
    %63 = tpu.matmul %62, %9, %cst_20 {dimension_numbers = #tpu.dot_dimension_numbers<[1], [0], [0], [1], [0, 0, 1, 1], [], []>} : vector<128x64xbf16>, vector<64x256xbf16>, vector<128x256xf32> -> vector<128x256xf32>
    %64 = arith.addf %61, %63 : vector<128x256xf32>
    %cst_21 = arith.constant 0.000000e+00 : f32
    %65 = vector.broadcast %cst_21 : f32 to vector<128x256xf32>
    %66 = arith.subf %65, %64 : vector<128x256xf32>
    %67 = math.exp %66 : vector<128x256xf32>
    %cst_22 = arith.constant 1.000000e+00 : f32
    %68 = vector.broadcast %cst_22 : f32 to vector<128x256xf32>
    %69 = arith.addf %68, %67 : vector<128x256xf32>
    %70 = tpu.reciprocal %69 {approx = true} : vector<128x256xf32> -> vector<128x256xf32>
    %71 = vector.extract_strided_slice %70 {offsets = [0, 0], sizes = [128, 64], strides = [1, 1]} : vector<128x256xf32> to vector<128x64xf32>
    %72 = vector.extract_strided_slice %70 {offsets = [0, 64], sizes = [128, 64], strides = [1, 1]} : vector<128x256xf32> to vector<128x64xf32>
    %73 = vector.extract_strided_slice %70 {offsets = [0, 128], sizes = [128, 64], strides = [1, 1]} : vector<128x256xf32> to vector<128x64xf32>
    %cst_23 = arith.constant 2.000000e+00 : f32
    %74 = vector.broadcast %cst_23 : f32 to vector<128x64xf32>
    %75 = arith.mulf %74, %73 : vector<128x64xf32>
    %cst_24 = arith.constant 1.000000e+00 : f32
    %76 = vector.broadcast %cst_24 : f32 to vector<128x64xf32>
    %77 = arith.subf %75, %76 : vector<128x64xf32>
    %78 = vector.extract_strided_slice %70 {offsets = [0, 192], sizes = [128, 64], strides = [1, 1]} : vector<128x256xf32> to vector<128x64xf32>
    %79 = arith.mulf %72, %57 : vector<128x64xf32>
    %80 = arith.mulf %71, %77 : vector<128x64xf32>
    %81 = arith.addf %79, %80 : vector<128x64xf32>
    %82 = math.tanh %81 : vector<128x64xf32>
    %83 = arith.mulf %78, %82 : vector<128x64xf32>
    %84 = vector.extract_strided_slice %8 {offsets = [3, 0, 0], sizes = [1, 128, 256], strides = [1, 1, 1]} : vector<4x128x256xf32> to vector<1x128x256xf32>
    %85 = vector.shape_cast %84 : vector<1x128x256xf32> to vector<128x256xf32>
    %86 = arith.truncf %83 : vector<128x64xf32> to vector<128x64xbf16>
    %cst_25 = arith.constant dense<0.000000e+00> : vector<128x256xf32>
    %87 = tpu.matmul %86, %9, %cst_25 {dimension_numbers = #tpu.dot_dimension_numbers<[1], [0], [0], [1], [0, 0, 1, 1], [], []>} : vector<128x64xbf16>, vector<64x256xbf16>, vector<128x256xf32> -> vector<128x256xf32>
    %88 = arith.addf %85, %87 : vector<128x256xf32>
    %cst_26 = arith.constant 0.000000e+00 : f32
    %89 = vector.broadcast %cst_26 : f32 to vector<128x256xf32>
    %90 = arith.subf %89, %88 : vector<128x256xf32>
    %91 = math.exp %90 : vector<128x256xf32>
    %cst_27 = arith.constant 1.000000e+00 : f32
    %92 = vector.broadcast %cst_27 : f32 to vector<128x256xf32>
    %93 = arith.addf %92, %91 : vector<128x256xf32>
    %94 = tpu.reciprocal %93 {approx = true} : vector<128x256xf32> -> vector<128x256xf32>
    %95 = vector.extract_strided_slice %94 {offsets = [0, 0], sizes = [128, 64], strides = [1, 1]} : vector<128x256xf32> to vector<128x64xf32>
    %96 = vector.extract_strided_slice %94 {offsets = [0, 64], sizes = [128, 64], strides = [1, 1]} : vector<128x256xf32> to vector<128x64xf32>
    %97 = vector.extract_strided_slice %94 {offsets = [0, 128], sizes = [128, 64], strides = [1, 1]} : vector<128x256xf32> to vector<128x64xf32>
    %cst_28 = arith.constant 2.000000e+00 : f32
    %98 = vector.broadcast %cst_28 : f32 to vector<128x64xf32>
    %99 = arith.mulf %98, %97 : vector<128x64xf32>
    %cst_29 = arith.constant 1.000000e+00 : f32
    %100 = vector.broadcast %cst_29 : f32 to vector<128x64xf32>
    %101 = arith.subf %99, %100 : vector<128x64xf32>
    %102 = vector.extract_strided_slice %94 {offsets = [0, 192], sizes = [128, 64], strides = [1, 1]} : vector<128x256xf32> to vector<128x64xf32>
    %103 = arith.mulf %96, %81 : vector<128x64xf32>
    %104 = arith.mulf %95, %101 : vector<128x64xf32>
    %105 = arith.addf %103, %104 : vector<128x64xf32>
    %106 = math.tanh %105 : vector<128x64xf32>
    %107 = arith.mulf %102, %106 : vector<128x64xf32>
    %108 = arith.truncf %107 : vector<128x64xf32> to vector<128x64xbf16>
    %c0_30 = arith.constant 0 : index
    %c0_31 = arith.constant 0 : index
    %109 = vector.load %arg5[%c0_30, %c0_31] : memref<64x32xbf16, #tpu.memory_space<vmem>>, vector<64x32xbf16>
    %cst_32 = arith.constant dense<0.000000e+00> : vector<128x32xf32>
    %110 = tpu.matmul %108, %109, %cst_32 {dimension_numbers = #tpu.dot_dimension_numbers<[1], [0], [0], [1], [0, 0, 1, 1], [], []>} : vector<128x64xbf16>, vector<64x32xbf16>, vector<128x32xf32> -> vector<128x32xf32>
    %c0_33 = arith.constant 0 : index
    %c0_34 = arith.constant 0 : index
    %111 = vector.load %arg6[%c0_33, %c0_34] : memref<1x32xf32, #tpu.memory_space<vmem>>, vector<1x32xf32>
    %112 = vector.broadcast %111 : vector<1x32xf32> to vector<128x32xf32>
    %113 = arith.addf %110, %112 : vector<128x32xf32>
    %cst_35 = arith.constant 0.000000e+00 : f32
    %114 = vector.broadcast %cst_35 : f32 to vector<128x32xf32>
    %115 = arith.maximumf %113, %114 : vector<128x32xf32>
    %116 = arith.truncf %115 : vector<128x32xf32> to vector<128x32xbf16>
    %c0_36 = arith.constant 0 : index
    %c0_37 = arith.constant 0 : index
    %117 = vector.load %arg7[%c0_36, %c0_37] : memref<32x32xbf16, #tpu.memory_space<vmem>>, vector<32x32xbf16>
    %cst_38 = arith.constant dense<0.000000e+00> : vector<128x32xf32>
    %118 = tpu.matmul %116, %117, %cst_38 {dimension_numbers = #tpu.dot_dimension_numbers<[1], [0], [0], [1], [0, 0, 1, 1], [], []>} : vector<128x32xbf16>, vector<32x32xbf16>, vector<128x32xf32> -> vector<128x32xf32>
    %c0_39 = arith.constant 0 : index
    %c0_40 = arith.constant 0 : index
    %119 = vector.load %arg8[%c0_39, %c0_40] : memref<1x32xf32, #tpu.memory_space<vmem>>, vector<1x32xf32>
    %120 = vector.broadcast %119 : vector<1x32xf32> to vector<128x32xf32>
    %121 = arith.addf %118, %120 : vector<128x32xf32>
    %cst_41 = arith.constant 0.000000e+00 : f32
    %122 = vector.broadcast %cst_41 : f32 to vector<128x32xf32>
    %123 = arith.maximumf %121, %122 : vector<128x32xf32>
    %c0_42 = arith.constant 0 : index
    %c0_43 = arith.constant 0 : index
    %124 = vector.load %arg9[%c0_42, %c0_43] : memref<128x32xf32, #tpu.memory_space<vmem>>, vector<128x32xf32>
    tpu.vector_store %arg9[%c0_42, %c0_43], %123 {strides = array<i32>} : memref<128x32xf32, #tpu.memory_space<vmem>>, vector<128x32xf32>,
    return
  }
  func.func @transform_0(%arg0: i32) -> (i32, i32, i32) {
    %c0_i32 = arith.constant 0 : i32
    %c0_i32_0 = arith.constant 0 : i32
    %c0_i32_1 = arith.constant 0 : i32
    return %c0_i32, %arg0, %c0_i32_0 : i32, i32, i32
  }
  func.func @transform_1(%arg0: i32) -> (i32, i32) {
    %c0_i32 = arith.constant 0 : i32
    %c0_i32_0 = arith.constant 0 : i32
    %c0_i32_1 = arith.constant 0 : i32
    return %c0_i32, %c0_i32_0 : i32, i32
  }
  func.func @transform_2(%arg0: i32) -> (i32, i32) {
    %c0_i32 = arith.constant 0 : i32
    %c0_i32_0 = arith.constant 0 : i32
    %c0_i32_1 = arith.constant 0 : i32
    return %c0_i32, %c0_i32_0 : i32, i32
  }
  func.func @transform_3(%arg0: i32) -> (i32, i32) {
    %c0_i32 = arith.constant 0 : i32
    %c0_i32_0 = arith.constant 0 : i32
    %c0_i32_1 = arith.constant 0 : i32
    return %c0_i32, %c0_i32_0 : i32, i32
  }
  func.func @transform_4(%arg0: i32) -> (i32, i32) {
    %c0_i32 = arith.constant 0 : i32
    %c0_i32_0 = arith.constant 0 : i32
    %c0_i32_1 = arith.constant 0 : i32
    return %c0_i32, %c0_i32_0 : i32, i32
  }
  func.func @transform_5(%arg0: i32) -> (i32, i32) {
    %c0_i32 = arith.constant 0 : i32
    %c0_i32_0 = arith.constant 0 : i32
    %c0_i32_1 = arith.constant 0 : i32
    return %c0_i32, %c0_i32_0 : i32, i32
  }
  func.func @transform_6(%arg0: i32) -> (i32, i32) {
    %c0_i32 = arith.constant 0 : i32
    %c0_i32_0 = arith.constant 0 : i32
    %c0_i32_1 = arith.constant 0 : i32
    return %c0_i32, %c0_i32_0 : i32, i32
  }
  func.func @transform_7(%arg0: i32) -> (i32, i32) {
    %c0_i32 = arith.constant 0 : i32
    %c0_i32_0 = arith.constant 0 : i32
    %c0_i32_1 = arith.constant 0 : i32
    return %c0_i32, %c0_i32_0 : i32, i32
  }
  func.func @transform_8(%arg0: i32) -> (i32, i32) {
    %c0_i32 = arith.constant 0 : i32
    %c0_i32_0 = arith.constant 0 : i32
    return %arg0, %c0_i32 : i32, i32
  }
}

</mosaic_0001>

<llo_original>
// kernel: tpu_custom_call.1
$region0: #{tpu_custom_call.1}
  #allocation0 [shape = 'u32[]', space=smem, size = 0x4, offset = 0x4, fixed_abs, tag = 'smem constant byte address 0x4 - core index']
  #allocation1 [shape = 'u32[144,128]{1,0:T(1,128)}', space=vmem, size = 0x12000, scoped, tag = 'internal scratch']
  %s0 = inlined_call_operand.vmem [shape: f32[4,512,32], index: 0, kind: input, shape index: {}]
  %s1 = inlined_call_operand.vmem [shape: bf16[32,256], index: 1, kind: input, shape index: {}]
  %s2 = inlined_call_operand.vmem [shape: bf16[64,256], index: 2, kind: input, shape index: {}]
  %s3 = inlined_call_operand.vmem [shape: f32[1,256], index: 3, kind: input, shape index: {}]
  %s4 = inlined_call_operand.vmem [shape: bf16[64,32], index: 4, kind: input, shape index: {}]
  %s5 = inlined_call_operand.vmem [shape: f32[1,32], index: 5, kind: input, shape index: {}]
  %s6 = inlined_call_operand.vmem [shape: bf16[32,32], index: 6, kind: input, shape index: {}]
  %s7 = inlined_call_operand.vmem [shape: f32[1,32], index: 7, kind: input, shape index: {}]
  %s8 = inlined_call_operand.vmem [shape: f32[512,32], index: 8, kind: output, shape index: {}]
  %s9 = sld [smem:[#allocation0]]
  $region103: #{tpu_custom_call.1} parent=0
    _
  %s11 = ssub.s32 1, %s9
  %s12 = scalar_select 0, %s11, %s9
  $region1: #{tpu_custom_call.1} parent=0
    #allocation2 [shape = 'u8[524288]{0}', space=vmem, size = 0x80000, scoped, tag = 'input window, operand 0']
    loop: start=0, step=1, limit=6
    $region2: #{tpu_custom_call.1} parent=1 // loop_pre_header
      _
    $region3: #{tpu_custom_call.1} parent=1 // loop_header
      %s14 = sphi 0, %s18
      %p15 = scmp.ge.s32.totalorder %s14, 6
      %s24 = sphi 0, %s26
      %s27 = sphi 0, %s24
      %s28 = sphi 0, %s27
      %s44 = sphi 0, %s28
      %s48 = sphi 0, %s48
      %s50 = sphi 0, %s48
      %s51 = sphi 0, %s50
      %s65 = sphi 0, %s51
      %s69 = sphi 0, %s69
      %s71 = sphi 0, %s69
      %s72 = sphi 0, %s71
      %s86 = sphi 0, %s72
      %s90 = sphi 0, %s90
      %s92 = sphi 0, %s90
      %s93 = sphi 0, %s92
      %s107 = sphi 0, %s93
      %s111 = sphi 0, %s111
      %s113 = sphi 0, %s111
      %s114 = sphi 0, %s113
      %s128 = sphi 0, %s114
      %s132 = sphi 0, %s132
      %s134 = sphi 0, %s132
      %s135 = sphi 0, %s134
      %s149 = sphi 0, %s135
      %s153 = sphi 0, %s153
      %s155 = sphi 0, %s153
      %s156 = sphi 0, %s155
      %s170 = sphi 0, %s156
      %s174 = sphi 0, %s174
      %s176 = sphi 0, %s174
      %s177 = sphi 0, %s176
      %s191 = sphi 0, %s177
      %s197 = sphi 0, %s199
      %s200 = sphi 0, %s197
      %s201 = sphi 0, %s200
      %s217 = sphi 0, %s201
    $region4: #{tpu_custom_call.1} parent=1 // loop_header_branch
      %17 = sbr.rel (%p15) target = $region8
    $region5: #{tpu_custom_call.1} parent=1 // loop_body
      %s19 = ssub.s32 %s14, 1
      %s20 = ssub.s32 %s14, 2
      %s21 = sadd.s32 %s14, 1
      %s22 = ssub.s32 %s14, %s21
      %p23 = scmp.eq.s32.totalorder %s22, 0
      %s25 = sadd.s32 %s24, 1
      %s26 = scalar_select %p23, %s24, %s25
      %p29 = pneg %p23
      %p30 = scmp.eq.s32.totalorder %s14, 3
      %p31 = por %p29, %p30
      %p32 = scmp.ne.s32.totalorder %s24, %s27
      %p33 = scmp.eq.s32.totalorder %s14, 0
      %p34 = por %p32, %p33
      %p35 = scmp.ne.s32.totalorder %s24, %s27
      %p36 = scmp.eq.s32.totalorder %s19, 3
      %p37 = por %p35, %p36
      %p38 = scmp.ne.s32.totalorder %s27, %s28
      %p39 = scmp.eq.s32.totalorder %s19, 0
      %p40 = por %p38, %p39
      %p41 = scmp.ne.s32.totalorder %s27, %s28
      %p42 = scmp.eq.s32.totalorder %s20, 3
      %p43 = por %p41, %p42
      %p45 = scmp.ne.s32.totalorder %s28, %s44
      %p46 = scmp.eq.s32.totalorder %s20, 0
      %p47 = por %p45, %p46
      %s49 = sadd.s32 %s48, 1
      %p52 = scmp.eq.s32.totalorder %s14, 3
      %p53 = scmp.ne.s32.totalorder %s48, %s50
      %p54 = scmp.eq.s32.totalorder %s14, 0
      %p55 = por %p53, %p54
      %p56 = scmp.ne.s32.totalorder %s48, %s50
      %p57 = scmp.eq.s32.totalorder %s19, 3
      %p58 = por %p56, %p57
      %p59 = scmp.ne.s32.totalorder %s50, %s51
      %p60 = scmp.eq.s32.totalorder %s19, 0
      %p61 = por %p59, %p60
      %p62 = scmp.ne.s32.totalorder %s50, %s51
      %p63 = scmp.eq.s32.totalorder %s20, 3
      %p64 = por %p62, %p63
      %p66 = scmp.ne.s32.totalorder %s51, %s65
      %p67 = scmp.eq.s32.totalorder %s20, 0
      %p68 = por %p66, %p67
      %s70 = sadd.s32 %s69, 1
      %p73 = scmp.eq.s32.totalorder %s14, 3
      %p74 = scmp.ne.s32.totalorder %s69, %s71
      %p75 = scmp.eq.s32.totalorder %s14, 0
      %p76 = por %p74, %p75
      %p77 = scmp.ne.s32.totalorder %s69, %s71
      %p78 = scmp.eq.s32.totalorder %s19, 3
      %p79 = por %p77, %p78
      %p80 = scmp.ne.s32.totalorder %s71, %s72
      %p81 = scmp.eq.s32.totalorder %s19, 0
      %p82 = por %p80, %p81
      %p83 = scmp.ne.s32.totalorder %s71, %s72
      %p84 = scmp.eq.s32.totalorder %s20, 3
      %p85 = por %p83, %p84
      %p87 = scmp.ne.s32.totalorder %s72, %s86
      %p88 = scmp.eq.s32.totalorder %s20, 0
      %p89 = por %p87, %p88
      %s91 = sadd.s32 %s90, 1
      %p94 = scmp.eq.s32.totalorder %s14, 3
      %p95 = scmp.ne.s32.totalorder %s90, %s92
      %p96 = scmp.eq.s32.totalorder %s14, 0
      %p97 = por %p95, %p96
      %p98 = scmp.ne.s32.totalorder %s90, %s92
      %p99 = scmp.eq.s32.totalorder %s19, 3
      %p100 = por %p98, %p99
      %p101 = scmp.ne.s32.totalorder %s92, %s93
      %p102 = scmp.eq.s32.totalorder %s19, 0
      %p103 = por %p101, %p102
      %p104 = scmp.ne.s32.totalorder %s92, %s93
      %p105 = scmp.eq.s32.totalorder %s20, 3
      %p106 = por %p104, %p105
      %p108 = scmp.ne.s32.totalorder %s93, %s107
      %p109 = scmp.eq.s32.totalorder %s20, 0
      %p110 = por %p108, %p109
      %s112 = sadd.s32 %s111, 1
      %p115 = scmp.eq.s32.totalorder %s14, 3
      %p116 = scmp.ne.s32.totalorder %s111, %s113
      %p117 = scmp.eq.s32.totalorder %s14, 0
      %p118 = por %p116, %p117
      %p119 = scmp.ne.s32.totalorder %s111, %s113
      %p120 = scmp.eq.s32.totalorder %s19, 3
      %p121 = por %p119, %p120
      %p122 = scmp.ne.s32.totalorder %s113, %s114
      %p123 = scmp.eq.s32.totalorder %s19, 0
      %p124 = por %p122, %p123
      %p125 = scmp.ne.s32.totalorder %s113, %s114
      %p126 = scmp.eq.s32.totalorder %s20, 3
      %p127 = por %p125, %p126
      %p129 = scmp.ne.s32.totalorder %s114, %s128
      %p130 = scmp.eq.s32.totalorder %s20, 0
      %p131 = por %p129, %p130
      %s133 = sadd.s32 %s132, 1
      %p136 = scmp.eq.s32.totalorder %s14, 3
      %p137 = scmp.ne.s32.totalorder %s132, %s134
      %p138 = scmp.eq.s32.totalorder %s14, 0
      %p139 = por %p137, %p138
      %p140 = scmp.ne.s32.totalorder %s132, %s134
      %p141 = scmp.eq.s32.totalorder %s19, 3
      %p142 = por %p140, %p141
      %p143 = scmp.ne.s32.totalorder %s134, %s135
      %p144 = scmp.eq.s32.totalorder %s19, 0
      %p145 = por %p143, %p144
      %p146 = scmp.ne.s32.totalorder %s134, %s135
      %p147 = scmp.eq.s32.totalorder %s20, 3
      %p148 = por %p146, %p147
      %p150 = scmp.ne.s32.totalorder %s135, %s149
      %p151 = scmp.eq.s32.totalorder %s20, 0
      %p152 = por %p150, %p151
      %s154 = sadd.s32 %s153, 1
      %p157 = scmp.eq.s32.totalorder %s14, 3
      %p158 = scmp.ne.s32.totalorder %s153, %s155
      %p159 = scmp.eq.s32.totalorder %s14, 0
      %p160 = por %p158, %p159
      %p161 = scmp.ne.s32.totalorder %s153, %s155
      %p162 = scmp.eq.s32.totalorder %s19, 3
      %p163 = por %p161, %p162
      %p164 = scmp.ne.s32.totalorder %s155, %s156
      %p165 = scmp.eq.s32.totalorder %s19, 0
      %p166 = por %p164, %p165
      %p167 = scmp.ne.s32.totalorder %s155, %s156
      %p168 = scmp.eq.s32.totalorder %s20, 3
      %p169 = por %p167, %p168
      %p171 = scmp.ne.s32.totalorder %s156, %s170
      %p172 = scmp.eq.s32.totalorder %s20, 0
      %p173 = por %p171, %p172
      %s175 = sadd.s32 %s174, 1
      %p178 = scmp.eq.s32.totalorder %s14, 3
      %p179 = scmp.ne.s32.totalorder %s174, %s176
      %p180 = scmp.eq.s32.totalorder %s14, 0
      %p181 = por %p179, %p180
      %p182 = scmp.ne.s32.totalorder %s174, %s176
      %p183 = scmp.eq.s32.totalorder %s19, 3
      %p184 = por %p182, %p183
      %p185 = scmp.ne.s32.totalorder %s176, %s177
      %p186 = scmp.eq.s32.totalorder %s19, 0
      %p187 = por %p185, %p186
      %p188 = scmp.ne.s32.totalorder %s176, %s177
      %p189 = scmp.eq.s32.totalorder %s20, 3
      %p190 = por %p188, %p189
      %p192 = scmp.ne.s32.totalorder %s177, %s191
      %p193 = scmp.eq.s32.totalorder %s20, 0
      %p194 = por %p192, %p193
      %s195 = ssub.s32 %s14, %s21
      %p196 = scmp.eq.s32.totalorder %s195, 0
      %s198 = sadd.s32 %s197, 1
      %s199 = scalar_select %p196, %s197, %s198
      %p202 = pneg %p196
      %p203 = scmp.eq.s32.totalorder %s14, 3
      %p204 = por %p202, %p203
      %p205 = scmp.ne.s32.totalorder %s197, %s200
      %p206 = scmp.eq.s32.totalorder %s14, 0
      %p207 = por %p205, %p206
      %p208 = scmp.ne.s32.totalorder %s197, %s200
      %p209 = scmp.eq.s32.totalorder %s19, 3
      %p210 = por %p208, %p209
      %p211 = scmp.ne.s32.totalorder %s200, %s201
      %p212 = scmp.eq.s32.totalorder %s19, 0
      %p213 = por %p211, %p212
      %p214 = scmp.ne.s32.totalorder %s200, %s201
      %p215 = scmp.eq.s32.totalorder %s20, 3
      %p216 = por %p214, %p215
      %p218 = scmp.ne.s32.totalorder %s201, %s217
      %p219 = scmp.eq.s32.totalorder %s20, 0
      %p220 = por %p218, %p219
      %p221 = scmp.le.s32.totalorder 1, %s14
      %p222 = scmp.lt.s32.totalorder %s14, 5
      %p223 = pnand %p221, %p222
      %p224 = pneg %p223
      // Predicated region
      $region9: #{tpu_custom_call.1} parent=5 // pred_check
        _
      $region10: #{tpu_custom_call.1} parent=5 // pred_check_branch
        %226 = sbr.rel (%p223) target = $region12
      $region11: #{tpu_custom_call.1} parent=5 // pred_region
        %s227 = ssub.s32 %s14, 1
        // Predicated region
        $region13: #{tpu_custom_call.1} parent=11 // pred_check
          %p228 = pneg %p61
        $region14: #{tpu_custom_call.1} parent=11 // pred_check_branch
          %230 = sbr.rel (%p228) target = $region16
        $region15: #{tpu_custom_call.1} parent=11 // pred_region
          _
        $region16: #{tpu_custom_call.1} parent=11 // pred_fallthru
          _
        // Predicated region
        $region17: #{tpu_custom_call.1} parent=11 // pred_check
          %p231 = pneg %p82
        $region18: #{tpu_custom_call.1} parent=11 // pred_check_branch
          %233 = sbr.rel (%p231) target = $region20
        $region19: #{tpu_custom_call.1} parent=11 // pred_region
          _
        $region20: #{tpu_custom_call.1} parent=11 // pred_fallthru
          _
        // Predicated region
        $region21: #{tpu_custom_call.1} parent=11 // pred_check
          %p234 = pneg %p103
        $region22: #{tpu_custom_call.1} parent=11 // pred_check_branch
          %236 = sbr.rel (%p234) target = $region24
        $region23: #{tpu_custom_call.1} parent=11 // pred_region
          _
        $region24: #{tpu_custom_call.1} parent=11 // pred_fallthru
          _
        // Predicated region
        $region25: #{tpu_custom_call.1} parent=11 // pred_check
          %p237 = pneg %p124
        $region26: #{tpu_custom_call.1} parent=11 // pred_check_branch
          %239 = sbr.rel (%p237) target = $region28
        $region27: #{tpu_custom_call.1} parent=11 // pred_region
          _
        $region28: #{tpu_custom_call.1} parent=11 // pred_fallthru
          _
        // Predicated region
        $region29: #{tpu_custom_call.1} parent=11 // pred_check
          %p240 = pneg %p145
        $region30: #{tpu_custom_call.1} parent=11 // pred_check_branch
          %242 = sbr.rel (%p240) target = $region32
        $region31: #{tpu_custom_call.1} parent=11 // pred_region
          _
        $region32: #{tpu_custom_call.1} parent=11 // pred_fallthru
          _
        // Predicated region
        $region33: #{tpu_custom_call.1} parent=11 // pred_check
          %p243 = pneg %p166
        $region34: #{tpu_custom_call.1} parent=11 // pred_check_branch
          %245 = sbr.rel (%p243) target = $region36
        $region35: #{tpu_custom_call.1} parent=11 // pred_region
          _
        $region36: #{tpu_custom_call.1} parent=11 // pred_fallthru
          _
        // Predicated region
        $region37: #{tpu_custom_call.1} parent=11 // pred_check
          %p246 = pneg %p187
        $region38: #{tpu_custom_call.1} parent=11 // pred_check_branch
          %248 = sbr.rel (%p246) target = $region40
        $region39: #{tpu_custom_call.1} parent=11 // pred_region
          _
        $region40: #{tpu_custom_call.1} parent=11 // pred_fallthru
          _
      $region12: #{tpu_custom_call.1} parent=5 // pred_fallthru
        _
      %p249 = scmp.lt.s32.totalorder %s14, 4
      // Predicated region
      $region41: #{tpu_custom_call.1} parent=5 // pred_check
        %p250 = pneg %p249
      $region42: #{tpu_custom_call.1} parent=5 // pred_check_branch
        %252 = sbr.rel (%p250) target = $region44
      $region43: #{tpu_custom_call.1} parent=5 // pred_region
        // Predicated region
        $region45: #{tpu_custom_call.1} parent=43 // pred_check
          %p253 = pneg %p34
        $region46: #{tpu_custom_call.1} parent=43 // pred_check_branch
          %255 = sbr.rel (%p253) target = $region48
        $region47: #{tpu_custom_call.1} parent=43 // pred_region
          %s256 = sand.u32 %s24, 1
          %s257 = sand.u32 %s24, 1
          %s258 = smul.addr %s257, 512
          %s259 = scalar_lea.vmem [#allocation2], %s258
          %s260 = smul.u32 16, %s14
          %s261 = smul.addr %s260, 8
          %s262 = scalar_lea.vmem %s0, %s261
          // Predicated region
          $region49: #{tpu_custom_call.1} parent=47 // pred_check
            _
          $region50: #{tpu_custom_call.1} parent=47 // pred_check_branch
            %264 = sbr.rel (0) target = $region52
          $region51: #{tpu_custom_call.1} parent=47 // pred_region
            // Predicated region
            $region53: #{tpu_custom_call.1} parent=51 // pred_check
              _
            $region54: #{tpu_custom_call.1} parent=51 // pred_check_branch
              %266 = sbr.rel (0) target = $region56
            $region55: #{tpu_custom_call.1} parent=51 // pred_region
              // Predicated region
              $region68: #{tpu_custom_call.1} parent=55 // pred_check
                _
              $region69: #{tpu_custom_call.1} parent=55 // pred_check_branch
                %408 = sbr.rel (0) target = $region71
              $region70: #{tpu_custom_call.1} parent=55 // pred_region
                loop: start=0, step=1, limit=1
                $region72: #{tpu_custom_call.1} parent=70 // loop_pre_header
                  _
                $region73: #{tpu_custom_call.1} parent=70 // loop_header
                  %s410 = sphi 0, %s414
                  %p411 = scmp.ge.s32.totalorder %s410, 1
                  %s415 = sphi %s262, %s262
                  %s416 = sphi %s259, %s259
                $region74: #{tpu_custom_call.1} parent=70 // loop_header_branch
                  %413 = sbr.rel (%p411) target = $region78
                $region75: #{tpu_custom_call.1} parent=70 // loop_body
                  %v417 = vld [vmem:[%s415] sm:$0xff]
                  %418 = vst [vmem:[%s416] sm:$0xff] %v417
                  %v419 = vld [vmem:[%s415 + $0x8] sm:$0xff]
                  %420 = vst [vmem:[%s416 + $0x8] sm:$0xff] %v419
                  %v421 = vld [vmem:[%s415 + $0x10] sm:$0xff]
                  %422 = vst [vmem:[%s416 + $0x10] sm:$0xff] %v421
                  %v423 = vld [vmem:[%s415 + $0x18] sm:$0xff]
                  %424 = vst [vmem:[%s416 + $0x18] sm:$0xff] %v423
                  %v425 = vld [vmem:[%s415 + $0x20] sm:$0xff]
                  %426 = vst [vmem:[%s416 + $0x20] sm:$0xff] %v425
                  %v427 = vld [vmem:[%s415 + $0x28] sm:$0xff]
                  %428 = vst [vmem:[%s416 + $0x28] sm:$0xff] %v427
                  %v429 = vld [vmem:[%s415 + $0x30] sm:$0xff]
                  %430 = vst [vmem:[%s416 + $0x30] sm:$0xff] %v429
                  %v431 = vld [vmem:[%s415 + $0x38] sm:$0xff]
                  %432 = vst [vmem:[%s416 + $0x38] sm:$0xff] %v431
                  %v433 = vld [vmem:[%s415 + $0x40] sm:$0xff]
                  %434 = vst [vmem:[%s416 + $0x40] sm:$0xff] %v433
                  %v435 = vld [vmem:[%s415 + $0x48] sm:$0xff]
                  %436 = vst [vmem:[%s416 + $0x48] sm:$0xff] %v435
                  %v437 = vld [vmem:[%s415 + $0x50] sm:$0xff]
                  %438 = vst [vmem:[%s416 + $0x50] sm:$0xff] %v437
                  %v439 = vld [vmem:[%s415 + $0x58] sm:$0xff]
                  %440 = vst [vmem:[%s416 + $0x58] sm:$0xff] %v439
                  %v441 = vld [vmem:[%s415 + $0x60] sm:$0xff]
                  %442 = vst [vmem:[%s416 + $0x60] sm:$0xff] %v441
                  %v443 = vld [vmem:[%s415 + $0x68] sm:$0xff]
                  %444 = vst [vmem:[%s416 + $0x68] sm:$0xff] %v443
                  %v445 = vld [vmem:[%s415 + $0x70] sm:$0xff]
                  %446 = vst [vmem:[%s416 + $0x70] sm:$0xff] %v445
                  %v447 = vld [vmem:[%s415 + $0x78] sm:$0xff]
                  %448 = vst [vmem:[%s416 + $0x78] sm:$0xff] %v447
                  %v449 = vld [vmem:[%s415 + $0x200] sm:$0xff]
                  %450 = vst [vmem:[%s416 + $0x80] sm:$0xff] %v449
                  %v451 = vld [vmem:[%s415 + $0x208] sm:$0xff]
                  %452 = vst [vmem:[%s416 + $0x88] sm:$0xff] %v451
                  %v453 = vld [vmem:[%s415 + $0x210] sm:$0xff]
                  %454 = vst [vmem:[%s416 + $0x90] sm:$0xff] %v453
                  %v455 = vld [vmem:[%s415 + $0x218] sm:$0xff]
                  %456 = vst [vmem:[%s416 + $0x98] sm:$0xff] %v455
                  %v457 = vld [vmem:[%s415 + $0x220] sm:$0xff]
                  %458 = vst [vmem:[%s416 + $0xa0] sm:$0xff] %v457
                  %v459 = vld [vmem:[%s415 + $0x228] sm:$0xff]
                  %460 = vst [vmem:[%s416 + $0xa8] sm:$0xff] %v459
                  %v461 = vld [vmem:[%s415 + $0x230] sm:$0xff]
                  %462 = vst [vmem:[%s416 + $0xb0] sm:$0xff] %v461
                  %v463 = vld [vmem:[%s415 + $0x238] sm:$0xff]
                  %464 = vst [vmem:[%s416 + $0xb8] sm:$0xff] %v463
                  %v465 = vld [vmem:[%s415 + $0x240] sm:$0xff]
                  %466 = vst [vmem:[%s416 + $0xc0] sm:$0xff] %v465
                  %v467 = vld [vmem:[%s415 + $0x248] sm:$0xff]
                  %468 = vst [vmem:[%s416 + $0xc8] sm:$0xff] %v467
                  %v469 = vld [vmem:[%s415 + $0x250] sm:$0xff]
                  %470 = vst [vmem:[%s416 + $0xd0] sm:$0xff] %v469
                  %v471 = vld [vmem:[%s415 + $0x258] sm:$0xff]
                  %472 = vst [vmem:[%s416 + $0xd8] sm:$0xff] %v471
                  %v473 = vld [vmem:[%s415 + $0x260] sm:$0xff]
                  %474 = vst [vmem:[%s416 + $0xe0] sm:$0xff] %v473
                  %v475 = vld [vmem:[%s415 + $0x268] sm:$0xff]
                  %476 = vst [vmem:[%s416 + $0xe8] sm:$0xff] %v475
                  %v477 = vld [vmem:[%s415 + $0x270] sm:$0xff]
                  %478 = vst [vmem:[%s416 + $0xf0] sm:$0xff] %v477
                  %v479 = vld [vmem:[%s415 + $0x278] sm:$0xff]
                  %480 = vst [vmem:[%s416 + $0xf8] sm:$0xff] %v479
                  %v481 = vld [vmem:[%s415 + $0x400] sm:$0xff]
                  %482 = vst [vmem:[%s416 + $0x100] sm:$0xff] %v481
                  %v483 = vld [vmem:[%s415 + $0x408] sm:$0xff]
                  %484 = vst [vmem:[%s416 + $0x108] sm:$0xff] %v483
                  %v485 = vld [vmem:[%s415 + $0x410] sm:$0xff]
                  %486 = vst [vmem:[%s416 + $0x110] sm:$0xff] %v485
                  %v487 = vld [vmem:[%s415 + $0x418] sm:$0xff]
                  %488 = vst [vmem:[%s416 + $0x118] sm:$0xff] %v487
                  %v489 = vld [vmem:[%s415 + $0x420] sm:$0xff]
                  %490 = vst [vmem:[%s416 + $0x120] sm:$0xff] %v489
                  %v491 = vld [vmem:[%s415 + $0x428] sm:$0xff]
                  %492 = vst [vmem:[%s416 + $0x128] sm:$0xff] %v491
                  %v493 = vld [vmem:[%s415 + $0x430] sm:$0xff]
                  %494 = vst [vmem:[%s416 + $0x130] sm:$0xff] %v493
                  %v495 = vld [vmem:[%s415 + $0x438] sm:$0xff]
                  %496 = vst [vmem:[%s416 + $0x138] sm:$0xff] %v495
                  %v497 = vld [vmem:[%s415 + $0x440] sm:$0xff]
                  %498 = vst [vmem:[%s416 + $0x140] sm:$0xff] %v497
                  %v499 = vld [vmem:[%s415 + $0x448] sm:$0xff]
                  %500 = vst [vmem:[%s416 + $0x148] sm:$0xff] %v499
                  %v501 = vld [vmem:[%s415 + $0x450] sm:$0xff]
                  %502 = vst [vmem:[%s416 + $0x150] sm:$0xff] %v501
                  %v503 = vld [vmem:[%s415 + $0x458] sm:$0xff]
                  %504 = vst [vmem:[%s416 + $0x158] sm:$0xff] %v503
                  %v505 = vld [vmem:[%s415 + $0x460] sm:$0xff]
                  %506 = vst [vmem:[%s416 + $0x160] sm:$0xff] %v505
                  %v507 = vld [vmem:[%s415 + $0x468] sm:$0xff]
                  %508 = vst [vmem:[%s416 + $0x168] sm:$0xff] %v507
                  %v509 = vld [vmem:[%s415 + $0x470] sm:$0xff]
                  %510 = vst [vmem:[%s416 + $0x170] sm:$0xff] %v509
                  %v511 = vld [vmem:[%s415 + $0x478] sm:$0xff]
                  %512 = vst [vmem:[%s416 + $0x178] sm:$0xff] %v511
                  %v513 = vld [vmem:[%s415 + $0x600] sm:$0xff]
                  %514 = vst [vmem:[%s416 + $0x180] sm:$0xff] %v513
                  %v515 = vld [vmem:[%s415 + $0x608] sm:$0xff]
                  %516 = vst [vmem:[%s416 + $0x188] sm:$0xff] %v515
                  %v517 = vld [vmem:[%s415 + $0x610] sm:$0xff]
                  %518 = vst [vmem:[%s416 + $0x190] sm:$0xff] %v517
                  %v519 = vld [vmem:[%s415 + $0x618] sm:$0xff]
                  %520 = vst [vmem:[%s416 + $0x198] sm:$0xff] %v519
                  %v521 = vld [vmem:[%s415 + $0x620] sm:$0xff]
                  %522 = vst [vmem:[%s416 + $0x1a0] sm:$0xff] %v521
                  %v523 = vld [vmem:[%s415 + $0x628] sm:$0xff]
                  %524 = vst [vmem:[%s416 + $0x1a8] sm:$0xff] %v523
                  %v525 = vld [vmem:[%s415 + $0x630] sm:$0xff]
                  %526 = vst [vmem:[%s416 + $0x1b0] sm:$0xff] %v525
                  %v527 = vld [vmem:[%s415 + $0x638] sm:$0xff]
                  %528 = vst [vmem:[%s416 + $0x1b8] sm:$0xff] %v527
                  %v529 = vld [vmem:[%s415 + $0x640] sm:$0xff]
                  %530 = vst [vmem:[%s416 + $0x1c0] sm:$0xff] %v529
                  %v531 = vld [vmem:[%s415 + $0x648] sm:$0xff]
                  %532 = vst [vmem:[%s416 + $0x1c8] sm:$0xff] %v531
                  %v533 = vld [vmem:[%s415 + $0x650] sm:$0xff]
                  %534 = vst [vmem:[%s416 + $0x1d0] sm:$0xff] %v533
                  %v535 = vld [vmem:[%s415 + $0x658] sm:$0xff]
                  %536 = vst [vmem:[%s416 + $0x1d8] sm:$0xff] %v535
                  %v537 = vld [vmem:[%s415 + $0x660] sm:$0xff]
                  %538 = vst [vmem:[%s416 + $0x1e0] sm:$0xff] %v537
                  %v539 = vld [vmem:[%s415 + $0x668] sm:$0xff]
                  %540 = vst [vmem:[%s416 + $0x1e8] sm:$0xff] %v539
                  %v541 = vld [vmem:[%s415 + $0x670] sm:$0xff]
                  %542 = vst [vmem:[%s416 + $0x1f0] sm:$0xff] %v541
                  %v543 = vld [vmem:[%s415 + $0x678] sm:$0xff]
                  %544 = vst [vmem:[%s416 + $0x1f8] sm:$0xff] %v543
                $region76: #{tpu_custom_call.1} parent=70 // loop_footer
                  %s414 = sadd.s32 1, %s410
                $region77: #{tpu_custom_call.1} parent=70 // loop_footer_branch
                  %409 = sbr.rel target = $region73
                $region78: #{tpu_custom_call.1} parent=70 // loop_exit
                  _
              $region71: #{tpu_custom_call.1} parent=55 // pred_fallthru
                _
              // Predicated region
              $region79: #{tpu_custom_call.1} parent=55 // pred_check
                _
              $region80: #{tpu_custom_call.1} parent=55 // pred_check_branch
                %546 = sbr.rel target = $region82
              $region81: #{tpu_custom_call.1} parent=55 // pred_region
                _
              $region82: #{tpu_custom_call.1} parent=55 // pred_fallthru
                _
            $region56: #{tpu_custom_call.1} parent=51 // pred_fallthru
              _
            // Predicated region
            $region57: #{tpu_custom_call.1} parent=51 // pred_check
              _
            $region58: #{tpu_custom_call.1} parent=51 // pred_check_branch
              %268 = sbr.rel target = $region60
            $region59: #{tpu_custom_call.1} parent=51 // pred_region
              %s270 = ssub.s32 256, 1
              loop: start=0, step=1, limit=1
              $region61: #{tpu_custom_call.1} parent=59 // loop_pre_header
                _
              $region62: #{tpu_custom_call.1} parent=59 // loop_header
                %s272 = sphi 0, %s276
                %p273 = scmp.ge.s32.totalorder %s272, 1
                %s277 = sphi %s262, %s262
                %s278 = sphi %s259, %s259
              $region63: #{tpu_custom_call.1} parent=59 // loop_header_branch
                %275 = sbr.rel (%p273) target = $region67
              $region64: #{tpu_custom_call.1} parent=59 // loop_body
                %v279 = vld [vmem:[%s277] sm:%s270]
                %280 = vst [vmem:[%s278] sm:%s270] %v279
                %v281 = vld [vmem:[%s277 + $0x8] sm:%s270]
                %282 = vst [vmem:[%s278 + $0x8] sm:%s270] %v281
                %v283 = vld [vmem:[%s277 + $0x10] sm:%s270]
                %284 = vst [vmem:[%s278 + $0x10] sm:%s270] %v283
                %v285 = vld [vmem:[%s277 + $0x18] sm:%s270]
                %286 = vst [vmem:[%s278 + $0x18] sm:%s270] %v285
                %v287 = vld [vmem:[%s277 + $0x20] sm:%s270]
                %288 = vst [vmem:[%s278 + $0x20] sm:%s270] %v287
                %v289 = vld [vmem:[%s277 + $0x28] sm:%s270]
                %290 = vst [vmem:[%s278 + $0x28] sm:%s270] %v289
                %v291 = vld [vmem:[%s277 + $0x30] sm:%s270]
                %292 = vst [vmem:[%s278 + $0x30] sm:%s270] %v291
                %v293 = vld [vmem:[%s277 + $0x38] sm:%s270]
                %294 = vst [vmem:[%s278 + $0x38] sm:%s270] %v293
                %v295 = vld [vmem:[%s277 + $0x40] sm:%s270]
                %296 = vst [vmem:[%s278 + $0x40] sm:%s270] %v295
                %v297 = vld [vmem:[%s277 + $0x48] sm:%s270]
                %298 = vst [vmem:[%s278 + $0x48] sm:%s270] %v297
                %v299 = vld [vmem:[%s277 + $0x50] sm:%s270]
                %300 = vst [vmem:[%s278 + $0x50] sm:%s270] %v299
                %v301 = vld [vmem:[%s277 + $0x58] sm:%s270]
                %302 = vst [vmem:[%s278 + $0x58] sm:%s270] %v301
                %v303 = vld [vmem:[%s277 + $0x60] sm:%s270]
                %304 = vst [vmem:[%s278 + $0x60] sm:%s270] %v303
                %v305 = vld [vmem:[%s277 + $0x68] sm:%s270]
                %306 = vst [vmem:[%s278 + $0x68] sm:%s270] %v305
                %v307 = vld [vmem:[%s277 + $0x70] sm:%s270]
                %308 = vst [vmem:[%s278 + $0x70] sm:%s270] %v307
                %v309 = vld [vmem:[%s277 + $0x78] sm:%s270]
                %310 = vst [vmem:[%s278 + $0x78] sm:%s270] %v309
                %v311 = vld [vmem:[%s277 + $0x200] sm:%s270]
                %312 = vst [vmem:[%s278 + $0x80] sm:%s270] %v311
                %v313 = vld [vmem:[%s277 + $0x208] sm:%s270]
                %314 = vst [vmem:[%s278 + $0x88] sm:%s270] %v313
                %v315 = vld [vmem:[%s277 + $0x210] sm:%s270]
                %316 = vst [vmem:[%s278 + $0x90] sm:%s270] %v315
                %v317 = vld [vmem:[%s277 + $0x218] sm:%s270]
                %318 = vst [vmem:[%s278 + $0x98] sm:%s270] %v317
                %v319 = vld [vmem:[%s277 + $0x220] sm:%s270]
                %320 = vst [vmem:[%s278 + $0xa0] sm:%s270] %v319
                %v321 = vld [vmem:[%s277 + $0x228] sm:%s270]
                %322 = vst [vmem:[%s278 + $0xa8] sm:%s270] %v321
                %v323 = vld [vmem:[%s277 + $0x230] sm:%s270]
                %324 = vst [vmem:[%s278 + $0xb0] sm:%s270] %v323
                %v325 = vld [vmem:[%s277 + $0x238] sm:%s270]
                %326 = vst [vmem:[%s278 + $0xb8] sm:%s270] %v325
                %v327 = vld [vmem:[%s277 + $0x240] sm:%s270]
                %328 = vst [vmem:[%s278 + $0xc0] sm:%s270] %v327
                %v329 = vld [vmem:[%s277 + $0x248] sm:%s270]
                %330 = vst [vmem:[%s278 + $0xc8] sm:%s270] %v329
                %v331 = vld [vmem:[%s277 + $0x250] sm:%s270]
                %332 = vst [vmem:[%s278 + $0xd0] sm:%s270] %v331
                %v333 = vld [vmem:[%s277 + $0x258] sm:%s270]
                %334 = vst [vmem:[%s278 + $0xd8] sm:%s270] %v333
                %v335 = vld [vmem:[%s277 + $0x260] sm:%s270]
                %336 = vst [vmem:[%s278 + $0xe0] sm:%s270] %v335
                %v337 = vld [vmem:[%s277 + $0x268] sm:%s270]
                %338 = vst [vmem:[%s278 + $0xe8] sm:%s270] %v337
                %v339 = vld [vmem:[%s277 + $0x270] sm:%s270]
                %340 = vst [vmem:[%s278 + $0xf0] sm:%s270] %v339
                %v341 = vld [vmem:[%s277 + $0x278] sm:%s270]
                %342 = vst [vmem:[%s278 + $0xf8] sm:%s270] %v341
                %v343 = vld [vmem:[%s277 + $0x400] sm:%s270]
                %344 = vst [vmem:[%s278 + $0x100] sm:%s270] %v343
                %v345 = vld [vmem:[%s277 + $0x408] sm:%s270]
                %346 = vst [vmem:[%s278 + $0x108] sm:%s270] %v345
                %v347 = vld [vmem:[%s277 + $0x410] sm:%s270]
                %348 = vst [vmem:[%s278 + $0x110] sm:%s270] %v347
                %v349 = vld [vmem:[%s277 + $0x418] sm:%s270]
                %350 = vst [vmem:[%s278 + $0x118] sm:%s270] %v349
                %v351 = vld [vmem:[%s277 + $0x420] sm:%s270]
                %352 = vst [vmem:[%s278 + $0x120] sm:%s270] %v351
                %v353 = vld [vmem:[%s277 + $0x428] sm:%s270]
                %354 = vst [vmem:[%s278 + $0x128] sm:%s270] %v353
                %v355 = vld [vmem:[%s277 + $0x430] sm:%s270]
                %356 = vst [vmem:[%s278 + $0x130] sm:%s270] %v355
                %v357 = vld [vmem:[%s277 + $0x438] sm:%s270]
                %358 = vst [vmem:[%s278 + $0x138] sm:%s270] %v357
                %v359 = vld [vmem:[%s277 + $0x440] sm:%s270]
                %360 = vst [vmem:[%s278 + $0x140] sm:%s270] %v359
                %v361 = vld [vmem:[%s277 + $0x448] sm:%s270]
                %362 = vst [vmem:[%s278 + $0x148] sm:%s270] %v361
                %v363 = vld [vmem:[%s277 + $0x450] sm:%s270]
                %364 = vst [vmem:[%s278 + $0x150] sm:%s270] %v363
                %v365 = vld [vmem:[%s277 + $0x458] sm:%s270]
                %366 = vst [vmem:[%s278 + $0x158] sm:%s270] %v365
                %v367 = vld [vmem:[%s277 + $0x460] sm:%s270]
                %368 = vst [vmem:[%s278 + $0x160] sm:%s270] %v367
                %v369 = vld [vmem:[%s277 + $0x468] sm:%s270]
                %370 = vst [vmem:[%s278 + $0x168] sm:%s270] %v369
                %v371 = vld [vmem:[%s277 + $0x470] sm:%s270]
                %372 = vst [vmem:[%s278 + $0x170] sm:%s270] %v371
                %v373 = vld [vmem:[%s277 + $0x478] sm:%s270]
                %374 = vst [vmem:[%s278 + $0x178] sm:%s270] %v373
                %v375 = vld [vmem:[%s277 + $0x600] sm:%s270]
                %376 = vst [vmem:[%s278 + $0x180] sm:%s270] %v375
                %v377 = vld [vmem:[%s277 + $0x608] sm:%s270]
                %378 = vst [vmem:[%s278 + $0x188] sm:%s270] %v377
                %v379 = vld [vmem:[%s277 + $0x610] sm:%s270]
                %380 = vst [vmem:[%s278 + $0x190] sm:%s270] %v379
                %v381 = vld [vmem:[%s277 + $0x618] sm:%s270]
                %382 = vst [vmem:[%s278 + $0x198] sm:%s270] %v381
                %v383 = vld [vmem:[%s277 + $0x620] sm:%s270]
                %384 = vst [vmem:[%s278 + $0x1a0] sm:%s270] %v383
                %v385 = vld [vmem:[%s277 + $0x628] sm:%s270]
                %386 = vst [vmem:[%s278 + $0x1a8] sm:%s270] %v385
                %v387 = vld [vmem:[%s277 + $0x630] sm:%s270]
                %388 = vst [vmem:[%s278 + $0x1b0] sm:%s270] %v387
                %v389 = vld [vmem:[%s277 + $0x638] sm:%s270]
                %390 = vst [vmem:[%s278 + $0x1b8] sm:%s270] %v389
                %v391 = vld [vmem:[%s277 + $0x640] sm:%s270]
                %392 = vst [vmem:[%s278 + $0x1c0] sm:%s270] %v391
                %v393 = vld [vmem:[%s277 + $0x648] sm:%s270]
                %394 = vst [vmem:[%s278 + $0x1c8] sm:%s270] %v393
                %v395 = vld [vmem:[%s277 + $0x650] sm:%s270]
                %396 = vst [vmem:[%s278 + $0x1d0] sm:%s270] %v395
                %v397 = vld [vmem:[%s277 + $0x658] sm:%s270]
                %398 = vst [vmem:[%s278 + $0x1d8] sm:%s270] %v397
                %v399 = vld [vmem:[%s277 + $0x660] sm:%s270]
                %400 = vst [vmem:[%s278 + $0x1e0] sm:%s270] %v399
                %v401 = vld [vmem:[%s277 + $0x668] sm:%s270]
                %402 = vst [vmem:[%s278 + $0x1e8] sm:%s270] %v401
                %v403 = vld [vmem:[%s277 + $0x670] sm:%s270]
                %404 = vst [vmem:[%s278 + $0x1f0] sm:%s270] %v403
                %v405 = vld [vmem:[%s277 + $0x678] sm:%s270]
                %406 = vst [vmem:[%s278 + $0x1f8] sm:%s270] %v405
              $region65: #{tpu_custom_call.1} parent=59 // loop_footer
                %s276 = sadd.s32 1, %s272
              $region66: #{tpu_custom_call.1} parent=59 // loop_footer_branch
                %271 = sbr.rel target = $region62
              $region67: #{tpu_custom_call.1} parent=59 // loop_exit
                _
            $region60: #{tpu_custom_call.1} parent=51 // pred_fallthru
              _
          $region52: #{tpu_custom_call.1} parent=47 // pred_fallthru
            _
          %547 = vnop
        $region48: #{tpu_custom_call.1} parent=43 // pred_fallthru
          _
      $region44: #{tpu_custom_call.1} parent=5 // pred_fallthru
        _
      %p548 = scmp.le.s32.totalorder 1, %s14
      %p549 = scmp.lt.s32.totalorder %s14, 5
      %p550 = pnand %p548, %p549
      %p551 = pneg %p550
      // Predicated region
      $region83: #{tpu_custom_call.1} parent=5 // pred_check
        _
      $region84: #{tpu_custom_call.1} parent=5 // pred_check_branch
        %553 = sbr.rel (%p550) target = $region86
      $region85: #{tpu_custom_call.1} parent=5 // pred_region
        %s554 = ssub.s32 %s14, 1
        %s555 = sand.u32 %s27, 1
        %s556 = sand.u32 %s27, 1
        %s557 = smul.addr %s556, 512
        %s558 = scalar_lea.vmem [#allocation2], %s557
        // Predicated region
        $region87: #{tpu_custom_call.1} parent=85 // pred_check
          %p559 = pneg %p40
        $region88: #{tpu_custom_call.1} parent=85 // pred_check_branch
          %561 = sbr.rel (%p559) target = $region90
        $region89: #{tpu_custom_call.1} parent=85 // pred_region
          _
        $region90: #{tpu_custom_call.1} parent=85 // pred_fallthru
          _
        %s562 = sand.u32 %s27, 1
        %s563 = sand.u32 %s27, 1
        %s564 = smul.addr %s563, 512
        %s565 = scalar_lea.vmem [#allocation2], %s564
        %p566 = pneg %p40
        %p567 = pneg %p37
        %p568 = pneg %p61
        %p569 = pneg %p58
        %p570 = pneg %p82
        %p571 = pneg %p79
        %p572 = pneg %p103
        %p573 = pneg %p100
        %p574 = pneg %p124
        %p575 = pneg %p121
        %p576 = pneg %p145
        %p577 = pneg %p142
        %p578 = pneg %p166
        %p579 = pneg %p163
        %p580 = pneg %p187
        %p581 = pneg %p184
        %p582 = pneg %p213
        %p583 = pneg %p210
        %s584 = smul.u32 16, %s19
        %p585 = scmp.lt.s32.totalorder %s584, 63
        %s586 = scalar_select %p585, %s584, 63
        %s587 = smul.addr %s586, 8
        %s588 = scalar_lea.vmem %s8, %s587
        %s589 = smul.u32 16, %s19
        %s590 = smul.u32 16, %s19
        %p591 = scmp.lt.s32.totalorder %s590, 63
        %s592 = scalar_select %p591, %s590, 63
        %s593 = smul.addr %s592, 8
        %s594 = scalar_lea.vmem %s8, %s593
        %s595 = smul.u32 16, %s19
        %v597 = vld [vmem:[%s558] sm:$0xff]
        %v598 = vld [vmem:[%s558 + $0x8] sm:$0xff]
        %v599 = vld [vmem:[%s558 + $0x10] sm:$0xff]
        %v600 = vld [vmem:[%s558 + $0x18] sm:$0xff]
        %v601 = vld [vmem:[%s558 + $0x20] sm:$0xff]
        %v602 = vld [vmem:[%s558 + $0x28] sm:$0xff]
        %v603 = vld [vmem:[%s558 + $0x30] sm:$0xff]
        %v604 = vld [vmem:[%s558 + $0x38] sm:$0xff]
        %v605 = vld [vmem:[%s558 + $0x40] sm:$0xff]
        %v606 = vld [vmem:[%s558 + $0x48] sm:$0xff]
        %v607 = vld [vmem:[%s558 + $0x50] sm:$0xff]
        %v608 = vld [vmem:[%s558 + $0x58] sm:$0xff]
        %v609 = vld [vmem:[%s558 + $0x60] sm:$0xff]
        %v610 = vld [vmem:[%s558 + $0x68] sm:$0xff]
        %v611 = vld [vmem:[%s558 + $0x70] sm:$0xff]
        %v612 = vld [vmem:[%s558 + $0x78] sm:$0xff]
        %v613 = vld [vmem:[%s558 + $0x80] sm:$0xff]
        %v614 = vld [vmem:[%s558 + $0x88] sm:$0xff]
        %v615 = vld [vmem:[%s558 + $0x90] sm:$0xff]
        %v616 = vld [vmem:[%s558 + $0x98] sm:$0xff]
        %v617 = vld [vmem:[%s558 + $0xa0] sm:$0xff]
        %v618 = vld [vmem:[%s558 + $0xa8] sm:$0xff]
        %v619 = vld [vmem:[%s558 + $0xb0] sm:$0xff]
        %v620 = vld [vmem:[%s558 + $0xb8] sm:$0xff]
        %v621 = vld [vmem:[%s558 + $0xc0] sm:$0xff]
        %v622 = vld [vmem:[%s558 + $0xc8] sm:$0xff]
        %v623 = vld [vmem:[%s558 + $0xd0] sm:$0xff]
        %v624 = vld [vmem:[%s558 + $0xd8] sm:$0xff]
        %v625 = vld [vmem:[%s558 + $0xe0] sm:$0xff]
        %v626 = vld [vmem:[%s558 + $0xe8] sm:$0xff]
        %v627 = vld [vmem:[%s558 + $0xf0] sm:$0xff]
        %v628 = vld [vmem:[%s558 + $0xf8] sm:$0xff]
        %v629 = vld [vmem:[%s558 + $0x100] sm:$0xff]
        %v630 = vld [vmem:[%s558 + $0x108] sm:$0xff]
        %v631 = vld [vmem:[%s558 + $0x110] sm:$0xff]
        %v632 = vld [vmem:[%s558 + $0x118] sm:$0xff]
        %v633 = vld [vmem:[%s558 + $0x120] sm:$0xff]
        %v634 = vld [vmem:[%s558 + $0x128] sm:$0xff]
        %v635 = vld [vmem:[%s558 + $0x130] sm:$0xff]
        %v636 = vld [vmem:[%s558 + $0x138] sm:$0xff]
        %v637 = vld [vmem:[%s558 + $0x140] sm:$0xff]
        %v638 = vld [vmem:[%s558 + $0x148] sm:$0xff]
        %v639 = vld [vmem:[%s558 + $0x150] sm:$0xff]
        %v640 = vld [vmem:[%s558 + $0x158] sm:$0xff]
        %v641 = vld [vmem:[%s558 + $0x160] sm:$0xff]
        %v642 = vld [vmem:[%s558 + $0x168] sm:$0xff]
        %v643 = vld [vmem:[%s558 + $0x170] sm:$0xff]
        %v644 = vld [vmem:[%s558 + $0x178] sm:$0xff]
        %v645 = vld [vmem:[%s558 + $0x180] sm:$0xff]
        %v646 = vld [vmem:[%s558 + $0x188] sm:$0xff]
        %v647 = vld [vmem:[%s558 + $0x190] sm:$0xff]
        %v648 = vld [vmem:[%s558 + $0x198] sm:$0xff]
        %v649 = vld [vmem:[%s558 + $0x1a0] sm:$0xff]
        %v650 = vld [vmem:[%s558 + $0x1a8] sm:$0xff]
        %v651 = vld [vmem:[%s558 + $0x1b0] sm:$0xff]
        %v652 = vld [vmem:[%s558 + $0x1b8] sm:$0xff]
        %v653 = vld [vmem:[%s558 + $0x1c0] sm:$0xff]
        %v654 = vld [vmem:[%s558 + $0x1c8] sm:$0xff]
        %v655 = vld [vmem:[%s558 + $0x1d0] sm:$0xff]
        %v656 = vld [vmem:[%s558 + $0x1d8] sm:$0xff]
        %v657 = vld [vmem:[%s558 + $0x1e0] sm:$0xff]
        %v658 = vld [vmem:[%s558 + $0x1e8] sm:$0xff]
        %v659 = vld [vmem:[%s558 + $0x1f0] sm:$0xff]
        %v660 = vld [vmem:[%s558 + $0x1f8] sm:$0xff]
        %v661 = vpack.c.bf16 %v598, %v597
        %v662 = vpack.c.bf16 %v600, %v599
        %v663 = vpack.c.bf16 %v602, %v601
        %v664 = vpack.c.bf16 %v604, %v603
        %v665 = vpack.c.bf16 %v606, %v605
        %v666 = vpack.c.bf16 %v608, %v607
        %v667 = vpack.c.bf16 %v610, %v609
        %v668 = vpack.c.bf16 %v612, %v611
        %v669 = vpack.c.bf16 %v614, %v613
        %v670 = vpack.c.bf16 %v616, %v615
        %v671 = vpack.c.bf16 %v618, %v617
        %v672 = vpack.c.bf16 %v620, %v619
        %v673 = vpack.c.bf16 %v622, %v621
        %v674 = vpack.c.bf16 %v624, %v623
        %v675 = vpack.c.bf16 %v626, %v625
        %v676 = vpack.c.bf16 %v628, %v627
        %v677 = vpack.c.bf16 %v630, %v629
        %v678 = vpack.c.bf16 %v632, %v631
        %v679 = vpack.c.bf16 %v634, %v633
        %v680 = vpack.c.bf16 %v636, %v635
        %v681 = vpack.c.bf16 %v638, %v637
        %v682 = vpack.c.bf16 %v640, %v639
        %v683 = vpack.c.bf16 %v642, %v641
        %v684 = vpack.c.bf16 %v644, %v643
        %v685 = vpack.c.bf16 %v646, %v645
        %v686 = vpack.c.bf16 %v648, %v647
        %v687 = vpack.c.bf16 %v650, %v649
        %v688 = vpack.c.bf16 %v652, %v651
        %v689 = vpack.c.bf16 %v654, %v653
        %v690 = vpack.c.bf16 %v656, %v655
        %v691 = vpack.c.bf16 %v658, %v657
        %v692 = vpack.c.bf16 %v660, %v659
        %v693 = vld [vmem:[%s1] sm:$0xff]
        %v694 = vld [vmem:[%s1 + $0x8] sm:$0xff]
        %v695 = vld [vmem:[%s1 + $0x10] sm:$0xff]
        %v696 = vld [vmem:[%s1 + $0x18] sm:$0xff]
        %v697 = vld [vmem:[%s3] sm:$0x3]
        %v699 = vlaneseq
        %v700 = vshrl.u32 %v699, 7
        %v701 = vsub.s32 0, %v700
        %v702 = vrot.slane %v697, %v701
        %v703 = vlaneseq
        %v704 = vshrl.u32 %v703, 7
        %v705 = vsub.s32 1, %v704
        %v706 = vrot.slane %v697, %v705
        %v713 = vunpack.c.l.b16 %v693
        %v714 = vunpack.c.h.b16 %v693
        %v715 = vunpack.c.l.b16 %v694
        %v716 = vunpack.c.h.b16 %v694
        %v717 = vunpack.c.l.b16 %v695
        %v718 = vunpack.c.h.b16 %v695
        %v719 = vunpack.c.l.b16 %v696
        %v720 = vunpack.c.h.b16 %v696
        %v721 = vpack.c.b16 %v715, %v713
        %v722 = vpack.c.b16 %v716, %v714
        %v723 = vpack.c.b16 %v719, %v717
        %v724 = vpack.c.b16 %v720, %v718
        %vm729 = vcmask 261120
        %v731 = vsel %vm729, %v661, 0
        %v734 = vsel %vm729, %v662, 0
        %v737 = vsel %vm729, %v663, 0
        %v740 = vsel %vm729, %v664, 0
        %v743 = vsel %vm729, %v665, 0
        %v746 = vsel %vm729, %v666, 0
        %v749 = vsel %vm729, %v667, 0
        %v752 = vsel %vm729, %v668, 0
        %v755 = vsel %vm729, %v669, 0
        %v758 = vsel %vm729, %v670, 0
        %v761 = vsel %vm729, %v671, 0
        %v764 = vsel %vm729, %v672, 0
        %v767 = vsel %vm729, %v673, 0
        %v770 = vsel %vm729, %v674, 0
        %v773 = vsel %vm729, %v675, 0
        %v776 = vsel %vm729, %v676, 0
        %v779 = vsel %vm729, %v677, 0
        %v782 = vsel %vm729, %v678, 0
        %v785 = vsel %vm729, %v679, 0
        %v788 = vsel %vm729, %v680, 0
        %v791 = vsel %vm729, %v681, 0
        %v794 = vsel %vm729, %v682, 0
        %v797 = vsel %vm729, %v683, 0
        %v800 = vsel %vm729, %v684, 0
        %v803 = vsel %vm729, %v685, 0
        %v806 = vsel %vm729, %v686, 0
        %v809 = vsel %vm729, %v687, 0
        %v812 = vsel %vm729, %v688, 0
        %v815 = vsel %vm729, %v689, 0
        %v818 = vsel %vm729, %v690, 0
        %v821 = vsel %vm729, %v691, 0
        %v824 = vsel %vm729, %v692, 0
        %826 = vmatprep.subr.bf16.mxu0 0
        %827 = vmatpush1.bf16.msra.mxu0 0
        %828 = vmatprep.subr.bf16.mxu0 0
        %829 = vmatpush1.bf16.msra.mxu0 0
        %830 = vmatprep.subr.bf16.mxu0 0
        %831 = vmatpush1.bf16.msra.mxu0 0
        %832 = vmatprep.subr.bf16.mxu0 0
        %833 = vmatpush1.bf16.msra.mxu0 0
        %834 = vmatprep.subr.bf16.mxu0 0
        %835 = vmatpush1.bf16.msra.mxu0 0
        %836 = vmatprep.subr.bf16.mxu0 0
        %837 = vmatpush1.bf16.msra.mxu0 0
        %838 = vmatprep.subr.bf16.mxu0 %v724
        %839 = vmatpush1.bf16.msra.mxu0 %v723
        %840 = vmatprep.subr.bf16.mxu0 %v722
        %841 = vmatpush1.bf16.msra.mxu0 %v721
        %842 = vmatprep.subr.bf16.mxu0 0
        %843 = vmatpush2.bf16.msra.mxu0 0
        %844 = vmatprep.subr.bf16.mxu0 0
        %845 = vmatpush2.bf16.msra.mxu0 0
        %846 = vmatprep.subr.bf16.mxu0 0
        %847 = vmatpush2.bf16.msra.mxu0 0
        %848 = vmatprep.subr.bf16.mxu0 0
        %849 = vmatpush2.bf16.msra.mxu0 0
        %850 = vmatprep.subr.bf16.mxu0 0
        %851 = vmatpush2.bf16.msra.mxu0 0
        %852 = vmatprep.subr.bf16.mxu0 0
        %853 = vmatpush2.bf16.msra.mxu0 0
        %854 = vmatprep.subr.bf16.mxu0 0
        %855 = vmatpush2.bf16.msra.mxu0 0
        %856 = vmatprep.subr.bf16.mxu0 0
        %857 = vmatpush2.bf16.msra.mxu0 0
        %858 = vmatprep.mubr.bf16.mxu0 0
        %859 = vmatmul.mubr.bf16.gmra.mxu0 %v731
        %v860 = vpop.f32.mrf.mxu0
        %v861 = vadd.f32 %v702, %v860
        %v862 = vpop.f32.mrf.mxu0
        %v863 = vadd.f32 %v706, %v862
        %v864 = vpop.f32.mrf.mxu0
        %v865 = vadd.f32 %v702, %v864
        %v866 = vpop.f32.mrf.mxu0
        %v867 = vadd.f32 %v706, %v866
        %868 = vmatprep.mubr.bf16.mxu0 0
        %869 = vmatmul.mubr.bf16.gmra.mxu0 %v734
        %v870 = vpop.f32.mrf.mxu0
        %v871 = vadd.f32 %v702, %v870
        %v872 = vpop.f32.mrf.mxu0
        %v873 = vadd.f32 %v706, %v872
        %v874 = vpop.f32.mrf.mxu0
        %v875 = vadd.f32 %v702, %v874
        %v876 = vpop.f32.mrf.mxu0
        %v877 = vadd.f32 %v706, %v876
        %878 = vmatprep.mubr.bf16.mxu0 0
        %879 = vmatmul.mubr.bf16.gmra.mxu0 %v737
        %v880 = vpop.f32.mrf.mxu0
        %v881 = vadd.f32 %v702, %v880
        %v882 = vpop.f32.mrf.mxu0
        %v883 = vadd.f32 %v706, %v882
        %v884 = vpop.f32.mrf.mxu0
        %v885 = vadd.f32 %v702, %v884
        %v886 = vpop.f32.mrf.mxu0
        %v887 = vadd.f32 %v706, %v886
        %888 = vmatprep.mubr.bf16.mxu0 0
        %889 = vmatmul.mubr.bf16.gmra.mxu0 %v740
        %v890 = vpop.f32.mrf.mxu0
        %v891 = vadd.f32 %v702, %v890
        %v892 = vpop.f32.mrf.mxu0
        %v893 = vadd.f32 %v706, %v892
        %v894 = vpop.f32.mrf.mxu0
        %v895 = vadd.f32 %v702, %v894
        %v896 = vpop.f32.mrf.mxu0
        %v897 = vadd.f32 %v706, %v896
        %898 = vmatprep.mubr.bf16.mxu0 0
        %899 = vmatmul.mubr.bf16.gmra.mxu0 %v743
        %v900 = vpop.f32.mrf.mxu0
        %v901 = vadd.f32 %v702, %v900
        %v902 = vpop.f32.mrf.mxu0
        %v903 = vadd.f32 %v706, %v902
        %v904 = vpop.f32.mrf.mxu0
        %v905 = vadd.f32 %v702, %v904
        %v906 = vpop.f32.mrf.mxu0
        %v907 = vadd.f32 %v706, %v906
        %908 = vmatprep.mubr.bf16.mxu0 0
        %909 = vmatmul.mubr.bf16.gmra.mxu0 %v746
        %v910 = vpop.f32.mrf.mxu0
        %v911 = vadd.f32 %v702, %v910
        %v912 = vpop.f32.mrf.mxu0
        %v913 = vadd.f32 %v706, %v912
        %v914 = vpop.f32.mrf.mxu0
        %v915 = vadd.f32 %v702, %v914
        %v916 = vpop.f32.mrf.mxu0
        %v917 = vadd.f32 %v706, %v916
        %918 = vmatprep.mubr.bf16.mxu0 0
        %919 = vmatmul.mubr.bf16.gmra.mxu0 %v749
        %v920 = vpop.f32.mrf.mxu0
        %v921 = vadd.f32 %v702, %v920
        %v922 = vpop.f32.mrf.mxu0
        %v923 = vadd.f32 %v706, %v922
        %v924 = vpop.f32.mrf.mxu0
        %v925 = vadd.f32 %v702, %v924
        %v926 = vpop.f32.mrf.mxu0
        %v927 = vadd.f32 %v706, %v926
        %928 = vmatprep.mubr.bf16.mxu0 0
        %929 = vmatmul.mubr.bf16.gmra.mxu0 %v752
        %v930 = vpop.f32.mrf.mxu0
        %v931 = vadd.f32 %v702, %v930
        %v932 = vpop.f32.mrf.mxu0
        %v933 = vadd.f32 %v706, %v932
        %v934 = vpop.f32.mrf.mxu0
        %v935 = vadd.f32 %v702, %v934
        %v936 = vpop.f32.mrf.mxu0
        %v937 = vadd.f32 %v706, %v936
        %938 = vmatprep.mubr.bf16.mxu0 0
        %939 = vmatmul.mubr.bf16.gmra.mxu0 %v755
        %v940 = vpop.f32.mrf.mxu0
        %v941 = vadd.f32 %v702, %v940
        %v942 = vpop.f32.mrf.mxu0
        %v943 = vadd.f32 %v706, %v942
        %v944 = vpop.f32.mrf.mxu0
        %v945 = vadd.f32 %v702, %v944
        %v946 = vpop.f32.mrf.mxu0
        %v947 = vadd.f32 %v706, %v946
        %948 = vmatprep.mubr.bf16.mxu0 0
        %949 = vmatmul.mubr.bf16.gmra.mxu0 %v758
        %v950 = vpop.f32.mrf.mxu0
        %v951 = vadd.f32 %v702, %v950
        %v952 = vpop.f32.mrf.mxu0
        %v953 = vadd.f32 %v706, %v952
        %v954 = vpop.f32.mrf.mxu0
        %v955 = vadd.f32 %v702, %v954
        %v956 = vpop.f32.mrf.mxu0
        %v957 = vadd.f32 %v706, %v956
        %958 = vmatprep.mubr.bf16.mxu0 0
        %959 = vmatmul.mubr.bf16.gmra.mxu0 %v761
        %v960 = vpop.f32.mrf.mxu0
        %v961 = vadd.f32 %v702, %v960
        %v962 = vpop.f32.mrf.mxu0
        %v963 = vadd.f32 %v706, %v962
        %v964 = vpop.f32.mrf.mxu0
        %v965 = vadd.f32 %v702, %v964
        %v966 = vpop.f32.mrf.mxu0
        %v967 = vadd.f32 %v706, %v966
        %968 = vmatprep.mubr.bf16.mxu0 0
        %969 = vmatmul.mubr.bf16.gmra.mxu0 %v764
        %v970 = vpop.f32.mrf.mxu0
        %v971 = vadd.f32 %v702, %v970
        %v972 = vpop.f32.mrf.mxu0
        %v973 = vadd.f32 %v706, %v972
        %v974 = vpop.f32.mrf.mxu0
        %v975 = vadd.f32 %v702, %v974
        %v976 = vpop.f32.mrf.mxu0
        %v977 = vadd.f32 %v706, %v976
        %978 = vmatprep.mubr.bf16.mxu0 0
        %979 = vmatmul.mubr.bf16.gmra.mxu0 %v767
        %v980 = vpop.f32.mrf.mxu0
        %v981 = vadd.f32 %v702, %v980
        %v982 = vpop.f32.mrf.mxu0
        %v983 = vadd.f32 %v706, %v982
        %v984 = vpop.f32.mrf.mxu0
        %v985 = vadd.f32 %v702, %v984
        %v986 = vpop.f32.mrf.mxu0
        %v987 = vadd.f32 %v706, %v986
        %988 = vmatprep.mubr.bf16.mxu0 0
        %989 = vmatmul.mubr.bf16.gmra.mxu0 %v770
        %v990 = vpop.f32.mrf.mxu0
        %v991 = vadd.f32 %v702, %v990
        %v992 = vpop.f32.mrf.mxu0
        %v993 = vadd.f32 %v706, %v992
        %v994 = vpop.f32.mrf.mxu0
        %v995 = vadd.f32 %v702, %v994
        %v996 = vpop.f32.mrf.mxu0
        %v997 = vadd.f32 %v706, %v996
        %998 = vmatprep.mubr.bf16.mxu0 0
        %999 = vmatmul.mubr.bf16.gmra.mxu0 %v773
        %v1000 = vpop.f32.mrf.mxu0
        %v1001 = vadd.f32 %v702, %v1000
        %v1002 = vpop.f32.mrf.mxu0
        %v1003 = vadd.f32 %v706, %v1002
        %v1004 = vpop.f32.mrf.mxu0
        %v1005 = vadd.f32 %v702, %v1004
        %v1006 = vpop.f32.mrf.mxu0
        %v1007 = vadd.f32 %v706, %v1006
        %1008 = vmatprep.mubr.bf16.mxu0 0
        %1009 = vmatmul.mubr.bf16.gmra.mxu0 %v776
        %v1010 = vpop.f32.mrf.mxu0
        %v1011 = vadd.f32 %v702, %v1010
        %v1012 = vpop.f32.mrf.mxu0
        %v1013 = vadd.f32 %v706, %v1012
        %v1014 = vpop.f32.mrf.mxu0
        %v1015 = vadd.f32 %v702, %v1014
        %v1016 = vpop.f32.mrf.mxu0
        %v1017 = vadd.f32 %v706, %v1016
        %1018 = vmatprep.mubr.bf16.mxu0 0
        %1019 = vmatmul.mubr.bf16.gmra.mxu0 %v779
        %v1020 = vpop.f32.mrf.mxu0
        %v1021 = vadd.f32 %v702, %v1020
        %v1022 = vpop.f32.mrf.mxu0
        %v1023 = vadd.f32 %v706, %v1022
        %v1024 = vpop.f32.mrf.mxu0
        %v1025 = vadd.f32 %v702, %v1024
        %v1026 = vpop.f32.mrf.mxu0
        %v1027 = vadd.f32 %v706, %v1026
        %1028 = vmatprep.mubr.bf16.mxu0 0
        %1029 = vmatmul.mubr.bf16.gmra.mxu0 %v782
        %v1030 = vpop.f32.mrf.mxu0
        %v1031 = vadd.f32 %v702, %v1030
        %v1032 = vpop.f32.mrf.mxu0
        %v1033 = vadd.f32 %v706, %v1032
        %v1034 = vpop.f32.mrf.mxu0
        %v1035 = vadd.f32 %v702, %v1034
        %v1036 = vpop.f32.mrf.mxu0
        %v1037 = vadd.f32 %v706, %v1036
        %1038 = vmatprep.mubr.bf16.mxu0 0
        %1039 = vmatmul.mubr.bf16.gmra.mxu0 %v785
        %v1040 = vpop.f32.mrf.mxu0
        %v1041 = vadd.f32 %v702, %v1040
        %v1042 = vpop.f32.mrf.mxu0
        %v1043 = vadd.f32 %v706, %v1042
        %v1044 = vpop.f32.mrf.mxu0
        %v1045 = vadd.f32 %v702, %v1044
        %v1046 = vpop.f32.mrf.mxu0
        %v1047 = vadd.f32 %v706, %v1046
        %1048 = vmatprep.mubr.bf16.mxu0 0
        %1049 = vmatmul.mubr.bf16.gmra.mxu0 %v788
        %v1050 = vpop.f32.mrf.mxu0
        %v1051 = vadd.f32 %v702, %v1050
        %v1052 = vpop.f32.mrf.mxu0
        %v1053 = vadd.f32 %v706, %v1052
        %v1054 = vpop.f32.mrf.mxu0
        %v1055 = vadd.f32 %v702, %v1054
        %v1056 = vpop.f32.mrf.mxu0
        %v1057 = vadd.f32 %v706, %v1056
        %1058 = vmatprep.mubr.bf16.mxu0 0
        %1059 = vmatmul.mubr.bf16.gmra.mxu0 %v791
        %v1060 = vpop.f32.mrf.mxu0
        %v1061 = vadd.f32 %v702, %v1060
        %v1062 = vpop.f32.mrf.mxu0
        %v1063 = vadd.f32 %v706, %v1062
        %v1064 = vpop.f32.mrf.mxu0
        %v1065 = vadd.f32 %v702, %v1064
        %v1066 = vpop.f32.mrf.mxu0
        %v1067 = vadd.f32 %v706, %v1066
        %1068 = vmatprep.mubr.bf16.mxu0 0
        %1069 = vmatmul.mubr.bf16.gmra.mxu0 %v794
        %v1070 = vpop.f32.mrf.mxu0
        %v1071 = vadd.f32 %v702, %v1070
        %v1072 = vpop.f32.mrf.mxu0
        %v1073 = vadd.f32 %v706, %v1072
        %v1074 = vpop.f32.mrf.mxu0
        %v1075 = vadd.f32 %v702, %v1074
        %v1076 = vpop.f32.mrf.mxu0
        %v1077 = vadd.f32 %v706, %v1076
        %1078 = vmatprep.mubr.bf16.mxu0 0
        %1079 = vmatmul.mubr.bf16.gmra.mxu0 %v797
        %v1080 = vpop.f32.mrf.mxu0
        %v1081 = vadd.f32 %v702, %v1080
        %v1082 = vpop.f32.mrf.mxu0
        %v1083 = vadd.f32 %v706, %v1082
        %v1084 = vpop.f32.mrf.mxu0
        %v1085 = vadd.f32 %v702, %v1084
        %v1086 = vpop.f32.mrf.mxu0
        %v1087 = vadd.f32 %v706, %v1086
        %1088 = vmatprep.mubr.bf16.mxu0 0
        %1089 = vmatmul.mubr.bf16.gmra.mxu0 %v800
        %v1090 = vpop.f32.mrf.mxu0
        %v1091 = vadd.f32 %v702, %v1090
        %v1092 = vpop.f32.mrf.mxu0
        %v1093 = vadd.f32 %v706, %v1092
        %v1094 = vpop.f32.mrf.mxu0
        %v1095 = vadd.f32 %v702, %v1094
        %v1096 = vpop.f32.mrf.mxu0
        %v1097 = vadd.f32 %v706, %v1096
        %1098 = vmatprep.mubr.bf16.mxu0 0
        %1099 = vmatmul.mubr.bf16.gmra.mxu0 %v803
        %v1100 = vpop.f32.mrf.mxu0
        %v1101 = vadd.f32 %v702, %v1100
        %v1102 = vpop.f32.mrf.mxu0
        %v1103 = vadd.f32 %v706, %v1102
        %v1104 = vpop.f32.mrf.mxu0
        %v1105 = vadd.f32 %v702, %v1104
        %v1106 = vpop.f32.mrf.mxu0
        %v1107 = vadd.f32 %v706, %v1106
        %1108 = vmatprep.mubr.bf16.mxu0 0
        %1109 = vmatmul.mubr.bf16.gmra.mxu0 %v806
        %v1110 = vpop.f32.mrf.mxu0
        %v1111 = vadd.f32 %v702, %v1110
        %v1112 = vpop.f32.mrf.mxu0
        %v1113 = vadd.f32 %v706, %v1112
        %v1114 = vpop.f32.mrf.mxu0
        %v1115 = vadd.f32 %v702, %v1114
        %v1116 = vpop.f32.mrf.mxu0
        %v1117 = vadd.f32 %v706, %v1116
        %1118 = vmatprep.mubr.bf16.mxu0 0
        %1119 = vmatmul.mubr.bf16.gmra.mxu0 %v809
        %v1120 = vpop.f32.mrf.mxu0
        %v1121 = vadd.f32 %v702, %v1120
        %v1122 = vpop.f32.mrf.mxu0
        %v1123 = vadd.f32 %v706, %v1122
        %v1124 = vpop.f32.mrf.mxu0
        %v1125 = vadd.f32 %v702, %v1124
        %v1126 = vpop.f32.mrf.mxu0
        %v1127 = vadd.f32 %v706, %v1126
        %1128 = vmatprep.mubr.bf16.mxu0 0
        %1129 = vmatmul.mubr.bf16.gmra.mxu0 %v812
        %v1130 = vpop.f32.mrf.mxu0
        %v1131 = vadd.f32 %v702, %v1130
        %v1132 = vpop.f32.mrf.mxu0
        %v1133 = vadd.f32 %v706, %v1132
        %v1134 = vpop.f32.mrf.mxu0
        %v1135 = vadd.f32 %v702, %v1134
        %v1136 = vpop.f32.mrf.mxu0
        %v1137 = vadd.f32 %v706, %v1136
        %1138 = vmatprep.mubr.bf16.mxu0 0
        %1139 = vmatmul.mubr.bf16.gmra.mxu0 %v815
        %v1140 = vpop.f32.mrf.mxu0
        %v1141 = vadd.f32 %v702, %v1140
        %v1142 = vpop.f32.mrf.mxu0
        %v1143 = vadd.f32 %v706, %v1142
        %v1144 = vpop.f32.mrf.mxu0
        %v1145 = vadd.f32 %v702, %v1144
        %v1146 = vpop.f32.mrf.mxu0
        %v1147 = vadd.f32 %v706, %v1146
        %1148 = vmatprep.mubr.bf16.mxu0 0
        %1149 = vmatmul.mubr.bf16.gmra.mxu0 %v818
        %v1150 = vpop.f32.mrf.mxu0
        %v1151 = vadd.f32 %v702, %v1150
        %v1152 = vpop.f32.mrf.mxu0
        %v1153 = vadd.f32 %v706, %v1152
        %v1154 = vpop.f32.mrf.mxu0
        %v1155 = vadd.f32 %v702, %v1154
        %v1156 = vpop.f32.mrf.mxu0
        %v1157 = vadd.f32 %v706, %v1156
        %1158 = vmatprep.mubr.bf16.mxu0 0
        %1159 = vmatmul.mubr.bf16.gmra.mxu0 %v821
        %v1160 = vpop.f32.mrf.mxu0
        %v1161 = vadd.f32 %v702, %v1160
        %v1162 = vpop.f32.mrf.mxu0
        %v1163 = vadd.f32 %v706, %v1162
        %v1164 = vpop.f32.mrf.mxu0
        %v1165 = vadd.f32 %v702, %v1164
        %v1166 = vpop.f32.mrf.mxu0
        %v1167 = vadd.f32 %v706, %v1166
        %1168 = vmatprep.mubr.bf16.mxu0 0
        %1169 = vmatmul.mubr.bf16.gmra.mxu0 %v824
        %v1170 = vpop.f32.mrf.mxu0
        %v1171 = vadd.f32 %v702, %v1170
        %v1172 = vpop.f32.mrf.mxu0
        %v1173 = vadd.f32 %v706, %v1172
        %v1174 = vpop.f32.mrf.mxu0
        %v1175 = vadd.f32 %v702, %v1174
        %v1176 = vpop.f32.mrf.mxu0
        %v1177 = vadd.f32 %v706, %v1176
        %1178 = vdwg.mxu0
        %v1179 = vld [vmem:[%s2] sm:$0xff]
        %v1180 = vld [vmem:[%s2 + $0x8] sm:$0xff]
        %v1181 = vld [vmem:[%s2 + $0x10] sm:$0xff]
        %v1182 = vld [vmem:[%s2 + $0x18] sm:$0xff]
        %v1183 = vld [vmem:[%s2 + $0x20] sm:$0xff]
        %v1184 = vld [vmem:[%s2 + $0x28] sm:$0xff]
        %v1185 = vld [vmem:[%s2 + $0x30] sm:$0xff]
        %v1186 = vld [vmem:[%s2 + $0x38] sm:$0xff]
        %v1195 = vunpack.c.l.b16 %v1179
        %v1196 = vunpack.c.h.b16 %v1179
        %v1197 = vunpack.c.l.b16 %v1180
        %v1198 = vunpack.c.h.b16 %v1180
        %v1199 = vunpack.c.l.b16 %v1181
        %v1200 = vunpack.c.h.b16 %v1181
        %v1201 = vunpack.c.l.b16 %v1182
        %v1202 = vunpack.c.h.b16 %v1182
        %v1203 = vunpack.c.l.b16 %v1183
        %v1204 = vunpack.c.h.b16 %v1183
        %v1205 = vunpack.c.l.b16 %v1184
        %v1206 = vunpack.c.h.b16 %v1184
        %v1207 = vunpack.c.l.b16 %v1185
        %v1208 = vunpack.c.h.b16 %v1185
        %v1209 = vunpack.c.l.b16 %v1186
        %v1210 = vunpack.c.h.b16 %v1186
        %v1211 = vpack.c.b16 %v1197, %v1195
        %v1212 = vpack.c.b16 %v1198, %v1196
        %v1213 = vpack.c.b16 %v1201, %v1199
        %v1214 = vpack.c.b16 %v1202, %v1200
        %v1215 = vpack.c.b16 %v1205, %v1203
        %v1216 = vpack.c.b16 %v1206, %v1204
        %v1217 = vpack.c.b16 %v1209, %v1207
        %v1218 = vpack.c.b16 %v1210, %v1208
        %vm1227 = vcmask 523264
        %v1229 = vsel %vm1227, 0, 0
        %1231 = vmatprep.subr.bf16.mxu0 0
        %1232 = vmatpush1.bf16.msra.mxu0 0
        %1233 = vmatprep.subr.bf16.mxu0 0
        %1234 = vmatpush1.bf16.msra.mxu0 0
        %1235 = vmatprep.subr.bf16.mxu0 0
        %1236 = vmatpush1.bf16.msra.mxu0 0
        %1237 = vmatprep.subr.bf16.mxu0 0
        %1238 = vmatpush1.bf16.msra.mxu0 0
        %1239 = vmatprep.subr.bf16.mxu0 %v1218
        %1240 = vmatpush1.bf16.msra.mxu0 %v1217
        %1241 = vmatprep.subr.bf16.mxu0 %v1216
        %1242 = vmatpush1.bf16.msra.mxu0 %v1215
        %1243 = vmatprep.subr.bf16.mxu0 %v1214
        %1244 = vmatpush1.bf16.msra.mxu0 %v1213
        %1245 = vmatprep.subr.bf16.mxu0 %v1212
        %1246 = vmatpush1.bf16.msra.mxu0 %v1211
        %1247 = vmatprep.subr.bf16.mxu0 0
        %1248 = vmatpush2.bf16.msra.mxu0 0
        %1249 = vmatprep.subr.bf16.mxu0 0
        %1250 = vmatpush2.bf16.msra.mxu0 0
        %1251 = vmatprep.subr.bf16.mxu0 0
        %1252 = vmatpush2.bf16.msra.mxu0 0
        %1253 = vmatprep.subr.bf16.mxu0 0
        %1254 = vmatpush2.bf16.msra.mxu0 0
        %1255 = vmatprep.subr.bf16.mxu0 0
        %1256 = vmatpush2.bf16.msra.mxu0 0
        %1257 = vmatprep.subr.bf16.mxu0 0
        %1258 = vmatpush2.bf16.msra.mxu0 0
        %1259 = vmatprep.subr.bf16.mxu0 0
        %1260 = vmatpush2.bf16.msra.mxu0 0
        %1261 = vmatprep.subr.bf16.mxu0 0
        %1262 = vmatpush2.bf16.msra.mxu0 0
        %1263 = vmatprep.mubr.bf16.mxu0 0
        %1264 = vmatmul.mubr.bf16.gmra.mxu0 %v1229
        %v1265 = vpop.f32.mrf.mxu0
        %v1266 = vadd.f32 0.0, %v1265
        %v1267 = vpop.f32.mrf.mxu0
        %v1268 = vadd.f32 0.0, %v1267
        %v1269 = vpop.f32.mrf.mxu0
        %v1270 = vadd.f32 0.0, %v1269
        %v1271 = vpop.f32.mrf.mxu0
        %v1272 = vadd.f32 0.0, %v1271
        %1273 = vmatprep.mubr.bf16.mxu0 0
        %1274 = vmatmul.mubr.bf16.gmra.mxu0 %v1229
        %v1275 = vpop.f32.mrf.mxu0
        %v1276 = vadd.f32 0.0, %v1275
        %v1277 = vpop.f32.mrf.mxu0
        %v1278 = vadd.f32 0.0, %v1277
        %v1279 = vpop.f32.mrf.mxu0
        %v1280 = vadd.f32 0.0, %v1279
        %v1281 = vpop.f32.mrf.mxu0
        %v1282 = vadd.f32 0.0, %v1281
        %1283 = vmatprep.mubr.bf16.mxu0 0
        %1284 = vmatmul.mubr.bf16.gmra.mxu0 %v1229
        %v1285 = vpop.f32.mrf.mxu0
        %v1286 = vadd.f32 0.0, %v1285
        %v1287 = vpop.f32.mrf.mxu0
        %v1288 = vadd.f32 0.0, %v1287
        %v1289 = vpop.f32.mrf.mxu0
        %v1290 = vadd.f32 0.0, %v1289
        %v1291 = vpop.f32.mrf.mxu0
        %v1292 = vadd.f32 0.0, %v1291
        %1293 = vmatprep.mubr.bf16.mxu0 0
        %1294 = vmatmul.mubr.bf16.gmra.mxu0 %v1229
        %v1295 = vpop.f32.mrf.mxu0
        %v1296 = vadd.f32 0.0, %v1295
        %v1297 = vpop.f32.mrf.mxu0
        %v1298 = vadd.f32 0.0, %v1297
        %v1299 = vpop.f32.mrf.mxu0
        %v1300 = vadd.f32 0.0, %v1299
        %v1301 = vpop.f32.mrf.mxu0
        %v1302 = vadd.f32 0.0, %v1301
        %1303 = vmatprep.mubr.bf16.mxu0 0
        %1304 = vmatmul.mubr.bf16.gmra.mxu0 %v1229
        %v1305 = vpop.f32.mrf.mxu0
        %v1306 = vadd.f32 0.0, %v1305
        %v1307 = vpop.f32.mrf.mxu0
        %v1308 = vadd.f32 0.0, %v1307
        %v1309 = vpop.f32.mrf.mxu0
        %v1310 = vadd.f32 0.0, %v1309
        %v1311 = vpop.f32.mrf.mxu0
        %v1312 = vadd.f32 0.0, %v1311
        %1313 = vmatprep.mubr.bf16.mxu0 0
        %1314 = vmatmul.mubr.bf16.gmra.mxu0 %v1229
        %v1315 = vpop.f32.mrf.mxu0
        %v1316 = vadd.f32 0.0, %v1315
        %v1317 = vpop.f32.mrf.mxu0
        %v1318 = vadd.f32 0.0, %v1317
        %v1319 = vpop.f32.mrf.mxu0
        %v1320 = vadd.f32 0.0, %v1319
        %v1321 = vpop.f32.mrf.mxu0
        %v1322 = vadd.f32 0.0, %v1321
        %1323 = vmatprep.mubr.bf16.mxu0 0
        %1324 = vmatmul.mubr.bf16.gmra.mxu0 %v1229
        %v1325 = vpop.f32.mrf.mxu0
        %v1326 = vadd.f32 0.0, %v1325
        %v1327 = vpop.f32.mrf.mxu0
        %v1328 = vadd.f32 0.0, %v1327
        %v1329 = vpop.f32.mrf.mxu0
        %v1330 = vadd.f32 0.0, %v1329
        %v1331 = vpop.f32.mrf.mxu0
        %v1332 = vadd.f32 0.0, %v1331
        %1333 = vmatprep.mubr.bf16.mxu0 0
        %1334 = vmatmul.mubr.bf16.gmra.mxu0 %v1229
        %v1335 = vpop.f32.mrf.mxu0
        %v1336 = vadd.f32 0.0, %v1335
        %v1337 = vpop.f32.mrf.mxu0
        %v1338 = vadd.f32 0.0, %v1337
        %v1339 = vpop.f32.mrf.mxu0
        %v1340 = vadd.f32 0.0, %v1339
        %v1341 = vpop.f32.mrf.mxu0
        %v1342 = vadd.f32 0.0, %v1341
        %1343 = vdwg.mxu0
        %v1344 = vadd.f32 %v861, %v1266
        %v1345 = vadd.f32 %v863, %v1268
        %v1346 = vadd.f32 %v865, %v1270
        %v1347 = vadd.f32 %v867, %v1272
        %v1348 = vadd.f32 %v871, %v1276
        %v1349 = vadd.f32 %v873, %v1278
        %v1350 = vadd.f32 %v875, %v1280
        %v1351 = vadd.f32 %v877, %v1282
        %v1352 = vadd.f32 %v881, %v1286
        %v1353 = vadd.f32 %v883, %v1288
        %v1354 = vadd.f32 %v885, %v1290
        %v1355 = vadd.f32 %v887, %v1292
        %v1356 = vadd.f32 %v891, %v1296
        %v1357 = vadd.f32 %v893, %v1298
        %v1358 = vadd.f32 %v895, %v1300
        %v1359 = vadd.f32 %v897, %v1302
        %v1360 = vadd.f32 %v901, %v1306
        %v1361 = vadd.f32 %v903, %v1308
        %v1362 = vadd.f32 %v905, %v1310
        %v1363 = vadd.f32 %v907, %v1312
        %v1364 = vadd.f32 %v911, %v1316
        %v1365 = vadd.f32 %v913, %v1318
        %v1366 = vadd.f32 %v915, %v1320
        %v1367 = vadd.f32 %v917, %v1322
        %v1368 = vadd.f32 %v921, %v1326
        %v1369 = vadd.f32 %v923, %v1328
        %v1370 = vadd.f32 %v925, %v1330
        %v1371 = vadd.f32 %v927, %v1332
        %v1372 = vadd.f32 %v931, %v1336
        %v1373 = vadd.f32 %v933, %v1338
        %v1374 = vadd.f32 %v935, %v1340
        %v1375 = vadd.f32 %v937, %v1342
        %v1376 = vsub.f32 0.0, %v1344
        %v1377 = vsub.f32 0.0, %v1345
        %v1378 = vsub.f32 0.0, %v1346
        %v1379 = vsub.f32 0.0, %v1347
        %v1380 = vsub.f32 0.0, %v1348
        %v1381 = vsub.f32 0.0, %v1349
        %v1382 = vsub.f32 0.0, %v1350
        %v1383 = vsub.f32 0.0, %v1351
        %v1384 = vsub.f32 0.0, %v1352
        %v1385 = vsub.f32 0.0, %v1353
        %v1386 = vsub.f32 0.0, %v1354
        %v1387 = vsub.f32 0.0, %v1355
        %v1388 = vsub.f32 0.0, %v1356
        %v1389 = vsub.f32 0.0, %v1357
        %v1390 = vsub.f32 0.0, %v1358
        %v1391 = vsub.f32 0.0, %v1359
        %v1392 = vsub.f32 0.0, %v1360
        %v1393 = vsub.f32 0.0, %v1361
        %v1394 = vsub.f32 0.0, %v1362
        %v1395 = vsub.f32 0.0, %v1363
        %v1396 = vsub.f32 0.0, %v1364
        %v1397 = vsub.f32 0.0, %v1365
        %v1398 = vsub.f32 0.0, %v1366
        %v1399 = vsub.f32 0.0, %v1367
        %v1400 = vsub.f32 0.0, %v1368
        %v1401 = vsub.f32 0.0, %v1369
        %v1402 = vsub.f32 0.0, %v1370
        %v1403 = vsub.f32 0.0, %v1371
        %v1404 = vsub.f32 0.0, %v1372
        %v1405 = vsub.f32 0.0, %v1373
        %v1406 = vsub.f32 0.0, %v1374
        %v1407 = vsub.f32 0.0, %v1375
        %v1408 = vmul.f32 %v1376, 1.442695
        %v1409 = vpow.pop %v1408
        %v1410 = vmul.f32 %v1377, 1.442695
        %v1411 = vpow.pop %v1410
        %v1412 = vmul.f32 %v1378, 1.442695
        %v1413 = vpow.pop %v1412
        %v1414 = vmul.f32 %v1379, 1.442695
        %v1415 = vpow.pop %v1414
        %v1416 = vmul.f32 %v1380, 1.442695
        %v1417 = vpow.pop %v1416
        %v1418 = vmul.f32 %v1381, 1.442695
        %v1419 = vpow.pop %v1418
        %v1420 = vmul.f32 %v1382, 1.442695
        %v1421 = vpow.pop %v1420
        %v1422 = vmul.f32 %v1383, 1.442695
        %v1423 = vpow.pop %v1422
        %v1424 = vmul.f32 %v1384, 1.442695
        %v1425 = vpow.pop %v1424
        %v1426 = vmul.f32 %v1385, 1.442695
        %v1427 = vpow.pop %v1426
        %v1428 = vmul.f32 %v1386, 1.442695
        %v1429 = vpow.pop %v1428
        %v1430 = vmul.f32 %v1387, 1.442695
        %v1431 = vpow.pop %v1430
        %v1432 = vmul.f32 %v1388, 1.442695
        %v1433 = vpow.pop %v1432
        %v1434 = vmul.f32 %v1389, 1.442695
        %v1435 = vpow.pop %v1434
        %v1436 = vmul.f32 %v1390, 1.442695
        %v1437 = vpow.pop %v1436
        %v1438 = vmul.f32 %v1391, 1.442695
        %v1439 = vpow.pop %v1438
        %v1440 = vmul.f32 %v1392, 1.442695
        %v1441 = vpow.pop %v1440
        %v1442 = vmul.f32 %v1393, 1.442695
        %v1443 = vpow.pop %v1442
        %v1444 = vmul.f32 %v1394, 1.442695
        %v1445 = vpow.pop %v1444
        %v1446 = vmul.f32 %v1395, 1.442695
        %v1447 = vpow.pop %v1446
        %v1448 = vmul.f32 %v1396, 1.442695
        %v1449 = vpow.pop %v1448
        %v1450 = vmul.f32 %v1397, 1.442695
        %v1451 = vpow.pop %v1450
        %v1452 = vmul.f32 %v1398, 1.442695
        %v1453 = vpow.pop %v1452
        %v1454 = vmul.f32 %v1399, 1.442695
        %v1455 = vpow.pop %v1454
        %v1456 = vmul.f32 %v1400, 1.442695
        %v1457 = vpow.pop %v1456
        %v1458 = vmul.f32 %v1401, 1.442695
        %v1459 = vpow.pop %v1458
        %v1460 = vmul.f32 %v1402, 1.442695
        %v1461 = vpow.pop %v1460
        %v1462 = vmul.f32 %v1403, 1.442695
        %v1463 = vpow.pop %v1462
        %v1464 = vmul.f32 %v1404, 1.442695
        %v1465 = vpow.pop %v1464
        %v1466 = vmul.f32 %v1405, 1.442695
        %v1467 = vpow.pop %v1466
        %v1468 = vmul.f32 %v1406, 1.442695
        %v1469 = vpow.pop %v1468
        %v1470 = vmul.f32 %v1407, 1.442695
        %v1471 = vpow.pop %v1470
        %v1472 = vadd.f32 %v1409, 1.0
        %v1473 = vadd.f32 %v1411, 1.0
        %v1474 = vadd.f32 %v1413, 1.0
        %v1475 = vadd.f32 %v1415, 1.0
        %v1476 = vadd.f32 %v1417, 1.0
        %v1477 = vadd.f32 %v1419, 1.0
        %v1478 = vadd.f32 %v1421, 1.0
        %v1479 = vadd.f32 %v1423, 1.0
        %v1480 = vadd.f32 %v1425, 1.0
        %v1481 = vadd.f32 %v1427, 1.0
        %v1482 = vadd.f32 %v1429, 1.0
        %v1483 = vadd.f32 %v1431, 1.0
        %v1484 = vadd.f32 %v1433, 1.0
        %v1485 = vadd.f32 %v1435, 1.0
        %v1486 = vadd.f32 %v1437, 1.0
        %v1487 = vadd.f32 %v1439, 1.0
        %v1488 = vadd.f32 %v1441, 1.0
        %v1489 = vadd.f32 %v1443, 1.0
        %v1490 = vadd.f32 %v1445, 1.0
        %v1491 = vadd.f32 %v1447, 1.0
        %v1492 = vadd.f32 %v1449, 1.0
        %v1493 = vadd.f32 %v1451, 1.0
        %v1494 = vadd.f32 %v1453, 1.0
        %v1495 = vadd.f32 %v1455, 1.0
        %v1496 = vadd.f32 %v1457, 1.0
        %v1497 = vadd.f32 %v1459, 1.0
        %v1498 = vadd.f32 %v1461, 1.0
        %v1499 = vadd.f32 %v1463, 1.0
        %v1500 = vadd.f32 %v1465, 1.0
        %v1501 = vadd.f32 %v1467, 1.0
        %v1502 = vadd.f32 %v1469, 1.0
        %v1503 = vadd.f32 %v1471, 1.0
        %v1504 = vrcp.pop %v1472
        %v1505 = vrcp.pop %v1473
        %v1506 = vrcp.pop %v1474
        %v1507 = vrcp.pop %v1475
        %v1508 = vrcp.pop %v1476
        %v1509 = vrcp.pop %v1477
        %v1510 = vrcp.pop %v1478
        %v1511 = vrcp.pop %v1479
        %v1512 = vrcp.pop %v1480
        %v1513 = vrcp.pop %v1481
        %v1514 = vrcp.pop %v1482
        %v1515 = vrcp.pop %v1483
        %v1516 = vrcp.pop %v1484
        %v1517 = vrcp.pop %v1485
        %v1518 = vrcp.pop %v1486
        %v1519 = vrcp.pop %v1487
        %v1520 = vrcp.pop %v1488
        %v1521 = vrcp.pop %v1489
        %v1522 = vrcp.pop %v1490
        %v1523 = vrcp.pop %v1491
        %v1524 = vrcp.pop %v1492
        %v1525 = vrcp.pop %v1493
        %v1526 = vrcp.pop %v1494
        %v1527 = vrcp.pop %v1495
        %v1528 = vrcp.pop %v1496
        %v1529 = vrcp.pop %v1497
        %v1530 = vrcp.pop %v1498
        %v1531 = vrcp.pop %v1499
        %v1532 = vrcp.pop %v1500
        %v1533 = vrcp.pop %v1501
        %v1534 = vrcp.pop %v1502
        %v1535 = vrcp.pop %v1503
        %v1536 = vmul.f32 %v1505, 2.0
        %v1537 = vmul.f32 %v1507, 2.0
        %v1538 = vmul.f32 %v1509, 2.0
        %v1539 = vmul.f32 %v1511, 2.0
        %v1540 = vmul.f32 %v1513, 2.0
        %v1541 = vmul.f32 %v1515, 2.0
        %v1542 = vmul.f32 %v1517, 2.0
        %v1543 = vmul.f32 %v1519, 2.0
        %v1544 = vmul.f32 %v1521, 2.0
        %v1545 = vmul.f32 %v1523, 2.0
        %v1546 = vmul.f32 %v1525, 2.0
        %v1547 = vmul.f32 %v1527, 2.0
        %v1548 = vmul.f32 %v1529, 2.0
        %v1549 = vmul.f32 %v1531, 2.0
        %v1550 = vmul.f32 %v1533, 2.0
        %v1551 = vmul.f32 %v1535, 2.0
        %v1552 = vsub.f32 %v1536, 1.0
        %v1553 = vsub.f32 %v1537, 1.0
        %v1554 = vsub.f32 %v1538, 1.0
        %v1555 = vsub.f32 %v1539, 1.0
        %v1556 = vsub.f32 %v1540, 1.0
        %v1557 = vsub.f32 %v1541, 1.0
        %v1558 = vsub.f32 %v1542, 1.0
        %v1559 = vsub.f32 %v1543, 1.0
        %v1560 = vsub.f32 %v1544, 1.0
        %v1561 = vsub.f32 %v1545, 1.0
        %v1562 = vsub.f32 %v1546, 1.0
        %v1563 = vsub.f32 %v1547, 1.0
        %v1564 = vsub.f32 %v1548, 1.0
        %v1565 = vsub.f32 %v1549, 1.0
        %v1566 = vsub.f32 %v1550, 1.0
        %v1567 = vsub.f32 %v1551, 1.0
        %v1568 = vmul.f32 %v1504, 0.0
        %v1569 = vmul.f32 %v1506, 0.0
        %v1570 = vmul.f32 %v1508, 0.0
        %v1571 = vmul.f32 %v1510, 0.0
        %v1572 = vmul.f32 %v1512, 0.0
        %v1573 = vmul.f32 %v1514, 0.0
        %v1574 = vmul.f32 %v1516, 0.0
        %v1575 = vmul.f32 %v1518, 0.0
        %v1576 = vmul.f32 %v1520, 0.0
        %v1577 = vmul.f32 %v1522, 0.0
        %v1578 = vmul.f32 %v1524, 0.0
        %v1579 = vmul.f32 %v1526, 0.0
        %v1580 = vmul.f32 %v1528, 0.0
        %v1581 = vmul.f32 %v1530, 0.0
        %v1582 = vmul.f32 %v1532, 0.0
        %v1583 = vmul.f32 %v1534, 0.0
        %v1584 = vmul.f32 %v1504, %v1552
        %v1585 = vmul.f32 %v1506, %v1553
        %v1586 = vmul.f32 %v1508, %v1554
        %v1587 = vmul.f32 %v1510, %v1555
        %v1588 = vmul.f32 %v1512, %v1556
        %v1589 = vmul.f32 %v1514, %v1557
        %v1590 = vmul.f32 %v1516, %v1558
        %v1591 = vmul.f32 %v1518, %v1559
        %v1592 = vmul.f32 %v1520, %v1560
        %v1593 = vmul.f32 %v1522, %v1561
        %v1594 = vmul.f32 %v1524, %v1562
        %v1595 = vmul.f32 %v1526, %v1563
        %v1596 = vmul.f32 %v1528, %v1564
        %v1597 = vmul.f32 %v1530, %v1565
        %v1598 = vmul.f32 %v1532, %v1566
        %v1599 = vmul.f32 %v1534, %v1567
        %1616 = vrot.lane.b32.xlu0 %v1584, 64
        %v1617 = vpop.permute.xlu0 %1616
        %1618 = vrot.lane.b32.xlu0 %v1585, 64
        %v1619 = vpop.permute.xlu0 %1618
        %1620 = vrot.lane.b32.xlu0 %v1586, 64
        %v1621 = vpop.permute.xlu0 %1620
        %1622 = vrot.lane.b32.xlu0 %v1587, 64
        %v1623 = vpop.permute.xlu0 %1622
        %1624 = vrot.lane.b32.xlu0 %v1588, 64
        %v1625 = vpop.permute.xlu0 %1624
        %1626 = vrot.lane.b32.xlu0 %v1589, 64
        %v1627 = vpop.permute.xlu0 %1626
        %1628 = vrot.lane.b32.xlu0 %v1590, 64
        %v1629 = vpop.permute.xlu0 %1628
        %1630 = vrot.lane.b32.xlu0 %v1591, 64
        %v1631 = vpop.permute.xlu0 %1630
        %1632 = vrot.lane.b32.xlu0 %v1592, 64
        %v1633 = vpop.permute.xlu0 %1632
        %1634 = vrot.lane.b32.xlu0 %v1593, 64
        %v1635 = vpop.permute.xlu0 %1634
        %1636 = vrot.lane.b32.xlu0 %v1594, 64
        %v1637 = vpop.permute.xlu0 %1636
        %1638 = vrot.lane.b32.xlu0 %v1595, 64
        %v1639 = vpop.permute.xlu0 %1638
        %1640 = vrot.lane.b32.xlu0 %v1596, 64
        %v1641 = vpop.permute.xlu0 %1640
        %1642 = vrot.lane.b32.xlu0 %v1597, 64
        %v1643 = vpop.permute.xlu0 %1642
        %1644 = vrot.lane.b32.xlu0 %v1598, 64
        %v1645 = vpop.permute.xlu0 %1644
        %1646 = vrot.lane.b32.xlu0 %v1599, 64
        %v1647 = vpop.permute.xlu0 %1646
        %v1664 = vadd.f32 %v1568, %v1617
        %v1665 = vadd.f32 %v1569, %v1619
        %v1666 = vadd.f32 %v1570, %v1621
        %v1667 = vadd.f32 %v1571, %v1623
        %v1668 = vadd.f32 %v1572, %v1625
        %v1669 = vadd.f32 %v1573, %v1627
        %v1670 = vadd.f32 %v1574, %v1629
        %v1671 = vadd.f32 %v1575, %v1631
        %v1672 = vadd.f32 %v1576, %v1633
        %v1673 = vadd.f32 %v1577, %v1635
        %v1674 = vadd.f32 %v1578, %v1637
        %v1675 = vadd.f32 %v1579, %v1639
        %v1676 = vadd.f32 %v1580, %v1641
        %v1677 = vadd.f32 %v1581, %v1643
        %v1678 = vadd.f32 %v1582, %v1645
        %v1679 = vadd.f32 %v1583, %v1647
        %v1680 = vtanh.pop %v1664
        %v1681 = vtanh.pop %v1665
        %v1682 = vtanh.pop %v1666
        %v1683 = vtanh.pop %v1667
        %v1684 = vtanh.pop %v1668
        %v1685 = vtanh.pop %v1669
        %v1686 = vtanh.pop %v1670
        %v1687 = vtanh.pop %v1671
        %v1688 = vtanh.pop %v1672
        %v1689 = vtanh.pop %v1673
        %v1690 = vtanh.pop %v1674
        %v1691 = vtanh.pop %v1675
        %v1692 = vtanh.pop %v1676
        %v1693 = vtanh.pop %v1677
        %v1694 = vtanh.pop %v1678
        %v1695 = vtanh.pop %v1679
        %v1696 = vmul.f32 %v1505, %v1680
        %v1697 = vmul.f32 %v1507, %v1681
        %v1698 = vmul.f32 %v1509, %v1682
        %v1699 = vmul.f32 %v1511, %v1683
        %v1700 = vmul.f32 %v1513, %v1684
        %v1701 = vmul.f32 %v1515, %v1685
        %v1702 = vmul.f32 %v1517, %v1686
        %v1703 = vmul.f32 %v1519, %v1687
        %v1704 = vmul.f32 %v1521, %v1688
        %v1705 = vmul.f32 %v1523, %v1689
        %v1706 = vmul.f32 %v1525, %v1690
        %v1707 = vmul.f32 %v1527, %v1691
        %v1708 = vmul.f32 %v1529, %v1692
        %v1709 = vmul.f32 %v1531, %v1693
        %v1710 = vmul.f32 %v1533, %v1694
        %v1711 = vmul.f32 %v1535, %v1695
        %v1712 = vpack.c.bf16 %v1697, %v1696
        %v1713 = vpack.c.bf16 %v1699, %v1698
        %v1714 = vpack.c.bf16 %v1701, %v1700
        %v1715 = vpack.c.bf16 %v1703, %v1702
        %v1716 = vpack.c.bf16 %v1705, %v1704
        %v1717 = vpack.c.bf16 %v1707, %v1706
        %v1718 = vpack.c.bf16 %v1709, %v1708
        %v1719 = vpack.c.bf16 %v1711, %v1710
        %1728 = vrot.lane.b32.xlu0 %v1712, 64
        %v1729 = vpop.permute.xlu0 %1728
        %1730 = vrot.lane.b32.xlu0 %v1713, 64
        %v1731 = vpop.permute.xlu0 %1730
        %1732 = vrot.lane.b32.xlu0 %v1714, 64
        %v1733 = vpop.permute.xlu0 %1732
        %1734 = vrot.lane.b32.xlu0 %v1715, 64
        %v1735 = vpop.permute.xlu0 %1734
        %1736 = vrot.lane.b32.xlu0 %v1716, 64
        %v1737 = vpop.permute.xlu0 %1736
        %1738 = vrot.lane.b32.xlu0 %v1717, 64
        %v1739 = vpop.permute.xlu0 %1738
        %1740 = vrot.lane.b32.xlu0 %v1718, 64
        %v1741 = vpop.permute.xlu0 %1740
        %1742 = vrot.lane.b32.xlu0 %v1719, 64
        %v1743 = vpop.permute.xlu0 %1742
        %v1745 = vsel %vm1227, %v1729, 0
        %v1748 = vsel %vm1227, %v1731, 0
        %v1751 = vsel %vm1227, %v1733, 0
        %v1754 = vsel %vm1227, %v1735, 0
        %v1757 = vsel %vm1227, %v1737, 0
        %v1760 = vsel %vm1227, %v1739, 0
        %v1763 = vsel %vm1227, %v1741, 0
        %v1766 = vsel %vm1227, %v1743, 0
        %1768 = vmatprep.subr.bf16.mxu0 0
        %1769 = vmatpush1.bf16.msra.mxu0 0
        %1770 = vmatprep.subr.bf16.mxu0 0
        %1771 = vmatpush1.bf16.msra.mxu0 0
        %1772 = vmatprep.subr.bf16.mxu0 0
        %1773 = vmatpush1.bf16.msra.mxu0 0
        %1774 = vmatprep.subr.bf16.mxu0 0
        %1775 = vmatpush1.bf16.msra.mxu0 0
        %1776 = vmatprep.subr.bf16.mxu0 %v1218
        %1777 = vmatpush1.bf16.msra.mxu0 %v1217
        %1778 = vmatprep.subr.bf16.mxu0 %v1216
        %1779 = vmatpush1.bf16.msra.mxu0 %v1215
        %1780 = vmatprep.subr.bf16.mxu0 %v1214
        %1781 = vmatpush1.bf16.msra.mxu0 %v1213
        %1782 = vmatprep.subr.bf16.mxu0 %v1212
        %1783 = vmatpush1.bf16.msra.mxu0 %v1211
        %1784 = vmatprep.subr.bf16.mxu0 0
        %1785 = vmatpush2.bf16.msra.mxu0 0
        %1786 = vmatprep.subr.bf16.mxu0 0
        %1787 = vmatpush2.bf16.msra.mxu0 0
        %1788 = vmatprep.subr.bf16.mxu0 0
        %1789 = vmatpush2.bf16.msra.mxu0 0
        %1790 = vmatprep.subr.bf16.mxu0 0
        %1791 = vmatpush2.bf16.msra.mxu0 0
        %1792 = vmatprep.subr.bf16.mxu0 0
        %1793 = vmatpush2.bf16.msra.mxu0 0
        %1794 = vmatprep.subr.bf16.mxu0 0
        %1795 = vmatpush2.bf16.msra.mxu0 0
        %1796 = vmatprep.subr.bf16.mxu0 0
        %1797 = vmatpush2.bf16.msra.mxu0 0
        %1798 = vmatprep.subr.bf16.mxu0 0
        %1799 = vmatpush2.bf16.msra.mxu0 0
        %1800 = vmatprep.mubr.bf16.mxu0 0
        %1801 = vmatmul.mubr.bf16.gmra.mxu0 %v1745
        %v1802 = vpop.f32.mrf.mxu0
        %v1803 = vadd.f32 0.0, %v1802
        %v1804 = vpop.f32.mrf.mxu0
        %v1805 = vadd.f32 0.0, %v1804
        %v1806 = vpop.f32.mrf.mxu0
        %v1807 = vadd.f32 0.0, %v1806
        %v1808 = vpop.f32.mrf.mxu0
        %v1809 = vadd.f32 0.0, %v1808
        %1810 = vmatprep.mubr.bf16.mxu0 0
        %1811 = vmatmul.mubr.bf16.gmra.mxu0 %v1748
        %v1812 = vpop.f32.mrf.mxu0
        %v1813 = vadd.f32 0.0, %v1812
        %v1814 = vpop.f32.mrf.mxu0
        %v1815 = vadd.f32 0.0, %v1814
        %v1816 = vpop.f32.mrf.mxu0
        %v1817 = vadd.f32 0.0, %v1816
        %v1818 = vpop.f32.mrf.mxu0
        %v1819 = vadd.f32 0.0, %v1818
        %1820 = vmatprep.mubr.bf16.mxu0 0
        %1821 = vmatmul.mubr.bf16.gmra.mxu0 %v1751
        %v1822 = vpop.f32.mrf.mxu0
        %v1823 = vadd.f32 0.0, %v1822
        %v1824 = vpop.f32.mrf.mxu0
        %v1825 = vadd.f32 0.0, %v1824
        %v1826 = vpop.f32.mrf.mxu0
        %v1827 = vadd.f32 0.0, %v1826
        %v1828 = vpop.f32.mrf.mxu0
        %v1829 = vadd.f32 0.0, %v1828
        %1830 = vmatprep.mubr.bf16.mxu0 0
        %1831 = vmatmul.mubr.bf16.gmra.mxu0 %v1754
        %v1832 = vpop.f32.mrf.mxu0
        %v1833 = vadd.f32 0.0, %v1832
        %v1834 = vpop.f32.mrf.mxu0
        %v1835 = vadd.f32 0.0, %v1834
        %v1836 = vpop.f32.mrf.mxu0
        %v1837 = vadd.f32 0.0, %v1836
        %v1838 = vpop.f32.mrf.mxu0
        %v1839 = vadd.f32 0.0, %v1838
        %1840 = vmatprep.mubr.bf16.mxu0 0
        %1841 = vmatmul.mubr.bf16.gmra.mxu0 %v1757
        %v1842 = vpop.f32.mrf.mxu0
        %v1843 = vadd.f32 0.0, %v1842
        %v1844 = vpop.f32.mrf.mxu0
        %v1845 = vadd.f32 0.0, %v1844
        %v1846 = vpop.f32.mrf.mxu0
        %v1847 = vadd.f32 0.0, %v1846
        %v1848 = vpop.f32.mrf.mxu0
        %v1849 = vadd.f32 0.0, %v1848
        %1850 = vmatprep.mubr.bf16.mxu0 0
        %1851 = vmatmul.mubr.bf16.gmra.mxu0 %v1760
        %v1852 = vpop.f32.mrf.mxu0
        %v1853 = vadd.f32 0.0, %v1852
        %v1854 = vpop.f32.mrf.mxu0
        %v1855 = vadd.f32 0.0, %v1854
        %v1856 = vpop.f32.mrf.mxu0
        %v1857 = vadd.f32 0.0, %v1856
        %v1858 = vpop.f32.mrf.mxu0
        %v1859 = vadd.f32 0.0, %v1858
        %1860 = vmatprep.mubr.bf16.mxu0 0
        %1861 = vmatmul.mubr.bf16.gmra.mxu0 %v1763
        %v1862 = vpop.f32.mrf.mxu0
        %v1863 = vadd.f32 0.0, %v1862
        %v1864 = vpop.f32.mrf.mxu0
        %v1865 = vadd.f32 0.0, %v1864
        %v1866 = vpop.f32.mrf.mxu0
        %v1867 = vadd.f32 0.0, %v1866
        %v1868 = vpop.f32.mrf.mxu0
        %v1869 = vadd.f32 0.0, %v1868
        %1870 = vmatprep.mubr.bf16.mxu0 0
        %1871 = vmatmul.mubr.bf16.gmra.mxu0 %v1766
        %v1872 = vpop.f32.mrf.mxu0
        %v1873 = vadd.f32 0.0, %v1872
        %v1874 = vpop.f32.mrf.mxu0
        %v1875 = vadd.f32 0.0, %v1874
        %v1876 = vpop.f32.mrf.mxu0
        %v1877 = vadd.f32 0.0, %v1876
        %v1878 = vpop.f32.mrf.mxu0
        %v1879 = vadd.f32 0.0, %v1878
        %1880 = vdwg.mxu0
        %v1881 = vadd.f32 %v941, %v1803
        %v1882 = vadd.f32 %v943, %v1805
        %v1883 = vadd.f32 %v945, %v1807
        %v1884 = vadd.f32 %v947, %v1809
        %v1885 = vadd.f32 %v951, %v1813
        %v1886 = vadd.f32 %v953, %v1815
        %v1887 = vadd.f32 %v955, %v1817
        %v1888 = vadd.f32 %v957, %v1819
        %v1889 = vadd.f32 %v961, %v1823
        %v1890 = vadd.f32 %v963, %v1825
        %v1891 = vadd.f32 %v965, %v1827
        %v1892 = vadd.f32 %v967, %v1829
        %v1893 = vadd.f32 %v971, %v1833
        %v1894 = vadd.f32 %v973, %v1835
        %v1895 = vadd.f32 %v975, %v1837
        %v1896 = vadd.f32 %v977, %v1839
        %v1897 = vadd.f32 %v981, %v1843
        %v1898 = vadd.f32 %v983, %v1845
        %v1899 = vadd.f32 %v985, %v1847
        %v1900 = vadd.f32 %v987, %v1849
        %v1901 = vadd.f32 %v991, %v1853
        %v1902 = vadd.f32 %v993, %v1855
        %v1903 = vadd.f32 %v995, %v1857
        %v1904 = vadd.f32 %v997, %v1859
        %v1905 = vadd.f32 %v1001, %v1863
        %v1906 = vadd.f32 %v1003, %v1865
        %v1907 = vadd.f32 %v1005, %v1867
        %v1908 = vadd.f32 %v1007, %v1869
        %v1909 = vadd.f32 %v1011, %v1873
        %v1910 = vadd.f32 %v1013, %v1875
        %v1911 = vadd.f32 %v1015, %v1877
        %v1912 = vadd.f32 %v1017, %v1879
        %v1913 = vsub.f32 0.0, %v1881
        %v1914 = vsub.f32 0.0, %v1882
        %v1915 = vsub.f32 0.0, %v1883
        %v1916 = vsub.f32 0.0, %v1884
        %v1917 = vsub.f32 0.0, %v1885
        %v1918 = vsub.f32 0.0, %v1886
        %v1919 = vsub.f32 0.0, %v1887
        %v1920 = vsub.f32 0.0, %v1888
        %v1921 = vsub.f32 0.0, %v1889
        %v1922 = vsub.f32 0.0, %v1890
        %v1923 = vsub.f32 0.0, %v1891
        %v1924 = vsub.f32 0.0, %v1892
        %v1925 = vsub.f32 0.0, %v1893
        %v1926 = vsub.f32 0.0, %v1894
        %v1927 = vsub.f32 0.0, %v1895
        %v1928 = vsub.f32 0.0, %v1896
        %v1929 = vsub.f32 0.0, %v1897
        %v1930 = vsub.f32 0.0, %v1898
        %v1931 = vsub.f32 0.0, %v1899
        %v1932 = vsub.f32 0.0, %v1900
        %v1933 = vsub.f32 0.0, %v1901
        %v1934 = vsub.f32 0.0, %v1902
        %v1935 = vsub.f32 0.0, %v1903
        %v1936 = vsub.f32 0.0, %v1904
        %v1937 = vsub.f32 0.0, %v1905
        %v1938 = vsub.f32 0.0, %v1906
        %v1939 = vsub.f32 0.0, %v1907
        %v1940 = vsub.f32 0.0, %v1908
        %v1941 = vsub.f32 0.0, %v1909
        %v1942 = vsub.f32 0.0, %v1910
        %v1943 = vsub.f32 0.0, %v1911
        %v1944 = vsub.f32 0.0, %v1912
        %v1945 = vmul.f32 %v1913, 1.442695
        %v1946 = vpow.pop %v1945
        %v1947 = vmul.f32 %v1914, 1.442695
        %v1948 = vpow.pop %v1947
        %v1949 = vmul.f32 %v1915, 1.442695
        %v1950 = vpow.pop %v1949
        %v1951 = vmul.f32 %v1916, 1.442695
        %v1952 = vpow.pop %v1951
        %v1953 = vmul.f32 %v1917, 1.442695
        %v1954 = vpow.pop %v1953
        %v1955 = vmul.f32 %v1918, 1.442695
        %v1956 = vpow.pop %v1955
        %v1957 = vmul.f32 %v1919, 1.442695
        %v1958 = vpow.pop %v1957
        %v1959 = vmul.f32 %v1920, 1.442695
        %v1960 = vpow.pop %v1959
        %v1961 = vmul.f32 %v1921, 1.442695
        %v1962 = vpow.pop %v1961
        %v1963 = vmul.f32 %v1922, 1.442695
        %v1964 = vpow.pop %v1963
        %v1965 = vmul.f32 %v1923, 1.442695
        %v1966 = vpow.pop %v1965
        %v1967 = vmul.f32 %v1924, 1.442695
        %v1968 = vpow.pop %v1967
        %v1969 = vmul.f32 %v1925, 1.442695
        %v1970 = vpow.pop %v1969
        %v1971 = vmul.f32 %v1926, 1.442695
        %v1972 = vpow.pop %v1971
        %v1973 = vmul.f32 %v1927, 1.442695
        %v1974 = vpow.pop %v1973
        %v1975 = vmul.f32 %v1928, 1.442695
        %v1976 = vpow.pop %v1975
        %v1977 = vmul.f32 %v1929, 1.442695
        %v1978 = vpow.pop %v1977
        %v1979 = vmul.f32 %v1930, 1.442695
        %v1980 = vpow.pop %v1979
        %v1981 = vmul.f32 %v1931, 1.442695
        %v1982 = vpow.pop %v1981
        %v1983 = vmul.f32 %v1932, 1.442695
        %v1984 = vpow.pop %v1983
        %v1985 = vmul.f32 %v1933, 1.442695
        %v1986 = vpow.pop %v1985
        %v1987 = vmul.f32 %v1934, 1.442695
        %v1988 = vpow.pop %v1987
        %v1989 = vmul.f32 %v1935, 1.442695
        %v1990 = vpow.pop %v1989
        %v1991 = vmul.f32 %v1936, 1.442695
        %v1992 = vpow.pop %v1991
        %v1993 = vmul.f32 %v1937, 1.442695
        %v1994 = vpow.pop %v1993
        %v1995 = vmul.f32 %v1938, 1.442695
        %v1996 = vpow.pop %v1995
        %v1997 = vmul.f32 %v1939, 1.442695
        %v1998 = vpow.pop %v1997
        %v1999 = vmul.f32 %v1940, 1.442695
        %v2000 = vpow.pop %v1999
        %v2001 = vmul.f32 %v1941, 1.442695
        %v2002 = vpow.pop %v2001
        %v2003 = vmul.f32 %v1942, 1.442695
        %v2004 = vpow.pop %v2003
        %v2005 = vmul.f32 %v1943, 1.442695
        %v2006 = vpow.pop %v2005
        %v2007 = vmul.f32 %v1944, 1.442695
        %v2008 = vpow.pop %v2007
        %v2009 = vadd.f32 %v1946, 1.0
        %v2010 = vadd.f32 %v1948, 1.0
        %v2011 = vadd.f32 %v1950, 1.0
        %v2012 = vadd.f32 %v1952, 1.0
        %v2013 = vadd.f32 %v1954, 1.0
        %v2014 = vadd.f32 %v1956, 1.0
        %v2015 = vadd.f32 %v1958, 1.0
        %v2016 = vadd.f32 %v1960, 1.0
        %v2017 = vadd.f32 %v1962, 1.0
        %v2018 = vadd.f32 %v1964, 1.0
        %v2019 = vadd.f32 %v1966, 1.0
        %v2020 = vadd.f32 %v1968, 1.0
        %v2021 = vadd.f32 %v1970, 1.0
        %v2022 = vadd.f32 %v1972, 1.0
        %v2023 = vadd.f32 %v1974, 1.0
        %v2024 = vadd.f32 %v1976, 1.0
        %v2025 = vadd.f32 %v1978, 1.0
        %v2026 = vadd.f32 %v1980, 1.0
        %v2027 = vadd.f32 %v1982, 1.0
        %v2028 = vadd.f32 %v1984, 1.0
        %v2029 = vadd.f32 %v1986, 1.0
        %v2030 = vadd.f32 %v1988, 1.0
        %v2031 = vadd.f32 %v1990, 1.0
        %v2032 = vadd.f32 %v1992, 1.0
        %v2033 = vadd.f32 %v1994, 1.0
        %v2034 = vadd.f32 %v1996, 1.0
        %v2035 = vadd.f32 %v1998, 1.0
        %v2036 = vadd.f32 %v2000, 1.0
        %v2037 = vadd.f32 %v2002, 1.0
        %v2038 = vadd.f32 %v2004, 1.0
        %v2039 = vadd.f32 %v2006, 1.0
        %v2040 = vadd.f32 %v2008, 1.0
        %v2041 = vrcp.pop %v2009
        %v2042 = vrcp.pop %v2010
        %v2043 = vrcp.pop %v2011
        %v2044 = vrcp.pop %v2012
        %v2045 = vrcp.pop %v2013
        %v2046 = vrcp.pop %v2014
        %v2047 = vrcp.pop %v2015
        %v2048 = vrcp.pop %v2016
        %v2049 = vrcp.pop %v2017
        %v2050 = vrcp.pop %v2018
        %v2051 = vrcp.pop %v2019
        %v2052 = vrcp.pop %v2020
        %v2053 = vrcp.pop %v2021
        %v2054 = vrcp.pop %v2022
        %v2055 = vrcp.pop %v2023
        %v2056 = vrcp.pop %v2024
        %v2057 = vrcp.pop %v2025
        %v2058 = vrcp.pop %v2026
        %v2059 = vrcp.pop %v2027
        %v2060 = vrcp.pop %v2028
        %v2061 = vrcp.pop %v2029
        %v2062 = vrcp.pop %v2030
        %v2063 = vrcp.pop %v2031
        %v2064 = vrcp.pop %v2032
        %v2065 = vrcp.pop %v2033
        %v2066 = vrcp.pop %v2034
        %v2067 = vrcp.pop %v2035
        %v2068 = vrcp.pop %v2036
        %v2069 = vrcp.pop %v2037
        %v2070 = vrcp.pop %v2038
        %v2071 = vrcp.pop %v2039
        %v2072 = vrcp.pop %v2040
        %v2073 = vmul.f32 %v2042, 2.0
        %v2074 = vmul.f32 %v2044, 2.0
        %v2075 = vmul.f32 %v2046, 2.0
        %v2076 = vmul.f32 %v2048, 2.0
        %v2077 = vmul.f32 %v2050, 2.0
        %v2078 = vmul.f32 %v2052, 2.0
        %v2079 = vmul.f32 %v2054, 2.0
        %v2080 = vmul.f32 %v2056, 2.0
        %v2081 = vmul.f32 %v2058, 2.0
        %v2082 = vmul.f32 %v2060, 2.0
        %v2083 = vmul.f32 %v2062, 2.0
        %v2084 = vmul.f32 %v2064, 2.0
        %v2085 = vmul.f32 %v2066, 2.0
        %v2086 = vmul.f32 %v2068, 2.0
        %v2087 = vmul.f32 %v2070, 2.0
        %v2088 = vmul.f32 %v2072, 2.0
        %v2089 = vsub.f32 %v2073, 1.0
        %v2090 = vsub.f32 %v2074, 1.0
        %v2091 = vsub.f32 %v2075, 1.0
        %v2092 = vsub.f32 %v2076, 1.0
        %v2093 = vsub.f32 %v2077, 1.0
        %v2094 = vsub.f32 %v2078, 1.0
        %v2095 = vsub.f32 %v2079, 1.0
        %v2096 = vsub.f32 %v2080, 1.0
        %v2097 = vsub.f32 %v2081, 1.0
        %v2098 = vsub.f32 %v2082, 1.0
        %v2099 = vsub.f32 %v2083, 1.0
        %v2100 = vsub.f32 %v2084, 1.0
        %v2101 = vsub.f32 %v2085, 1.0
        %v2102 = vsub.f32 %v2086, 1.0
        %v2103 = vsub.f32 %v2087, 1.0
        %v2104 = vsub.f32 %v2088, 1.0
        %v2105 = vmul.f32 %v2041, %v1664
        %v2106 = vmul.f32 %v2043, %v1665
        %v2107 = vmul.f32 %v2045, %v1666
        %v2108 = vmul.f32 %v2047, %v1667
        %v2109 = vmul.f32 %v2049, %v1668
        %v2110 = vmul.f32 %v2051, %v1669
        %v2111 = vmul.f32 %v2053, %v1670
        %v2112 = vmul.f32 %v2055, %v1671
        %v2113 = vmul.f32 %v2057, %v1672
        %v2114 = vmul.f32 %v2059, %v1673
        %v2115 = vmul.f32 %v2061, %v1674
        %v2116 = vmul.f32 %v2063, %v1675
        %v2117 = vmul.f32 %v2065, %v1676
        %v2118 = vmul.f32 %v2067, %v1677
        %v2119 = vmul.f32 %v2069, %v1678
        %v2120 = vmul.f32 %v2071, %v1679
        %v2121 = vmul.f32 %v2041, %v2089
        %v2122 = vmul.f32 %v2043, %v2090
        %v2123 = vmul.f32 %v2045, %v2091
        %v2124 = vmul.f32 %v2047, %v2092
        %v2125 = vmul.f32 %v2049, %v2093
        %v2126 = vmul.f32 %v2051, %v2094
        %v2127 = vmul.f32 %v2053, %v2095
        %v2128 = vmul.f32 %v2055, %v2096
        %v2129 = vmul.f32 %v2057, %v2097
        %v2130 = vmul.f32 %v2059, %v2098
        %v2131 = vmul.f32 %v2061, %v2099
        %v2132 = vmul.f32 %v2063, %v2100
        %v2133 = vmul.f32 %v2065, %v2101
        %v2134 = vmul.f32 %v2067, %v2102
        %v2135 = vmul.f32 %v2069, %v2103
        %v2136 = vmul.f32 %v2071, %v2104
        %2153 = vrot.lane.b32.xlu0 %v2121, 64
        %v2154 = vpop.permute.xlu0 %2153
        %2155 = vrot.lane.b32.xlu0 %v2122, 64
        %v2156 = vpop.permute.xlu0 %2155
        %2157 = vrot.lane.b32.xlu0 %v2123, 64
        %v2158 = vpop.permute.xlu0 %2157
        %2159 = vrot.lane.b32.xlu0 %v2124, 64
        %v2160 = vpop.permute.xlu0 %2159
        %2161 = vrot.lane.b32.xlu0 %v2125, 64
        %v2162 = vpop.permute.xlu0 %2161
        %2163 = vrot.lane.b32.xlu0 %v2126, 64
        %v2164 = vpop.permute.xlu0 %2163
        %2165 = vrot.lane.b32.xlu0 %v2127, 64
        %v2166 = vpop.permute.xlu0 %2165
        %2167 = vrot.lane.b32.xlu0 %v2128, 64
        %v2168 = vpop.permute.xlu0 %2167
        %2169 = vrot.lane.b32.xlu0 %v2129, 64
        %v2170 = vpop.permute.xlu0 %2169
        %2171 = vrot.lane.b32.xlu0 %v2130, 64
        %v2172 = vpop.permute.xlu0 %2171
        %2173 = vrot.lane.b32.xlu0 %v2131, 64
        %v2174 = vpop.permute.xlu0 %2173
        %2175 = vrot.lane.b32.xlu0 %v2132, 64
        %v2176 = vpop.permute.xlu0 %2175
        %2177 = vrot.lane.b32.xlu0 %v2133, 64
        %v2178 = vpop.permute.xlu0 %2177
        %2179 = vrot.lane.b32.xlu0 %v2134, 64
        %v2180 = vpop.permute.xlu0 %2179
        %2181 = vrot.lane.b32.xlu0 %v2135, 64
        %v2182 = vpop.permute.xlu0 %2181
        %2183 = vrot.lane.b32.xlu0 %v2136, 64
        %v2184 = vpop.permute.xlu0 %2183
        %v2201 = vadd.f32 %v2105, %v2154
        %v2202 = vadd.f32 %v2106, %v2156
        %v2203 = vadd.f32 %v2107, %v2158
        %v2204 = vadd.f32 %v2108, %v2160
        %v2205 = vadd.f32 %v2109, %v2162
        %v2206 = vadd.f32 %v2110, %v2164
        %v2207 = vadd.f32 %v2111, %v2166
        %v2208 = vadd.f32 %v2112, %v2168
        %v2209 = vadd.f32 %v2113, %v2170
        %v2210 = vadd.f32 %v2114, %v2172
        %v2211 = vadd.f32 %v2115, %v2174
        %v2212 = vadd.f32 %v2116, %v2176
        %v2213 = vadd.f32 %v2117, %v2178
        %v2214 = vadd.f32 %v2118, %v2180
        %v2215 = vadd.f32 %v2119, %v2182
        %v2216 = vadd.f32 %v2120, %v2184
        %v2217 = vtanh.pop %v2201
        %v2218 = vtanh.pop %v2202
        %v2219 = vtanh.pop %v2203
        %v2220 = vtanh.pop %v2204
        %v2221 = vtanh.pop %v2205
        %v2222 = vtanh.pop %v2206
        %v2223 = vtanh.pop %v2207
        %v2224 = vtanh.pop %v2208
        %v2225 = vtanh.pop %v2209
        %v2226 = vtanh.pop %v2210
        %v2227 = vtanh.pop %v2211
        %v2228 = vtanh.pop %v2212
        %v2229 = vtanh.pop %v2213
        %v2230 = vtanh.pop %v2214
        %v2231 = vtanh.pop %v2215
        %v2232 = vtanh.pop %v2216
        %v2233 = vmul.f32 %v2042, %v2217
        %v2234 = vmul.f32 %v2044, %v2218
        %v2235 = vmul.f32 %v2046, %v2219
        %v2236 = vmul.f32 %v2048, %v2220
        %v2237 = vmul.f32 %v2050, %v2221
        %v2238 = vmul.f32 %v2052, %v2222
        %v2239 = vmul.f32 %v2054, %v2223
        %v2240 = vmul.f32 %v2056, %v2224
        %v2241 = vmul.f32 %v2058, %v2225
        %v2242 = vmul.f32 %v2060, %v2226
        %v2243 = vmul.f32 %v2062, %v2227
        %v2244 = vmul.f32 %v2064, %v2228
        %v2245 = vmul.f32 %v2066, %v2229
        %v2246 = vmul.f32 %v2068, %v2230
        %v2247 = vmul.f32 %v2070, %v2231
        %v2248 = vmul.f32 %v2072, %v2232
        %v2249 = vpack.c.bf16 %v2234, %v2233
        %v2250 = vpack.c.bf16 %v2236, %v2235
        %v2251 = vpack.c.bf16 %v2238, %v2237
        %v2252 = vpack.c.bf16 %v2240, %v2239
        %v2253 = vpack.c.bf16 %v2242, %v2241
        %v2254 = vpack.c.bf16 %v2244, %v2243
        %v2255 = vpack.c.bf16 %v2246, %v2245
        %v2256 = vpack.c.bf16 %v2248, %v2247
        %2265 = vrot.lane.b32.xlu0 %v2249, 64
        %v2266 = vpop.permute.xlu0 %2265
        %2267 = vrot.lane.b32.xlu0 %v2250, 64
        %v2268 = vpop.permute.xlu0 %2267
        %2269 = vrot.lane.b32.xlu0 %v2251, 64
        %v2270 = vpop.permute.xlu0 %2269
        %2271 = vrot.lane.b32.xlu0 %v2252, 64
        %v2272 = vpop.permute.xlu0 %2271
        %2273 = vrot.lane.b32.xlu0 %v2253, 64
        %v2274 = vpop.permute.xlu0 %2273
        %2275 = vrot.lane.b32.xlu0 %v2254, 64
        %v2276 = vpop.permute.xlu0 %2275
        %2277 = vrot.lane.b32.xlu0 %v2255, 64
        %v2278 = vpop.permute.xlu0 %2277
        %2279 = vrot.lane.b32.xlu0 %v2256, 64
        %v2280 = vpop.permute.xlu0 %2279
        %v2282 = vsel %vm1227, %v2266, 0
        %v2285 = vsel %vm1227, %v2268, 0
        %v2288 = vsel %vm1227, %v2270, 0
        %v2291 = vsel %vm1227, %v2272, 0
        %v2294 = vsel %vm1227, %v2274, 0
        %v2297 = vsel %vm1227, %v2276, 0
        %v2300 = vsel %vm1227, %v2278, 0
        %v2303 = vsel %vm1227, %v2280, 0
        %2305 = vmatprep.subr.bf16.mxu0 0
        %2306 = vmatpush1.bf16.msra.mxu0 0
        %2307 = vmatprep.subr.bf16.mxu0 0
        %2308 = vmatpush1.bf16.msra.mxu0 0
        %2309 = vmatprep.subr.bf16.mxu0 0
        %2310 = vmatpush1.bf16.msra.mxu0 0
        %2311 = vmatprep.subr.bf16.mxu0 0
        %2312 = vmatpush1.bf16.msra.mxu0 0
        %2313 = vmatprep.subr.bf16.mxu0 %v1218
        %2314 = vmatpush1.bf16.msra.mxu0 %v1217
        %2315 = vmatprep.subr.bf16.mxu0 %v1216
        %2316 = vmatpush1.bf16.msra.mxu0 %v1215
        %2317 = vmatprep.subr.bf16.mxu0 %v1214
        %2318 = vmatpush1.bf16.msra.mxu0 %v1213
        %2319 = vmatprep.subr.bf16.mxu0 %v1212
        %2320 = vmatpush1.bf16.msra.mxu0 %v1211
        %2321 = vmatprep.subr.bf16.mxu0 0
        %2322 = vmatpush2.bf16.msra.mxu0 0
        %2323 = vmatprep.subr.bf16.mxu0 0
        %2324 = vmatpush2.bf16.msra.mxu0 0
        %2325 = vmatprep.subr.bf16.mxu0 0
        %2326 = vmatpush2.bf16.msra.mxu0 0
        %2327 = vmatprep.subr.bf16.mxu0 0
        %2328 = vmatpush2.bf16.msra.mxu0 0
        %2329 = vmatprep.subr.bf16.mxu0 0
        %2330 = vmatpush2.bf16.msra.mxu0 0
        %2331 = vmatprep.subr.bf16.mxu0 0
        %2332 = vmatpush2.bf16.msra.mxu0 0
        %2333 = vmatprep.subr.bf16.mxu0 0
        %2334 = vmatpush2.bf16.msra.mxu0 0
        %2335 = vmatprep.subr.bf16.mxu0 0
        %2336 = vmatpush2.bf16.msra.mxu0 0
        %2337 = vmatprep.mubr.bf16.mxu0 0
        %2338 = vmatmul.mubr.bf16.gmra.mxu0 %v2282
        %v2339 = vpop.f32.mrf.mxu0
        %v2340 = vadd.f32 0.0, %v2339
        %v2341 = vpop.f32.mrf.mxu0
        %v2342 = vadd.f32 0.0, %v2341
        %v2343 = vpop.f32.mrf.mxu0
        %v2344 = vadd.f32 0.0, %v2343
        %v2345 = vpop.f32.mrf.mxu0
        %v2346 = vadd.f32 0.0, %v2345
        %2347 = vmatprep.mubr.bf16.mxu0 0
        %2348 = vmatmul.mubr.bf16.gmra.mxu0 %v2285
        %v2349 = vpop.f32.mrf.mxu0
        %v2350 = vadd.f32 0.0, %v2349
        %v2351 = vpop.f32.mrf.mxu0
        %v2352 = vadd.f32 0.0, %v2351
        %v2353 = vpop.f32.mrf.mxu0
        %v2354 = vadd.f32 0.0, %v2353
        %v2355 = vpop.f32.mrf.mxu0
        %v2356 = vadd.f32 0.0, %v2355
        %2357 = vmatprep.mubr.bf16.mxu0 0
        %2358 = vmatmul.mubr.bf16.gmra.mxu0 %v2288
        %v2359 = vpop.f32.mrf.mxu0
        %v2360 = vadd.f32 0.0, %v2359
        %v2361 = vpop.f32.mrf.mxu0
        %v2362 = vadd.f32 0.0, %v2361
        %v2363 = vpop.f32.mrf.mxu0
        %v2364 = vadd.f32 0.0, %v2363
        %v2365 = vpop.f32.mrf.mxu0
        %v2366 = vadd.f32 0.0, %v2365
        %2367 = vmatprep.mubr.bf16.mxu0 0
        %2368 = vmatmul.mubr.bf16.gmra.mxu0 %v2291
        %v2369 = vpop.f32.mrf.mxu0
        %v2370 = vadd.f32 0.0, %v2369
        %v2371 = vpop.f32.mrf.mxu0
        %v2372 = vadd.f32 0.0, %v2371
        %v2373 = vpop.f32.mrf.mxu0
        %v2374 = vadd.f32 0.0, %v2373
        %v2375 = vpop.f32.mrf.mxu0
        %v2376 = vadd.f32 0.0, %v2375
        %2377 = vmatprep.mubr.bf16.mxu0 0
        %2378 = vmatmul.mubr.bf16.gmra.mxu0 %v2294
        %v2379 = vpop.f32.mrf.mxu0
        %v2380 = vadd.f32 0.0, %v2379
        %v2381 = vpop.f32.mrf.mxu0
        %v2382 = vadd.f32 0.0, %v2381
        %v2383 = vpop.f32.mrf.mxu0
        %v2384 = vadd.f32 0.0, %v2383
        %v2385 = vpop.f32.mrf.mxu0
        %v2386 = vadd.f32 0.0, %v2385
        %2387 = vmatprep.mubr.bf16.mxu0 0
        %2388 = vmatmul.mubr.bf16.gmra.mxu0 %v2297
        %v2389 = vpop.f32.mrf.mxu0
        %v2390 = vadd.f32 0.0, %v2389
        %v2391 = vpop.f32.mrf.mxu0
        %v2392 = vadd.f32 0.0, %v2391
        %v2393 = vpop.f32.mrf.mxu0
        %v2394 = vadd.f32 0.0, %v2393
        %v2395 = vpop.f32.mrf.mxu0
        %v2396 = vadd.f32 0.0, %v2395
        %2397 = vmatprep.mubr.bf16.mxu0 0
        %2398 = vmatmul.mubr.bf16.gmra.mxu0 %v2300
        %v2399 = vpop.f32.mrf.mxu0
        %v2400 = vadd.f32 0.0, %v2399
        %v2401 = vpop.f32.mrf.mxu0
        %v2402 = vadd.f32 0.0, %v2401
        %v2403 = vpop.f32.mrf.mxu0
        %v2404 = vadd.f32 0.0, %v2403
        %v2405 = vpop.f32.mrf.mxu0
        %v2406 = vadd.f32 0.0, %v2405
        %2407 = vmatprep.mubr.bf16.mxu0 0
        %2408 = vmatmul.mubr.bf16.gmra.mxu0 %v2303
        %v2409 = vpop.f32.mrf.mxu0
        %v2410 = vadd.f32 0.0, %v2409
        %v2411 = vpop.f32.mrf.mxu0
        %v2412 = vadd.f32 0.0, %v2411
        %v2413 = vpop.f32.mrf.mxu0
        %v2414 = vadd.f32 0.0, %v2413
        %v2415 = vpop.f32.mrf.mxu0
        %v2416 = vadd.f32 0.0, %v2415
        %2417 = vdwg.mxu0
        %v2418 = vadd.f32 %v1021, %v2340
        %v2419 = vadd.f32 %v1023, %v2342
        %v2420 = vadd.f32 %v1025, %v2344
        %v2421 = vadd.f32 %v1027, %v2346
        %v2422 = vadd.f32 %v1031, %v2350
        %v2423 = vadd.f32 %v1033, %v2352
        %v2424 = vadd.f32 %v1035, %v2354
        %v2425 = vadd.f32 %v1037, %v2356
        %v2426 = vadd.f32 %v1041, %v2360
        %v2427 = vadd.f32 %v1043, %v2362
        %v2428 = vadd.f32 %v1045, %v2364
        %v2429 = vadd.f32 %v1047, %v2366
        %v2430 = vadd.f32 %v1051, %v2370
        %v2431 = vadd.f32 %v1053, %v2372
        %v2432 = vadd.f32 %v1055, %v2374
        %v2433 = vadd.f32 %v1057, %v2376
        %v2434 = vadd.f32 %v1061, %v2380
        %v2435 = vadd.f32 %v1063, %v2382
        %v2436 = vadd.f32 %v1065, %v2384
        %v2437 = vadd.f32 %v1067, %v2386
        %v2438 = vadd.f32 %v1071, %v2390
        %v2439 = vadd.f32 %v1073, %v2392
        %v2440 = vadd.f32 %v1075, %v2394
        %v2441 = vadd.f32 %v1077, %v2396
        %v2442 = vadd.f32 %v1081, %v2400
        %v2443 = vadd.f32 %v1083, %v2402
        %v2444 = vadd.f32 %v1085, %v2404
        %v2445 = vadd.f32 %v1087, %v2406
        %v2446 = vadd.f32 %v1091, %v2410
        %v2447 = vadd.f32 %v1093, %v2412
        %v2448 = vadd.f32 %v1095, %v2414
        %v2449 = vadd.f32 %v1097, %v2416
        %v2450 = vsub.f32 0.0, %v2418
        %v2451 = vsub.f32 0.0, %v2419
        %v2452 = vsub.f32 0.0, %v2420
        %v2453 = vsub.f32 0.0, %v2421
        %v2454 = vsub.f32 0.0, %v2422
        %v2455 = vsub.f32 0.0, %v2423
        %v2456 = vsub.f32 0.0, %v2424
        %v2457 = vsub.f32 0.0, %v2425
        %v2458 = vsub.f32 0.0, %v2426
        %v2459 = vsub.f32 0.0, %v2427
        %v2460 = vsub.f32 0.0, %v2428
        %v2461 = vsub.f32 0.0, %v2429
        %v2462 = vsub.f32 0.0, %v2430
        %v2463 = vsub.f32 0.0, %v2431
        %v2464 = vsub.f32 0.0, %v2432
        %v2465 = vsub.f32 0.0, %v2433
        %v2466 = vsub.f32 0.0, %v2434
        %v2467 = vsub.f32 0.0, %v2435
        %v2468 = vsub.f32 0.0, %v2436
        %v2469 = vsub.f32 0.0, %v2437
        %v2470 = vsub.f32 0.0, %v2438
        %v2471 = vsub.f32 0.0, %v2439
        %v2472 = vsub.f32 0.0, %v2440
        %v2473 = vsub.f32 0.0, %v2441
        %v2474 = vsub.f32 0.0, %v2442
        %v2475 = vsub.f32 0.0, %v2443
        %v2476 = vsub.f32 0.0, %v2444
        %v2477 = vsub.f32 0.0, %v2445
        %v2478 = vsub.f32 0.0, %v2446
        %v2479 = vsub.f32 0.0, %v2447
        %v2480 = vsub.f32 0.0, %v2448
        %v2481 = vsub.f32 0.0, %v2449
        %v2482 = vmul.f32 %v2450, 1.442695
        %v2483 = vpow.pop %v2482
        %v2484 = vmul.f32 %v2451, 1.442695
        %v2485 = vpow.pop %v2484
        %v2486 = vmul.f32 %v2452, 1.442695
        %v2487 = vpow.pop %v2486
        %v2488 = vmul.f32 %v2453, 1.442695
        %v2489 = vpow.pop %v2488
        %v2490 = vmul.f32 %v2454, 1.442695
        %v2491 = vpow.pop %v2490
        %v2492 = vmul.f32 %v2455, 1.442695
        %v2493 = vpow.pop %v2492
        %v2494 = vmul.f32 %v2456, 1.442695
        %v2495 = vpow.pop %v2494
        %v2496 = vmul.f32 %v2457, 1.442695
        %v2497 = vpow.pop %v2496
        %v2498 = vmul.f32 %v2458, 1.442695
        %v2499 = vpow.pop %v2498
        %v2500 = vmul.f32 %v2459, 1.442695
        %v2501 = vpow.pop %v2500
        %v2502 = vmul.f32 %v2460, 1.442695
        %v2503 = vpow.pop %v2502
        %v2504 = vmul.f32 %v2461, 1.442695
        %v2505 = vpow.pop %v2504
        %v2506 = vmul.f32 %v2462, 1.442695
        %v2507 = vpow.pop %v2506
        %v2508 = vmul.f32 %v2463, 1.442695
        %v2509 = vpow.pop %v2508
        %v2510 = vmul.f32 %v2464, 1.442695
        %v2511 = vpow.pop %v2510
        %v2512 = vmul.f32 %v2465, 1.442695
        %v2513 = vpow.pop %v2512
        %v2514 = vmul.f32 %v2466, 1.442695
        %v2515 = vpow.pop %v2514
        %v2516 = vmul.f32 %v2467, 1.442695
        %v2517 = vpow.pop %v2516
        %v2518 = vmul.f32 %v2468, 1.442695
        %v2519 = vpow.pop %v2518
        %v2520 = vmul.f32 %v2469, 1.442695
        %v2521 = vpow.pop %v2520
        %v2522 = vmul.f32 %v2470, 1.442695
        %v2523 = vpow.pop %v2522
        %v2524 = vmul.f32 %v2471, 1.442695
        %v2525 = vpow.pop %v2524
        %v2526 = vmul.f32 %v2472, 1.442695
        %v2527 = vpow.pop %v2526
        %v2528 = vmul.f32 %v2473, 1.442695
        %v2529 = vpow.pop %v2528
        %v2530 = vmul.f32 %v2474, 1.442695
        %v2531 = vpow.pop %v2530
        %v2532 = vmul.f32 %v2475, 1.442695
        %v2533 = vpow.pop %v2532
        %v2534 = vmul.f32 %v2476, 1.442695
        %v2535 = vpow.pop %v2534
        %v2536 = vmul.f32 %v2477, 1.442695
        %v2537 = vpow.pop %v2536
        %v2538 = vmul.f32 %v2478, 1.442695
        %v2539 = vpow.pop %v2538
        %v2540 = vmul.f32 %v2479, 1.442695
        %v2541 = vpow.pop %v2540
        %v2542 = vmul.f32 %v2480, 1.442695
        %v2543 = vpow.pop %v2542
        %v2544 = vmul.f32 %v2481, 1.442695
        %v2545 = vpow.pop %v2544
        %v2546 = vadd.f32 %v2483, 1.0
        %v2547 = vadd.f32 %v2485, 1.0
        %v2548 = vadd.f32 %v2487, 1.0
        %v2549 = vadd.f32 %v2489, 1.0
        %v2550 = vadd.f32 %v2491, 1.0
        %v2551 = vadd.f32 %v2493, 1.0
        %v2552 = vadd.f32 %v2495, 1.0
        %v2553 = vadd.f32 %v2497, 1.0
        %v2554 = vadd.f32 %v2499, 1.0
        %v2555 = vadd.f32 %v2501, 1.0
        %v2556 = vadd.f32 %v2503, 1.0
        %v2557 = vadd.f32 %v2505, 1.0
        %v2558 = vadd.f32 %v2507, 1.0
        %v2559 = vadd.f32 %v2509, 1.0
        %v2560 = vadd.f32 %v2511, 1.0
        %v2561 = vadd.f32 %v2513, 1.0
        %v2562 = vadd.f32 %v2515, 1.0
        %v2563 = vadd.f32 %v2517, 1.0
        %v2564 = vadd.f32 %v2519, 1.0
        %v2565 = vadd.f32 %v2521, 1.0
        %v2566 = vadd.f32 %v2523, 1.0
        %v2567 = vadd.f32 %v2525, 1.0
        %v2568 = vadd.f32 %v2527, 1.0
        %v2569 = vadd.f32 %v2529, 1.0
        %v2570 = vadd.f32 %v2531, 1.0
        %v2571 = vadd.f32 %v2533, 1.0
        %v2572 = vadd.f32 %v2535, 1.0
        %v2573 = vadd.f32 %v2537, 1.0
        %v2574 = vadd.f32 %v2539, 1.0
        %v2575 = vadd.f32 %v2541, 1.0
        %v2576 = vadd.f32 %v2543, 1.0
        %v2577 = vadd.f32 %v2545, 1.0
        %v2578 = vrcp.pop %v2546
        %v2579 = vrcp.pop %v2547
        %v2580 = vrcp.pop %v2548
        %v2581 = vrcp.pop %v2549
        %v2582 = vrcp.pop %v2550
        %v2583 = vrcp.pop %v2551
        %v2584 = vrcp.pop %v2552
        %v2585 = vrcp.pop %v2553
        %v2586 = vrcp.pop %v2554
        %v2587 = vrcp.pop %v2555
        %v2588 = vrcp.pop %v2556
        %v2589 = vrcp.pop %v2557
        %v2590 = vrcp.pop %v2558
        %v2591 = vrcp.pop %v2559
        %v2592 = vrcp.pop %v2560
        %v2593 = vrcp.pop %v2561
        %v2594 = vrcp.pop %v2562
        %v2595 = vrcp.pop %v2563
        %v2596 = vrcp.pop %v2564
        %v2597 = vrcp.pop %v2565
        %v2598 = vrcp.pop %v2566
        %v2599 = vrcp.pop %v2567
        %v2600 = vrcp.pop %v2568
        %v2601 = vrcp.pop %v2569
        %v2602 = vrcp.pop %v2570
        %v2603 = vrcp.pop %v2571
        %v2604 = vrcp.pop %v2572
        %v2605 = vrcp.pop %v2573
        %v2606 = vrcp.pop %v2574
        %v2607 = vrcp.pop %v2575
        %v2608 = vrcp.pop %v2576
        %v2609 = vrcp.pop %v2577
        %v2610 = vmul.f32 %v2579, 2.0
        %v2611 = vmul.f32 %v2581, 2.0
        %v2612 = vmul.f32 %v2583, 2.0
        %v2613 = vmul.f32 %v2585, 2.0
        %v2614 = vmul.f32 %v2587, 2.0
        %v2615 = vmul.f32 %v2589, 2.0
        %v2616 = vmul.f32 %v2591, 2.0
        %v2617 = vmul.f32 %v2593, 2.0
        %v2618 = vmul.f32 %v2595, 2.0
        %v2619 = vmul.f32 %v2597, 2.0
        %v2620 = vmul.f32 %v2599, 2.0
        %v2621 = vmul.f32 %v2601, 2.0
        %v2622 = vmul.f32 %v2603, 2.0
        %v2623 = vmul.f32 %v2605, 2.0
        %v2624 = vmul.f32 %v2607, 2.0
        %v2625 = vmul.f32 %v2609, 2.0
        %v2626 = vsub.f32 %v2610, 1.0
        %v2627 = vsub.f32 %v2611, 1.0
        %v2628 = vsub.f32 %v2612, 1.0
        %v2629 = vsub.f32 %v2613, 1.0
        %v2630 = vsub.f32 %v2614, 1.0
        %v2631 = vsub.f32 %v2615, 1.0
        %v2632 = vsub.f32 %v2616, 1.0
        %v2633 = vsub.f32 %v2617, 1.0
        %v2634 = vsub.f32 %v2618, 1.0
        %v2635 = vsub.f32 %v2619, 1.0
        %v2636 = vsub.f32 %v2620, 1.0
        %v2637 = vsub.f32 %v2621, 1.0
        %v2638 = vsub.f32 %v2622, 1.0
        %v2639 = vsub.f32 %v2623, 1.0
        %v2640 = vsub.f32 %v2624, 1.0
        %v2641 = vsub.f32 %v2625, 1.0
        %v2642 = vmul.f32 %v2578, %v2201
        %v2643 = vmul.f32 %v2580, %v2202
        %v2644 = vmul.f32 %v2582, %v2203
        %v2645 = vmul.f32 %v2584, %v2204
        %v2646 = vmul.f32 %v2586, %v2205
        %v2647 = vmul.f32 %v2588, %v2206
        %v2648 = vmul.f32 %v2590, %v2207
        %v2649 = vmul.f32 %v2592, %v2208
        %v2650 = vmul.f32 %v2594, %v2209
        %v2651 = vmul.f32 %v2596, %v2210
        %v2652 = vmul.f32 %v2598, %v2211
        %v2653 = vmul.f32 %v2600, %v2212
        %v2654 = vmul.f32 %v2602, %v2213
        %v2655 = vmul.f32 %v2604, %v2214
        %v2656 = vmul.f32 %v2606, %v2215
        %v2657 = vmul.f32 %v2608, %v2216
        %v2658 = vmul.f32 %v2578, %v2626
        %v2659 = vmul.f32 %v2580, %v2627
        %v2660 = vmul.f32 %v2582, %v2628
        %v2661 = vmul.f32 %v2584, %v2629
        %v2662 = vmul.f32 %v2586, %v2630
        %v2663 = vmul.f32 %v2588, %v2631
        %v2664 = vmul.f32 %v2590, %v2632
        %v2665 = vmul.f32 %v2592, %v2633
        %v2666 = vmul.f32 %v2594, %v2634
        %v2667 = vmul.f32 %v2596, %v2635
        %v2668 = vmul.f32 %v2598, %v2636
        %v2669 = vmul.f32 %v2600, %v2637
        %v2670 = vmul.f32 %v2602, %v2638
        %v2671 = vmul.f32 %v2604, %v2639
        %v2672 = vmul.f32 %v2606, %v2640
        %v2673 = vmul.f32 %v2608, %v2641
        %2690 = vrot.lane.b32.xlu0 %v2658, 64
        %v2691 = vpop.permute.xlu0 %2690
        %2692 = vrot.lane.b32.xlu0 %v2659, 64
        %v2693 = vpop.permute.xlu0 %2692
        %2694 = vrot.lane.b32.xlu0 %v2660, 64
        %v2695 = vpop.permute.xlu0 %2694
        %2696 = vrot.lane.b32.xlu0 %v2661, 64
        %v2697 = vpop.permute.xlu0 %2696
        %2698 = vrot.lane.b32.xlu0 %v2662, 64
        %v2699 = vpop.permute.xlu0 %2698
        %2700 = vrot.lane.b32.xlu0 %v2663, 64
        %v2701 = vpop.permute.xlu0 %2700
        %2702 = vrot.lane.b32.xlu0 %v2664, 64
        %v2703 = vpop.permute.xlu0 %2702
        %2704 = vrot.lane.b32.xlu0 %v2665, 64
        %v2705 = vpop.permute.xlu0 %2704
        %2706 = vrot.lane.b32.xlu0 %v2666, 64
        %v2707 = vpop.permute.xlu0 %2706
        %2708 = vrot.lane.b32.xlu0 %v2667, 64
        %v2709 = vpop.permute.xlu0 %2708
        %2710 = vrot.lane.b32.xlu0 %v2668, 64
        %v2711 = vpop.permute.xlu0 %2710
        %2712 = vrot.lane.b32.xlu0 %v2669, 64
        %v2713 = vpop.permute.xlu0 %2712
        %2714 = vrot.lane.b32.xlu0 %v2670, 64
        %v2715 = vpop.permute.xlu0 %2714
        %2716 = vrot.lane.b32.xlu0 %v2671, 64
        %v2717 = vpop.permute.xlu0 %2716
        %2718 = vrot.lane.b32.xlu0 %v2672, 64
        %v2719 = vpop.permute.xlu0 %2718
        %2720 = vrot.lane.b32.xlu0 %v2673, 64
        %v2721 = vpop.permute.xlu0 %2720
        %v2738 = vadd.f32 %v2642, %v2691
        %v2739 = vadd.f32 %v2643, %v2693
        %v2740 = vadd.f32 %v2644, %v2695
        %v2741 = vadd.f32 %v2645, %v2697
        %v2742 = vadd.f32 %v2646, %v2699
        %v2743 = vadd.f32 %v2647, %v2701
        %v2744 = vadd.f32 %v2648, %v2703
        %v2745 = vadd.f32 %v2649, %v2705
        %v2746 = vadd.f32 %v2650, %v2707
        %v2747 = vadd.f32 %v2651, %v2709
        %v2748 = vadd.f32 %v2652, %v2711
        %v2749 = vadd.f32 %v2653, %v2713
        %v2750 = vadd.f32 %v2654, %v2715
        %v2751 = vadd.f32 %v2655, %v2717
        %v2752 = vadd.f32 %v2656, %v2719
        %v2753 = vadd.f32 %v2657, %v2721
        %v2754 = vtanh.pop %v2738
        %v2755 = vtanh.pop %v2739
        %v2756 = vtanh.pop %v2740
        %v2757 = vtanh.pop %v2741
        %v2758 = vtanh.pop %v2742
        %v2759 = vtanh.pop %v2743
        %v2760 = vtanh.pop %v2744
        %v2761 = vtanh.pop %v2745
        %v2762 = vtanh.pop %v2746
        %v2763 = vtanh.pop %v2747
        %v2764 = vtanh.pop %v2748
        %v2765 = vtanh.pop %v2749
        %v2766 = vtanh.pop %v2750
        %v2767 = vtanh.pop %v2751
        %v2768 = vtanh.pop %v2752
        %v2769 = vtanh.pop %v2753
        %v2770 = vmul.f32 %v2579, %v2754
        %v2771 = vmul.f32 %v2581, %v2755
        %v2772 = vmul.f32 %v2583, %v2756
        %v2773 = vmul.f32 %v2585, %v2757
        %v2774 = vmul.f32 %v2587, %v2758
        %v2775 = vmul.f32 %v2589, %v2759
        %v2776 = vmul.f32 %v2591, %v2760
        %v2777 = vmul.f32 %v2593, %v2761
        %v2778 = vmul.f32 %v2595, %v2762
        %v2779 = vmul.f32 %v2597, %v2763
        %v2780 = vmul.f32 %v2599, %v2764
        %v2781 = vmul.f32 %v2601, %v2765
        %v2782 = vmul.f32 %v2603, %v2766
        %v2783 = vmul.f32 %v2605, %v2767
        %v2784 = vmul.f32 %v2607, %v2768
        %v2785 = vmul.f32 %v2609, %v2769
        %v2786 = vpack.c.bf16 %v2771, %v2770
        %v2787 = vpack.c.bf16 %v2773, %v2772
        %v2788 = vpack.c.bf16 %v2775, %v2774
        %v2789 = vpack.c.bf16 %v2777, %v2776
        %v2790 = vpack.c.bf16 %v2779, %v2778
        %v2791 = vpack.c.bf16 %v2781, %v2780
        %v2792 = vpack.c.bf16 %v2783, %v2782
        %v2793 = vpack.c.bf16 %v2785, %v2784
        %2802 = vrot.lane.b32.xlu0 %v2786, 64
        %v2803 = vpop.permute.xlu0 %2802
        %2804 = vrot.lane.b32.xlu0 %v2787, 64
        %v2805 = vpop.permute.xlu0 %2804
        %2806 = vrot.lane.b32.xlu0 %v2788, 64
        %v2807 = vpop.permute.xlu0 %2806
        %2808 = vrot.lane.b32.xlu0 %v2789, 64
        %v2809 = vpop.permute.xlu0 %2808
        %2810 = vrot.lane.b32.xlu0 %v2790, 64
        %v2811 = vpop.permute.xlu0 %2810
        %2812 = vrot.lane.b32.xlu0 %v2791, 64
        %v2813 = vpop.permute.xlu0 %2812
        %2814 = vrot.lane.b32.xlu0 %v2792, 64
        %v2815 = vpop.permute.xlu0 %2814
        %2816 = vrot.lane.b32.xlu0 %v2793, 64
        %v2817 = vpop.permute.xlu0 %2816
        %v2819 = vsel %vm1227, %v2803, 0
        %v2822 = vsel %vm1227, %v2805, 0
        %v2825 = vsel %vm1227, %v2807, 0
        %v2828 = vsel %vm1227, %v2809, 0
        %v2831 = vsel %vm1227, %v2811, 0
        %v2834 = vsel %vm1227, %v2813, 0
        %v2837 = vsel %vm1227, %v2815, 0
        %v2840 = vsel %vm1227, %v2817, 0
        %2842 = vmatprep.subr.bf16.mxu0 0
        %2843 = vmatpush1.bf16.msra.mxu0 0
        %2844 = vmatprep.subr.bf16.mxu0 0
        %2845 = vmatpush1.bf16.msra.mxu0 0
        %2846 = vmatprep.subr.bf16.mxu0 0
        %2847 = vmatpush1.bf16.msra.mxu0 0
        %2848 = vmatprep.subr.bf16.mxu0 0
        %2849 = vmatpush1.bf16.msra.mxu0 0
        %2850 = vmatprep.subr.bf16.mxu0 %v1218
        %2851 = vmatpush1.bf16.msra.mxu0 %v1217
        %2852 = vmatprep.subr.bf16.mxu0 %v1216
        %2853 = vmatpush1.bf16.msra.mxu0 %v1215
        %2854 = vmatprep.subr.bf16.mxu0 %v1214
        %2855 = vmatpush1.bf16.msra.mxu0 %v1213
        %2856 = vmatprep.subr.bf16.mxu0 %v1212
        %2857 = vmatpush1.bf16.msra.mxu0 %v1211
        %2858 = vmatprep.subr.bf16.mxu0 0
        %2859 = vmatpush2.bf16.msra.mxu0 0
        %2860 = vmatprep.subr.bf16.mxu0 0
        %2861 = vmatpush2.bf16.msra.mxu0 0
        %2862 = vmatprep.subr.bf16.mxu0 0
        %2863 = vmatpush2.bf16.msra.mxu0 0
        %2864 = vmatprep.subr.bf16.mxu0 0
        %2865 = vmatpush2.bf16.msra.mxu0 0
        %2866 = vmatprep.subr.bf16.mxu0 0
        %2867 = vmatpush2.bf16.msra.mxu0 0
        %2868 = vmatprep.subr.bf16.mxu0 0
        %2869 = vmatpush2.bf16.msra.mxu0 0
        %2870 = vmatprep.subr.bf16.mxu0 0
        %2871 = vmatpush2.bf16.msra.mxu0 0
        %2872 = vmatprep.subr.bf16.mxu0 0
        %2873 = vmatpush2.bf16.msra.mxu0 0
        %2874 = vmatprep.mubr.bf16.mxu0 0
        %2875 = vmatmul.mubr.bf16.gmra.mxu0 %v2819
        %v2876 = vpop.f32.mrf.mxu0
        %v2877 = vadd.f32 0.0, %v2876
        %v2878 = vpop.f32.mrf.mxu0
        %v2879 = vadd.f32 0.0, %v2878
        %v2880 = vpop.f32.mrf.mxu0
        %v2881 = vadd.f32 0.0, %v2880
        %v2882 = vpop.f32.mrf.mxu0
        %v2883 = vadd.f32 0.0, %v2882
        %2884 = vmatprep.mubr.bf16.mxu0 0
        %2885 = vmatmul.mubr.bf16.gmra.mxu0 %v2822
        %v2886 = vpop.f32.mrf.mxu0
        %v2887 = vadd.f32 0.0, %v2886
        %v2888 = vpop.f32.mrf.mxu0
        %v2889 = vadd.f32 0.0, %v2888
        %v2890 = vpop.f32.mrf.mxu0
        %v2891 = vadd.f32 0.0, %v2890
        %v2892 = vpop.f32.mrf.mxu0
        %v2893 = vadd.f32 0.0, %v2892
        %2894 = vmatprep.mubr.bf16.mxu0 0
        %2895 = vmatmul.mubr.bf16.gmra.mxu0 %v2825
        %v2896 = vpop.f32.mrf.mxu0
        %v2897 = vadd.f32 0.0, %v2896
        %v2898 = vpop.f32.mrf.mxu0
        %v2899 = vadd.f32 0.0, %v2898
        %v2900 = vpop.f32.mrf.mxu0
        %v2901 = vadd.f32 0.0, %v2900
        %v2902 = vpop.f32.mrf.mxu0
        %v2903 = vadd.f32 0.0, %v2902
        %2904 = vmatprep.mubr.bf16.mxu0 0
        %2905 = vmatmul.mubr.bf16.gmra.mxu0 %v2828
        %v2906 = vpop.f32.mrf.mxu0
        %v2907 = vadd.f32 0.0, %v2906
        %v2908 = vpop.f32.mrf.mxu0
        %v2909 = vadd.f32 0.0, %v2908
        %v2910 = vpop.f32.mrf.mxu0
        %v2911 = vadd.f32 0.0, %v2910
        %v2912 = vpop.f32.mrf.mxu0
        %v2913 = vadd.f32 0.0, %v2912
        %2914 = vmatprep.mubr.bf16.mxu0 0
        %2915 = vmatmul.mubr.bf16.gmra.mxu0 %v2831
        %v2916 = vpop.f32.mrf.mxu0
        %v2917 = vadd.f32 0.0, %v2916
        %v2918 = vpop.f32.mrf.mxu0
        %v2919 = vadd.f32 0.0, %v2918
        %v2920 = vpop.f32.mrf.mxu0
        %v2921 = vadd.f32 0.0, %v2920
        %v2922 = vpop.f32.mrf.mxu0
        %v2923 = vadd.f32 0.0, %v2922
        %2924 = vmatprep.mubr.bf16.mxu0 0
        %2925 = vmatmul.mubr.bf16.gmra.mxu0 %v2834
        %v2926 = vpop.f32.mrf.mxu0
        %v2927 = vadd.f32 0.0, %v2926
        %v2928 = vpop.f32.mrf.mxu0
        %v2929 = vadd.f32 0.0, %v2928
        %v2930 = vpop.f32.mrf.mxu0
        %v2931 = vadd.f32 0.0, %v2930
        %v2932 = vpop.f32.mrf.mxu0
        %v2933 = vadd.f32 0.0, %v2932
        %2934 = vmatprep.mubr.bf16.mxu0 0
        %2935 = vmatmul.mubr.bf16.gmra.mxu0 %v2837
        %v2936 = vpop.f32.mrf.mxu0
        %v2937 = vadd.f32 0.0, %v2936
        %v2938 = vpop.f32.mrf.mxu0
        %v2939 = vadd.f32 0.0, %v2938
        %v2940 = vpop.f32.mrf.mxu0
        %v2941 = vadd.f32 0.0, %v2940
        %v2942 = vpop.f32.mrf.mxu0
        %v2943 = vadd.f32 0.0, %v2942
        %2944 = vmatprep.mubr.bf16.mxu0 0
        %2945 = vmatmul.mubr.bf16.gmra.mxu0 %v2840
        %v2946 = vpop.f32.mrf.mxu0
        %v2947 = vadd.f32 0.0, %v2946
        %v2948 = vpop.f32.mrf.mxu0
        %v2949 = vadd.f32 0.0, %v2948
        %v2950 = vpop.f32.mrf.mxu0
        %v2951 = vadd.f32 0.0, %v2950
        %v2952 = vpop.f32.mrf.mxu0
        %v2953 = vadd.f32 0.0, %v2952
        %2954 = vdwg.mxu0
        %v2955 = vadd.f32 %v1101, %v2877
        %v2956 = vadd.f32 %v1103, %v2879
        %v2957 = vadd.f32 %v1105, %v2881
        %v2958 = vadd.f32 %v1107, %v2883
        %v2959 = vadd.f32 %v1111, %v2887
        %v2960 = vadd.f32 %v1113, %v2889
        %v2961 = vadd.f32 %v1115, %v2891
        %v2962 = vadd.f32 %v1117, %v2893
        %v2963 = vadd.f32 %v1121, %v2897
        %v2964 = vadd.f32 %v1123, %v2899
        %v2965 = vadd.f32 %v1125, %v2901
        %v2966 = vadd.f32 %v1127, %v2903
        %v2967 = vadd.f32 %v1131, %v2907
        %v2968 = vadd.f32 %v1133, %v2909
        %v2969 = vadd.f32 %v1135, %v2911
        %v2970 = vadd.f32 %v1137, %v2913
        %v2971 = vadd.f32 %v1141, %v2917
        %v2972 = vadd.f32 %v1143, %v2919
        %v2973 = vadd.f32 %v1145, %v2921
        %v2974 = vadd.f32 %v1147, %v2923
        %v2975 = vadd.f32 %v1151, %v2927
        %v2976 = vadd.f32 %v1153, %v2929
        %v2977 = vadd.f32 %v1155, %v2931
        %v2978 = vadd.f32 %v1157, %v2933
        %v2979 = vadd.f32 %v1161, %v2937
        %v2980 = vadd.f32 %v1163, %v2939
        %v2981 = vadd.f32 %v1165, %v2941
        %v2982 = vadd.f32 %v1167, %v2943
        %v2983 = vadd.f32 %v1171, %v2947
        %v2984 = vadd.f32 %v1173, %v2949
        %v2985 = vadd.f32 %v1175, %v2951
        %v2986 = vadd.f32 %v1177, %v2953
        %v2987 = vsub.f32 0.0, %v2955
        %v2988 = vsub.f32 0.0, %v2956
        %v2989 = vsub.f32 0.0, %v2957
        %v2990 = vsub.f32 0.0, %v2958
        %v2991 = vsub.f32 0.0, %v2959
        %v2992 = vsub.f32 0.0, %v2960
        %v2993 = vsub.f32 0.0, %v2961
        %v2994 = vsub.f32 0.0, %v2962
        %v2995 = vsub.f32 0.0, %v2963
        %v2996 = vsub.f32 0.0, %v2964
        %v2997 = vsub.f32 0.0, %v2965
        %v2998 = vsub.f32 0.0, %v2966
        %v2999 = vsub.f32 0.0, %v2967
        %v3000 = vsub.f32 0.0, %v2968
        %v3001 = vsub.f32 0.0, %v2969
        %v3002 = vsub.f32 0.0, %v2970
        %v3003 = vsub.f32 0.0, %v2971
        %v3004 = vsub.f32 0.0, %v2972
        %v3005 = vsub.f32 0.0, %v2973
        %v3006 = vsub.f32 0.0, %v2974
        %v3007 = vsub.f32 0.0, %v2975
        %v3008 = vsub.f32 0.0, %v2976
        %v3009 = vsub.f32 0.0, %v2977
        %v3010 = vsub.f32 0.0, %v2978
        %v3011 = vsub.f32 0.0, %v2979
        %v3012 = vsub.f32 0.0, %v2980
        %v3013 = vsub.f32 0.0, %v2981
        %v3014 = vsub.f32 0.0, %v2982
        %v3015 = vsub.f32 0.0, %v2983
        %v3016 = vsub.f32 0.0, %v2984
        %v3017 = vsub.f32 0.0, %v2985
        %v3018 = vsub.f32 0.0, %v2986
        %v3019 = vmul.f32 %v2987, 1.442695
        %v3020 = vpow.pop %v3019
        %v3021 = vmul.f32 %v2988, 1.442695
        %v3022 = vpow.pop %v3021
        %v3023 = vmul.f32 %v2989, 1.442695
        %v3024 = vpow.pop %v3023
        %v3025 = vmul.f32 %v2990, 1.442695
        %v3026 = vpow.pop %v3025
        %v3027 = vmul.f32 %v2991, 1.442695
        %v3028 = vpow.pop %v3027
        %v3029 = vmul.f32 %v2992, 1.442695
        %v3030 = vpow.pop %v3029
        %v3031 = vmul.f32 %v2993, 1.442695
        %v3032 = vpow.pop %v3031
        %v3033 = vmul.f32 %v2994, 1.442695
        %v3034 = vpow.pop %v3033
        %v3035 = vmul.f32 %v2995, 1.442695
        %v3036 = vpow.pop %v3035
        %v3037 = vmul.f32 %v2996, 1.442695
        %v3038 = vpow.pop %v3037
        %v3039 = vmul.f32 %v2997, 1.442695
        %v3040 = vpow.pop %v3039
        %v3041 = vmul.f32 %v2998, 1.442695
        %v3042 = vpow.pop %v3041
        %v3043 = vmul.f32 %v2999, 1.442695
        %v3044 = vpow.pop %v3043
        %v3045 = vmul.f32 %v3000, 1.442695
        %v3046 = vpow.pop %v3045
        %v3047 = vmul.f32 %v3001, 1.442695
        %v3048 = vpow.pop %v3047
        %v3049 = vmul.f32 %v3002, 1.442695
        %v3050 = vpow.pop %v3049
        %v3051 = vmul.f32 %v3003, 1.442695
        %v3052 = vpow.pop %v3051
        %v3053 = vmul.f32 %v3004, 1.442695
        %v3054 = vpow.pop %v3053
        %v3055 = vmul.f32 %v3005, 1.442695
        %v3056 = vpow.pop %v3055
        %v3057 = vmul.f32 %v3006, 1.442695
        %v3058 = vpow.pop %v3057
        %v3059 = vmul.f32 %v3007, 1.442695
        %v3060 = vpow.pop %v3059
        %v3061 = vmul.f32 %v3008, 1.442695
        %v3062 = vpow.pop %v3061
        %v3063 = vmul.f32 %v3009, 1.442695
        %v3064 = vpow.pop %v3063
        %v3065 = vmul.f32 %v3010, 1.442695
        %v3066 = vpow.pop %v3065
        %v3067 = vmul.f32 %v3011, 1.442695
        %v3068 = vpow.pop %v3067
        %v3069 = vmul.f32 %v3012, 1.442695
        %v3070 = vpow.pop %v3069
        %v3071 = vmul.f32 %v3013, 1.442695
        %v3072 = vpow.pop %v3071
        %v3073 = vmul.f32 %v3014, 1.442695
        %v3074 = vpow.pop %v3073
        %v3075 = vmul.f32 %v3015, 1.442695
        %v3076 = vpow.pop %v3075
        %v3077 = vmul.f32 %v3016, 1.442695
        %v3078 = vpow.pop %v3077
        %v3079 = vmul.f32 %v3017, 1.442695
        %v3080 = vpow.pop %v3079
        %v3081 = vmul.f32 %v3018, 1.442695
        %v3082 = vpow.pop %v3081
        %v3083 = vadd.f32 %v3020, 1.0
        %v3084 = vadd.f32 %v3022, 1.0
        %v3085 = vadd.f32 %v3024, 1.0
        %v3086 = vadd.f32 %v3026, 1.0
        %v3087 = vadd.f32 %v3028, 1.0
        %v3088 = vadd.f32 %v3030, 1.0
        %v3089 = vadd.f32 %v3032, 1.0
        %v3090 = vadd.f32 %v3034, 1.0
        %v3091 = vadd.f32 %v3036, 1.0
        %v3092 = vadd.f32 %v3038, 1.0
        %v3093 = vadd.f32 %v3040, 1.0
        %v3094 = vadd.f32 %v3042, 1.0
        %v3095 = vadd.f32 %v3044, 1.0
        %v3096 = vadd.f32 %v3046, 1.0
        %v3097 = vadd.f32 %v3048, 1.0
        %v3098 = vadd.f32 %v3050, 1.0
        %v3099 = vadd.f32 %v3052, 1.0
        %v3100 = vadd.f32 %v3054, 1.0
        %v3101 = vadd.f32 %v3056, 1.0
        %v3102 = vadd.f32 %v3058, 1.0
        %v3103 = vadd.f32 %v3060, 1.0
        %v3104 = vadd.f32 %v3062, 1.0
        %v3105 = vadd.f32 %v3064, 1.0
        %v3106 = vadd.f32 %v3066, 1.0
        %v3107 = vadd.f32 %v3068, 1.0
        %v3108 = vadd.f32 %v3070, 1.0
        %v3109 = vadd.f32 %v3072, 1.0
        %v3110 = vadd.f32 %v3074, 1.0
        %v3111 = vadd.f32 %v3076, 1.0
        %v3112 = vadd.f32 %v3078, 1.0
        %v3113 = vadd.f32 %v3080, 1.0
        %v3114 = vadd.f32 %v3082, 1.0
        %v3115 = vrcp.pop %v3083
        %v3116 = vrcp.pop %v3084
        %v3117 = vrcp.pop %v3085
        %v3118 = vrcp.pop %v3086
        %v3119 = vrcp.pop %v3087
        %v3120 = vrcp.pop %v3088
        %v3121 = vrcp.pop %v3089
        %v3122 = vrcp.pop %v3090
        %v3123 = vrcp.pop %v3091
        %v3124 = vrcp.pop %v3092
        %v3125 = vrcp.pop %v3093
        %v3126 = vrcp.pop %v3094
        %v3127 = vrcp.pop %v3095
        %v3128 = vrcp.pop %v3096
        %v3129 = vrcp.pop %v3097
        %v3130 = vrcp.pop %v3098
        %v3131 = vrcp.pop %v3099
        %v3132 = vrcp.pop %v3100
        %v3133 = vrcp.pop %v3101
        %v3134 = vrcp.pop %v3102
        %v3135 = vrcp.pop %v3103
        %v3136 = vrcp.pop %v3104
        %v3137 = vrcp.pop %v3105
        %v3138 = vrcp.pop %v3106
        %v3139 = vrcp.pop %v3107
        %v3140 = vrcp.pop %v3108
        %v3141 = vrcp.pop %v3109
        %v3142 = vrcp.pop %v3110
        %v3143 = vrcp.pop %v3111
        %v3144 = vrcp.pop %v3112
        %v3145 = vrcp.pop %v3113
        %v3146 = vrcp.pop %v3114
        %v3147 = vmul.f32 %v3116, 2.0
        %v3148 = vmul.f32 %v3118, 2.0
        %v3149 = vmul.f32 %v3120, 2.0
        %v3150 = vmul.f32 %v3122, 2.0
        %v3151 = vmul.f32 %v3124, 2.0
        %v3152 = vmul.f32 %v3126, 2.0
        %v3153 = vmul.f32 %v3128, 2.0
        %v3154 = vmul.f32 %v3130, 2.0
        %v3155 = vmul.f32 %v3132, 2.0
        %v3156 = vmul.f32 %v3134, 2.0
        %v3157 = vmul.f32 %v3136, 2.0
        %v3158 = vmul.f32 %v3138, 2.0
        %v3159 = vmul.f32 %v3140, 2.0
        %v3160 = vmul.f32 %v3142, 2.0
        %v3161 = vmul.f32 %v3144, 2.0
        %v3162 = vmul.f32 %v3146, 2.0
        %v3163 = vsub.f32 %v3147, 1.0
        %v3164 = vsub.f32 %v3148, 1.0
        %v3165 = vsub.f32 %v3149, 1.0
        %v3166 = vsub.f32 %v3150, 1.0
        %v3167 = vsub.f32 %v3151, 1.0
        %v3168 = vsub.f32 %v3152, 1.0
        %v3169 = vsub.f32 %v3153, 1.0
        %v3170 = vsub.f32 %v3154, 1.0
        %v3171 = vsub.f32 %v3155, 1.0
        %v3172 = vsub.f32 %v3156, 1.0
        %v3173 = vsub.f32 %v3157, 1.0
        %v3174 = vsub.f32 %v3158, 1.0
        %v3175 = vsub.f32 %v3159, 1.0
        %v3176 = vsub.f32 %v3160, 1.0
        %v3177 = vsub.f32 %v3161, 1.0
        %v3178 = vsub.f32 %v3162, 1.0
        %v3179 = vmul.f32 %v3115, %v2738
        %v3180 = vmul.f32 %v3117, %v2739
        %v3181 = vmul.f32 %v3119, %v2740
        %v3182 = vmul.f32 %v3121, %v2741
        %v3183 = vmul.f32 %v3123, %v2742
        %v3184 = vmul.f32 %v3125, %v2743
        %v3185 = vmul.f32 %v3127, %v2744
        %v3186 = vmul.f32 %v3129, %v2745
        %v3187 = vmul.f32 %v3131, %v2746
        %v3188 = vmul.f32 %v3133, %v2747
        %v3189 = vmul.f32 %v3135, %v2748
        %v3190 = vmul.f32 %v3137, %v2749
        %v3191 = vmul.f32 %v3139, %v2750
        %v3192 = vmul.f32 %v3141, %v2751
        %v3193 = vmul.f32 %v3143, %v2752
        %v3194 = vmul.f32 %v3145, %v2753
        %v3195 = vmul.f32 %v3115, %v3163
        %v3196 = vmul.f32 %v3117, %v3164
        %v3197 = vmul.f32 %v3119, %v3165
        %v3198 = vmul.f32 %v3121, %v3166
        %v3199 = vmul.f32 %v3123, %v3167
        %v3200 = vmul.f32 %v3125, %v3168
        %v3201 = vmul.f32 %v3127, %v3169
        %v3202 = vmul.f32 %v3129, %v3170
        %v3203 = vmul.f32 %v3131, %v3171
        %v3204 = vmul.f32 %v3133, %v3172
        %v3205 = vmul.f32 %v3135, %v3173
        %v3206 = vmul.f32 %v3137, %v3174
        %v3207 = vmul.f32 %v3139, %v3175
        %v3208 = vmul.f32 %v3141, %v3176
        %v3209 = vmul.f32 %v3143, %v3177
        %v3210 = vmul.f32 %v3145, %v3178
        %3227 = vrot.lane.b32.xlu0 %v3195, 64
        %v3228 = vpop.permute.xlu0 %3227
        %3229 = vrot.lane.b32.xlu0 %v3196, 64
        %v3230 = vpop.permute.xlu0 %3229
        %3231 = vrot.lane.b32.xlu0 %v3197, 64
        %v3232 = vpop.permute.xlu0 %3231
        %3233 = vrot.lane.b32.xlu0 %v3198, 64
        %v3234 = vpop.permute.xlu0 %3233
        %3235 = vrot.lane.b32.xlu0 %v3199, 64
        %v3236 = vpop.permute.xlu0 %3235
        %3237 = vrot.lane.b32.xlu0 %v3200, 64
        %v3238 = vpop.permute.xlu0 %3237
        %3239 = vrot.lane.b32.xlu0 %v3201, 64
        %v3240 = vpop.permute.xlu0 %3239
        %3241 = vrot.lane.b32.xlu0 %v3202, 64
        %v3242 = vpop.permute.xlu0 %3241
        %3243 = vrot.lane.b32.xlu0 %v3203, 64
        %v3244 = vpop.permute.xlu0 %3243
        %3245 = vrot.lane.b32.xlu0 %v3204, 64
        %v3246 = vpop.permute.xlu0 %3245
        %3247 = vrot.lane.b32.xlu0 %v3205, 64
        %v3248 = vpop.permute.xlu0 %3247
        %3249 = vrot.lane.b32.xlu0 %v3206, 64
        %v3250 = vpop.permute.xlu0 %3249
        %3251 = vrot.lane.b32.xlu0 %v3207, 64
        %v3252 = vpop.permute.xlu0 %3251
        %3253 = vrot.lane.b32.xlu0 %v3208, 64
        %v3254 = vpop.permute.xlu0 %3253
        %3255 = vrot.lane.b32.xlu0 %v3209, 64
        %v3256 = vpop.permute.xlu0 %3255
        %3257 = vrot.lane.b32.xlu0 %v3210, 64
        %v3258 = vpop.permute.xlu0 %3257
        %v3275 = vadd.f32 %v3179, %v3228
        %v3276 = vadd.f32 %v3180, %v3230
        %v3277 = vadd.f32 %v3181, %v3232
        %v3278 = vadd.f32 %v3182, %v3234
        %v3279 = vadd.f32 %v3183, %v3236
        %v3280 = vadd.f32 %v3184, %v3238
        %v3281 = vadd.f32 %v3185, %v3240
        %v3282 = vadd.f32 %v3186, %v3242
        %v3283 = vadd.f32 %v3187, %v3244
        %v3284 = vadd.f32 %v3188, %v3246
        %v3285 = vadd.f32 %v3189, %v3248
        %v3286 = vadd.f32 %v3190, %v3250
        %v3287 = vadd.f32 %v3191, %v3252
        %v3288 = vadd.f32 %v3192, %v3254
        %v3289 = vadd.f32 %v3193, %v3256
        %v3290 = vadd.f32 %v3194, %v3258
        %v3291 = vtanh.pop %v3275
        %v3292 = vtanh.pop %v3276
        %v3293 = vtanh.pop %v3277
        %v3294 = vtanh.pop %v3278
        %v3295 = vtanh.pop %v3279
        %v3296 = vtanh.pop %v3280
        %v3297 = vtanh.pop %v3281
        %v3298 = vtanh.pop %v3282
        %v3299 = vtanh.pop %v3283
        %v3300 = vtanh.pop %v3284
        %v3301 = vtanh.pop %v3285
        %v3302 = vtanh.pop %v3286
        %v3303 = vtanh.pop %v3287
        %v3304 = vtanh.pop %v3288
        %v3305 = vtanh.pop %v3289
        %v3306 = vtanh.pop %v3290
        %v3307 = vmul.f32 %v3116, %v3291
        %v3308 = vmul.f32 %v3118, %v3292
        %v3309 = vmul.f32 %v3120, %v3293
        %v3310 = vmul.f32 %v3122, %v3294
        %v3311 = vmul.f32 %v3124, %v3295
        %v3312 = vmul.f32 %v3126, %v3296
        %v3313 = vmul.f32 %v3128, %v3297
        %v3314 = vmul.f32 %v3130, %v3298
        %v3315 = vmul.f32 %v3132, %v3299
        %v3316 = vmul.f32 %v3134, %v3300
        %v3317 = vmul.f32 %v3136, %v3301
        %v3318 = vmul.f32 %v3138, %v3302
        %v3319 = vmul.f32 %v3140, %v3303
        %v3320 = vmul.f32 %v3142, %v3304
        %v3321 = vmul.f32 %v3144, %v3305
        %v3322 = vmul.f32 %v3146, %v3306
        %v3323 = vpack.c.bf16 %v3308, %v3307
        %v3324 = vpack.c.bf16 %v3310, %v3309
        %v3325 = vpack.c.bf16 %v3312, %v3311
        %v3326 = vpack.c.bf16 %v3314, %v3313
        %v3327 = vpack.c.bf16 %v3316, %v3315
        %v3328 = vpack.c.bf16 %v3318, %v3317
        %v3329 = vpack.c.bf16 %v3320, %v3319
        %v3330 = vpack.c.bf16 %v3322, %v3321
        %v3331 = vld [vmem:[%s4] sm:$0xf]
        %v3332 = vld [vmem:[%s4 + $0x4] sm:$0xf]
        %v3333 = vld [vmem:[%s4 + $0x8] sm:$0xf]
        %v3334 = vld [vmem:[%s4 + $0xc] sm:$0xf]
        %v3335 = vld [vmem:[%s4 + $0x10] sm:$0xf]
        %v3336 = vld [vmem:[%s4 + $0x14] sm:$0xf]
        %v3337 = vld [vmem:[%s4 + $0x18] sm:$0xf]
        %v3338 = vld [vmem:[%s4 + $0x1c] sm:$0xf]
        %v3339 = vld [vmem:[%s5] sm:$0x1]
        %v3341 = vlaneseq
        %v3342 = vshrl.u32 %v3341, 7
        %v3343 = vsub.s32 0, %v3342
        %v3344 = vrot.slane %v3339, %v3343
        %3354 = vrot.lane.b32.xlu0 %v3323, 64
        %v3355 = vpop.permute.xlu0 %3354
        %3356 = vrot.lane.b32.xlu0 %v3324, 64
        %v3357 = vpop.permute.xlu0 %3356
        %3358 = vrot.lane.b32.xlu0 %v3325, 64
        %v3359 = vpop.permute.xlu0 %3358
        %3360 = vrot.lane.b32.xlu0 %v3326, 64
        %v3361 = vpop.permute.xlu0 %3360
        %3362 = vrot.lane.b32.xlu0 %v3327, 64
        %v3363 = vpop.permute.xlu0 %3362
        %3364 = vrot.lane.b32.xlu0 %v3328, 64
        %v3365 = vpop.permute.xlu0 %3364
        %3366 = vrot.lane.b32.xlu0 %v3329, 64
        %v3367 = vpop.permute.xlu0 %3366
        %3368 = vrot.lane.b32.xlu0 %v3330, 64
        %v3369 = vpop.permute.xlu0 %3368
        %v3378 = vunpack.c.l.b16 %v3331
        %v3379 = vunpack.c.l.b16 %v3332
        %v3380 = vunpack.c.l.b16 %v3333
        %v3381 = vunpack.c.l.b16 %v3334
        %v3382 = vunpack.c.l.b16 %v3335
        %v3383 = vunpack.c.l.b16 %v3336
        %v3384 = vunpack.c.l.b16 %v3337
        %v3385 = vunpack.c.l.b16 %v3338
        %v3386 = vpack.c.b16 %v3379, %v3378
        %v3387 = vpack.c.b16 %v3381, %v3380
        %v3388 = vpack.c.b16 %v3383, %v3382
        %v3389 = vpack.c.b16 %v3385, %v3384
        %v3395 = vsel %vm1227, %v3355, 0
        %v3398 = vsel %vm1227, %v3357, 0
        %v3401 = vsel %vm1227, %v3359, 0
        %v3404 = vsel %vm1227, %v3361, 0
        %v3407 = vsel %vm1227, %v3363, 0
        %v3410 = vsel %vm1227, %v3365, 0
        %v3413 = vsel %vm1227, %v3367, 0
        %v3416 = vsel %vm1227, %v3369, 0
        %3418 = vmatprep.subr.bf16.mxu0 0
        %3419 = vmatpush1.bf16.msra.mxu0 0
        %3420 = vmatprep.subr.bf16.mxu0 0
        %3421 = vmatpush1.bf16.msra.mxu0 0
        %3422 = vmatprep.subr.bf16.mxu0 0
        %3423 = vmatpush1.bf16.msra.mxu0 0
        %3424 = vmatprep.subr.bf16.mxu0 0
        %3425 = vmatpush1.bf16.msra.mxu0 0
        %3426 = vmatprep.subr.bf16.mxu0 0
        %3427 = vmatpush1.bf16.msra.mxu0 %v3389
        %3428 = vmatprep.subr.bf16.mxu0 0
        %3429 = vmatpush1.bf16.msra.mxu0 %v3388
        %3430 = vmatprep.subr.bf16.mxu0 0
        %3431 = vmatpush1.bf16.msra.mxu0 %v3387
        %3432 = vmatprep.subr.bf16.mxu0 0
        %3433 = vmatpush1.bf16.msra.mxu0 %v3386
        %3434 = vmatprep.subr.bf16.mxu0 0
        %3435 = vmatpush2.bf16.msra.mxu0 0
        %3436 = vmatprep.subr.bf16.mxu0 0
        %3437 = vmatpush2.bf16.msra.mxu0 0
        %3438 = vmatprep.subr.bf16.mxu0 0
        %3439 = vmatpush2.bf16.msra.mxu0 0
        %3440 = vmatprep.subr.bf16.mxu0 0
        %3441 = vmatpush2.bf16.msra.mxu0 0
        %3442 = vmatprep.subr.bf16.mxu0 0
        %3443 = vmatpush2.bf16.msra.mxu0 0
        %3444 = vmatprep.subr.bf16.mxu0 0
        %3445 = vmatpush2.bf16.msra.mxu0 0
        %3446 = vmatprep.subr.bf16.mxu0 0
        %3447 = vmatpush2.bf16.msra.mxu0 0
        %3448 = vmatprep.subr.bf16.mxu0 0
        %3449 = vmatpush2.bf16.msra.mxu0 0
        %3450 = vmatprep.mubr.bf16.mxu0 0
        %3451 = vmatmul.mubr.bf16.gmra.mxu0 %v3395
        %v3452 = vpop.f32.mrf.mxu0
        %v3453 = vadd.f32 %v3344, %v3452
        %v3454 = vpop.f32.mrf.mxu0
        %v3455 = vpop.f32.mrf.mxu0
        %v3456 = vadd.f32 %v3344, %v3455
        %v3457 = vpop.f32.mrf.mxu0
        %3458 = vmatprep.mubr.bf16.mxu0 0
        %3459 = vmatmul.mubr.bf16.gmra.mxu0 %v3398
        %v3460 = vpop.f32.mrf.mxu0
        %v3461 = vadd.f32 %v3344, %v3460
        %v3462 = vpop.f32.mrf.mxu0
        %v3463 = vpop.f32.mrf.mxu0
        %v3464 = vadd.f32 %v3344, %v3463
        %v3465 = vpop.f32.mrf.mxu0
        %3466 = vmatprep.mubr.bf16.mxu0 0
        %3467 = vmatmul.mubr.bf16.gmra.mxu0 %v3401
        %v3468 = vpop.f32.mrf.mxu0
        %v3469 = vadd.f32 %v3344, %v3468
        %v3470 = vpop.f32.mrf.mxu0
        %v3471 = vpop.f32.mrf.mxu0
        %v3472 = vadd.f32 %v3344, %v3471
        %v3473 = vpop.f32.mrf.mxu0
        %3474 = vmatprep.mubr.bf16.mxu0 0
        %3475 = vmatmul.mubr.bf16.gmra.mxu0 %v3404
        %v3476 = vpop.f32.mrf.mxu0
        %v3477 = vadd.f32 %v3344, %v3476
        %v3478 = vpop.f32.mrf.mxu0
        %v3479 = vpop.f32.mrf.mxu0
        %v3480 = vadd.f32 %v3344, %v3479
        %v3481 = vpop.f32.mrf.mxu0
        %3482 = vmatprep.mubr.bf16.mxu0 0
        %3483 = vmatmul.mubr.bf16.gmra.mxu0 %v3407
        %v3484 = vpop.f32.mrf.mxu0
        %v3485 = vadd.f32 %v3344, %v3484
        %v3486 = vpop.f32.mrf.mxu0
        %v3487 = vpop.f32.mrf.mxu0
        %v3488 = vadd.f32 %v3344, %v3487
        %v3489 = vpop.f32.mrf.mxu0
        %3490 = vmatprep.mubr.bf16.mxu0 0
        %3491 = vmatmul.mubr.bf16.gmra.mxu0 %v3410
        %v3492 = vpop.f32.mrf.mxu0
        %v3493 = vadd.f32 %v3344, %v3492
        %v3494 = vpop.f32.mrf.mxu0
        %v3495 = vpop.f32.mrf.mxu0
        %v3496 = vadd.f32 %v3344, %v3495
        %v3497 = vpop.f32.mrf.mxu0
        %3498 = vmatprep.mubr.bf16.mxu0 0
        %3499 = vmatmul.mubr.bf16.gmra.mxu0 %v3413
        %v3500 = vpop.f32.mrf.mxu0
        %v3501 = vadd.f32 %v3344, %v3500
        %v3502 = vpop.f32.mrf.mxu0
        %v3503 = vpop.f32.mrf.mxu0
        %v3504 = vadd.f32 %v3344, %v3503
        %v3505 = vpop.f32.mrf.mxu0
        %3506 = vmatprep.mubr.bf16.mxu0 0
        %3507 = vmatmul.mubr.bf16.gmra.mxu0 %v3416
        %v3508 = vpop.f32.mrf.mxu0
        %v3509 = vadd.f32 %v3344, %v3508
        %v3510 = vpop.f32.mrf.mxu0
        %v3511 = vpop.f32.mrf.mxu0
        %v3512 = vadd.f32 %v3344, %v3511
        %v3513 = vpop.f32.mrf.mxu0
        %3514 = vdwg.mxu0
        %v3515 = vmax.f32 %v3453, 0.0
        %v3516 = vmax.f32 %v3456, 0.0
        %v3517 = vmax.f32 %v3461, 0.0
        %v3518 = vmax.f32 %v3464, 0.0
        %v3519 = vmax.f32 %v3469, 0.0
        %v3520 = vmax.f32 %v3472, 0.0
        %v3521 = vmax.f32 %v3477, 0.0
        %v3522 = vmax.f32 %v3480, 0.0
        %v3523 = vmax.f32 %v3485, 0.0
        %v3524 = vmax.f32 %v3488, 0.0
        %v3525 = vmax.f32 %v3493, 0.0
        %v3526 = vmax.f32 %v3496, 0.0
        %v3527 = vmax.f32 %v3501, 0.0
        %v3528 = vmax.f32 %v3504, 0.0
        %v3529 = vmax.f32 %v3509, 0.0
        %v3530 = vmax.f32 %v3512, 0.0
        %v3531 = vpack.c.bf16 %v3516, %v3515
        %v3532 = vpack.c.bf16 %v3518, %v3517
        %v3533 = vpack.c.bf16 %v3520, %v3519
        %v3534 = vpack.c.bf16 %v3522, %v3521
        %v3535 = vpack.c.bf16 %v3524, %v3523
        %v3536 = vpack.c.bf16 %v3526, %v3525
        %v3537 = vpack.c.bf16 %v3528, %v3527
        %v3538 = vpack.c.bf16 %v3530, %v3529
        %v3539 = vld [vmem:[%s6] sm:$0xf]
        %v3540 = vld [vmem:[%s6 + $0x4] sm:$0xf]
        %v3541 = vld [vmem:[%s6 + $0x8] sm:$0xf]
        %v3542 = vld [vmem:[%s6 + $0xc] sm:$0xf]
        %v3543 = vld [vmem:[%s7] sm:$0x1]
        %v3545 = vlaneseq
        %v3546 = vshrl.u32 %v3545, 7
        %v3547 = vsub.s32 0, %v3546
        %v3548 = vrot.slane %v3543, %v3547
        %v3554 = vunpack.c.l.b16 %v3539
        %v3555 = vunpack.c.l.b16 %v3540
        %v3556 = vunpack.c.l.b16 %v3541
        %v3557 = vunpack.c.l.b16 %v3542
        %v3558 = vpack.c.b16 %v3555, %v3554
        %v3559 = vpack.c.b16 %v3557, %v3556
        %v3563 = vsel %vm729, %v3531, 0
        %v3566 = vsel %vm729, %v3532, 0
        %v3569 = vsel %vm729, %v3533, 0
        %v3572 = vsel %vm729, %v3534, 0
        %v3575 = vsel %vm729, %v3535, 0
        %v3578 = vsel %vm729, %v3536, 0
        %v3581 = vsel %vm729, %v3537, 0
        %v3584 = vsel %vm729, %v3538, 0
        %3586 = vmatprep.subr.bf16.mxu0 0
        %3587 = vmatpush1.bf16.msra.mxu0 0
        %3588 = vmatprep.subr.bf16.mxu0 0
        %3589 = vmatpush1.bf16.msra.mxu0 0
        %3590 = vmatprep.subr.bf16.mxu0 0
        %3591 = vmatpush1.bf16.msra.mxu0 0
        %3592 = vmatprep.subr.bf16.mxu0 0
        %3593 = vmatpush1.bf16.msra.mxu0 0
        %3594 = vmatprep.subr.bf16.mxu0 0
        %3595 = vmatpush1.bf16.msra.mxu0 0
        %3596 = vmatprep.subr.bf16.mxu0 0
        %3597 = vmatpush1.bf16.msra.mxu0 0
        %3598 = vmatprep.subr.bf16.mxu0 0
        %3599 = vmatpush1.bf16.msra.mxu0 %v3559
        %3600 = vmatprep.subr.bf16.mxu0 0
        %3601 = vmatpush1.bf16.msra.mxu0 %v3558
        %3602 = vmatprep.subr.bf16.mxu0 0
        %3603 = vmatpush2.bf16.msra.mxu0 0
        %3604 = vmatprep.subr.bf16.mxu0 0
        %3605 = vmatpush2.bf16.msra.mxu0 0
        %3606 = vmatprep.subr.bf16.mxu0 0
        %3607 = vmatpush2.bf16.msra.mxu0 0
        %3608 = vmatprep.subr.bf16.mxu0 0
        %3609 = vmatpush2.bf16.msra.mxu0 0
        %3610 = vmatprep.subr.bf16.mxu0 0
        %3611 = vmatpush2.bf16.msra.mxu0 0
        %3612 = vmatprep.subr.bf16.mxu0 0
        %3613 = vmatpush2.bf16.msra.mxu0 0
        %3614 = vmatprep.subr.bf16.mxu0 0
        %3615 = vmatpush2.bf16.msra.mxu0 0
        %3616 = vmatprep.subr.bf16.mxu0 0
        %3617 = vmatpush2.bf16.msra.mxu0 0
        %3618 = vmatprep.mubr.bf16.mxu0 0
        %3619 = vmatmul.mubr.bf16.gmra.mxu0 %v3563
        %v3620 = vpop.f32.mrf.mxu0
        %v3621 = vadd.f32 %v3548, %v3620
        %v3622 = vpop.f32.mrf.mxu0
        %v3623 = vpop.f32.mrf.mxu0
        %v3624 = vadd.f32 %v3548, %v3623
        %v3625 = vpop.f32.mrf.mxu0
        %3626 = vmatprep.mubr.bf16.mxu0 0
        %3627 = vmatmul.mubr.bf16.gmra.mxu0 %v3566
        %v3628 = vpop.f32.mrf.mxu0
        %v3629 = vadd.f32 %v3548, %v3628
        %v3630 = vpop.f32.mrf.mxu0
        %v3631 = vpop.f32.mrf.mxu0
        %v3632 = vadd.f32 %v3548, %v3631
        %v3633 = vpop.f32.mrf.mxu0
        %3634 = vmatprep.mubr.bf16.mxu0 0
        %3635 = vmatmul.mubr.bf16.gmra.mxu0 %v3569
        %v3636 = vpop.f32.mrf.mxu0
        %v3637 = vadd.f32 %v3548, %v3636
        %v3638 = vpop.f32.mrf.mxu0
        %v3639 = vpop.f32.mrf.mxu0
        %v3640 = vadd.f32 %v3548, %v3639
        %v3641 = vpop.f32.mrf.mxu0
        %3642 = vmatprep.mubr.bf16.mxu0 0
        %3643 = vmatmul.mubr.bf16.gmra.mxu0 %v3572
        %v3644 = vpop.f32.mrf.mxu0
        %v3645 = vadd.f32 %v3548, %v3644
        %v3646 = vpop.f32.mrf.mxu0
        %v3647 = vpop.f32.mrf.mxu0
        %v3648 = vadd.f32 %v3548, %v3647
        %v3649 = vpop.f32.mrf.mxu0
        %3650 = vmatprep.mubr.bf16.mxu0 0
        %3651 = vmatmul.mubr.bf16.gmra.mxu0 %v3575
        %v3652 = vpop.f32.mrf.mxu0
        %v3653 = vadd.f32 %v3548, %v3652
        %v3654 = vpop.f32.mrf.mxu0
        %v3655 = vpop.f32.mrf.mxu0
        %v3656 = vadd.f32 %v3548, %v3655
        %v3657 = vpop.f32.mrf.mxu0
        %3658 = vmatprep.mubr.bf16.mxu0 0
        %3659 = vmatmul.mubr.bf16.gmra.mxu0 %v3578
        %v3660 = vpop.f32.mrf.mxu0
        %v3661 = vadd.f32 %v3548, %v3660
        %v3662 = vpop.f32.mrf.mxu0
        %v3663 = vpop.f32.mrf.mxu0
        %v3664 = vadd.f32 %v3548, %v3663
        %v3665 = vpop.f32.mrf.mxu0
        %3666 = vmatprep.mubr.bf16.mxu0 0
        %3667 = vmatmul.mubr.bf16.gmra.mxu0 %v3581
        %v3668 = vpop.f32.mrf.mxu0
        %v3669 = vadd.f32 %v3548, %v3668
        %v3670 = vpop.f32.mrf.mxu0
        %v3671 = vpop.f32.mrf.mxu0
        %v3672 = vadd.f32 %v3548, %v3671
        %v3673 = vpop.f32.mrf.mxu0
        %3674 = vmatprep.mubr.bf16.mxu0 0
        %3675 = vmatmul.mubr.bf16.gmra.mxu0 %v3584
        %v3676 = vpop.f32.mrf.mxu0
        %v3677 = vadd.f32 %v3548, %v3676
        %v3678 = vpop.f32.mrf.mxu0
        %v3679 = vpop.f32.mrf.mxu0
        %v3680 = vadd.f32 %v3548, %v3679
        %v3681 = vpop.f32.mrf.mxu0
        %3682 = vdwg.mxu0
        %v3683 = vmax.f32 %v3621, 0.0
        %v3684 = vmax.f32 %v3624, 0.0
        %v3685 = vmax.f32 %v3629, 0.0
        %v3686 = vmax.f32 %v3632, 0.0
        %v3687 = vmax.f32 %v3637, 0.0
        %v3688 = vmax.f32 %v3640, 0.0
        %v3689 = vmax.f32 %v3645, 0.0
        %v3690 = vmax.f32 %v3648, 0.0
        %v3691 = vmax.f32 %v3653, 0.0
        %v3692 = vmax.f32 %v3656, 0.0
        %v3693 = vmax.f32 %v3661, 0.0
        %v3694 = vmax.f32 %v3664, 0.0
        %v3695 = vmax.f32 %v3669, 0.0
        %v3696 = vmax.f32 %v3672, 0.0
        %v3697 = vmax.f32 %v3677, 0.0
        %v3698 = vmax.f32 %v3680, 0.0
        %3699 = vst.msk [vmem:[%s594] sm:$0xff] %vm729, %v3683
        %3700 = vst.msk [vmem:[%s594 + $0x8] sm:$0xff] %vm729, %v3684
        %3701 = vst.msk [vmem:[%s594 + $0x10] sm:$0xff] %vm729, %v3685
        %3702 = vst.msk [vmem:[%s594 + $0x18] sm:$0xff] %vm729, %v3686
        %3703 = vst.msk [vmem:[%s594 + $0x20] sm:$0xff] %vm729, %v3687
        %3704 = vst.msk [vmem:[%s594 + $0x28] sm:$0xff] %vm729, %v3688
        %3705 = vst.msk [vmem:[%s594 + $0x30] sm:$0xff] %vm729, %v3689
        %3706 = vst.msk [vmem:[%s594 + $0x38] sm:$0xff] %vm729, %v3690
        %3707 = vst.msk [vmem:[%s594 + $0x40] sm:$0xff] %vm729, %v3691
        %3708 = vst.msk [vmem:[%s594 + $0x48] sm:$0xff] %vm729, %v3692
        %3709 = vst.msk [vmem:[%s594 + $0x50] sm:$0xff] %vm729, %v3693
        %3710 = vst.msk [vmem:[%s594 + $0x58] sm:$0xff] %vm729, %v3694
        %3711 = vst.msk [vmem:[%s594 + $0x60] sm:$0xff] %vm729, %v3695
        %3712 = vst.msk [vmem:[%s594 + $0x68] sm:$0xff] %vm729, %v3696
        %3713 = vst.msk [vmem:[%s594 + $0x70] sm:$0xff] %vm729, %v3697
        %3714 = vst.msk [vmem:[%s594 + $0x78] sm:$0xff] %vm729, %v3698
        %s3715 = smul.u32 16, %s19
        %p3716 = scmp.lt.s32.totalorder %s3715, 63
        %s3717 = scalar_select %p3716, %s3715, 63
        %s3718 = smul.addr %s3717, 8
        %s3719 = scalar_lea.vmem %s8, %s3718
        // Predicated region
        $region91: #{tpu_custom_call.1} parent=85 // pred_check
          %p3720 = pneg %p210
        $region92: #{tpu_custom_call.1} parent=85 // pred_check_branch
          %3722 = sbr.rel (%p3720) target = $region94
        $region93: #{tpu_custom_call.1} parent=85 // pred_region
          %s3723 = smul.u32 16, %s19
        $region94: #{tpu_custom_call.1} parent=85 // pred_fallthru
          _
      $region86: #{tpu_custom_call.1} parent=5 // pred_fallthru
        _
      %p3724 = scmp.le.s32.totalorder 2, %s14
      // Predicated region
      $region95: #{tpu_custom_call.1} parent=5 // pred_check
        %p3725 = pneg %p3724
      $region96: #{tpu_custom_call.1} parent=5 // pred_check_branch
        %3727 = sbr.rel (%p3725) target = $region98
      $region97: #{tpu_custom_call.1} parent=5 // pred_region
        %s3728 = ssub.s32 %s14, 2
        // Predicated region
        $region99: #{tpu_custom_call.1} parent=97 // pred_check
          %p3729 = pneg %p216
        $region100: #{tpu_custom_call.1} parent=97 // pred_check_branch
          %3731 = sbr.rel (%p3729) target = $region102
        $region101: #{tpu_custom_call.1} parent=97 // pred_region
          %s3732 = smul.u32 16, %s20
          %p3733 = scmp.lt.s32.totalorder %s3732, 63
          %s3734 = scalar_select %p3733, %s3732, 63
          %s3735 = smul.addr %s3734, 8
          %s3736 = scalar_lea.vmem %s8, %s3735
        $region102: #{tpu_custom_call.1} parent=97 // pred_fallthru
          _
      $region98: #{tpu_custom_call.1} parent=5 // pred_fallthru
        _
    $region6: #{tpu_custom_call.1} parent=1 // loop_footer
      %s18 = sadd.s32 1, %s14
    $region7: #{tpu_custom_call.1} parent=1 // loop_footer_branch
      %13 = sbr.rel target = $region3
    $region8: #{tpu_custom_call.1} parent=1 // loop_exit
      _

</llo_original>
